<compile_context>
chip_gen: v7x
topology: tpu7x:2x2x1
jax: 0.10.0
libtpu: 0.0.40
codegen_flags: <defaults>
</compile_context>

<pallas_src>
import jax
import jax.numpy as jnp
from jax import lax
from jax.experimental import pallas as pl
from jax.experimental.pallas import tpu as pltpu

_K = 7   # conv kernel size
_P = 3   # reflect padding on each side


def _sa_kernel(xm_ref, xt_ref, xb_ref, w_ref, o_ref, pa_ref, pm_ref):
    """One (batch, row-stripe) grid step.

    xm_ref: (C, S, W)   VMEM  -- this stripe's rows
    xt_ref: (C, 8, W)   VMEM  -- 8-row band just above the stripe (rows 5..7 used)
    xb_ref: (C, 8, W)   VMEM  -- 8-row band just below the stripe (rows 0..2 used)
    w_ref : (99,)       SMEM  -- [49 avg taps (pre-scaled by 1/C), 49 max taps, bias]
    o_ref : (S, W)      VMEM
    pa_ref, pm_ref: (S+6, Wp) VMEM scratch -- reflect-padded sum / max planes
    """
    S, W = o_ref.shape
    C = xm_ref.shape[0]
    s = pl.program_id(1)
    ns = pl.num_programs(1)

    # ---- single-pass channel reduction: running sum + running max --------------
    def chan_body(c, carry):
        ms, mm, ts, tm, bs, bm = carry
        p = xm_ref[c].astype(jnp.float32)
        t = xt_ref[c].astype(jnp.float32)
        b = xb_ref[c].astype(jnp.float32)
        return (ms + p, jnp.maximum(mm, p),
                ts + t, jnp.maximum(tm, t),
                bs + b, jnp.maximum(bm, b))

    p0 = xm_ref[0].astype(jnp.float32)
    t0 = xt_ref[0].astype(jnp.float32)
    b0 = xb_ref[0].astype(jnp.float32)
    m_sum, m_max, t_sum, t_max, b_sum, b_max = lax.fori_loop(
        1, C, chan_body, (p0, p0, t0, t0, b0, b0))

    # halo rows needed: global rows [s*S-3, s*S) (top) and [(s+1)*S, (s+1)*S+3) (bottom)
    t_sum, t_max = t_sum[5:8], t_max[5:8]
    b_sum, b_max = b_sum[0:3], b_max[0:3]

    # first / last stripe use exclude-edge reflection of the ORIGINAL image, whose
    # source rows (1..3 and H-4..H-2) live inside this stripe.
    is_first = s == 0
    is_last = s == ns - 1

    def rows_rev(p, i2, i1, i0):
        return jnp.concatenate([p[i2:i2 + 1], p[i1:i1 + 1], p[i0:i0 + 1]], axis=0)

    top_sum = jnp.where(is_first, rows_rev(m_sum, 3, 2, 1), t_sum)
    top_max = jnp.where(is_first, rows_rev(m_max, 3, 2, 1), t_max)
    bot_sum = jnp.where(is_last, rows_rev(m_sum, S - 2, S - 3, S - 4), b_sum)
    bot_max = jnp.where(is_last, rows_rev(m_max, S - 2, S - 3, S - 4), b_max)

    # ---- write the reflect-padded planes into VMEM scratch once -----------------
    def write_group(dst, r0, rows, nr):
        dst[r0:r0 + nr, _P:_P + W] = rows                               # interior cols
        for j in range(_P):                                             # reflected cols
            dst[r0:r0 + nr, j:j + 1] = rows[:, _P - j:_P - j + 1]       # col j  <- col 3-j
            dst[r0:r0 + nr, W + _P + j:W + _P + j + 1] = rows[:, W - 2 - j:W - 1 - j]

    write_group(pa_ref, 0, top_sum, _P)
    write_group(pa_ref, _P, m_sum, S)
    write_group(pa_ref, S + _P, bot_sum, _P)
    write_group(pm_ref, 0, top_max, _P)
    write_group(pm_ref, _P, m_max, S)
    write_group(pm_ref, S + _P, bot_max, _P)

    # ---- 7x7 conv: SMEM scalar taps * (S, W) windows read from scratch ----------
    # Two accumulators expose ILP on the 4 VALU slots (no single 98-op dep chain).
    acc_a = jnp.zeros((S, W), jnp.float32)
    acc_m = jnp.zeros((S, W), jnp.float32)
    for kh in range(_K):
        for kw in range(_K):
            acc_a = acc_a + w_ref[kh * _K + kw] * pa_ref[kh:kh + S, kw:kw + W]
            acc_m = acc_m + w_ref[_K * _K + kh * _K + kw] * pm_ref[kh:kh + S, kw:kw + W]

    o_ref[...] = (acc_a + acc_m + w_ref[2 * _K * _K]).astype(o_ref.dtype)


def _round_up(x, m):
    return (x + m - 1) // m * m


def _pick_stripe_rows(H, C, W, in_itemsize, out_itemsize, budget_bytes):
    """Largest multiple-of-8 divisor of H whose per-step VMEM estimate fits."""
    if H % 8 != 0:
        return H                      # fall back to a single full-height stripe
    Wp = _round_up(W + 2 * _P, 128)

    def est(S):
        main = 2 * C * S * W * in_itemsize       # double-buffered stripe input
        halo = 2 * 2 * C * 8 * W * in_itemsize   # two 8-row halo bands (double-buffered)
        outb = 2 * S * W * out_itemsize
        pads = 2 * (S + 2 * _P) * Wp * 4         # f32 padded scratch planes
        return main + halo + outb + pads

    best = 8
    for S in range(8, H + 1, 8):
        if H % S == 0 and est(S) <= budget_bytes:
            best = S
    return best


def spatial_attention(x, weight, bias, *, stripe_rows=None,
                      vmem_budget_bytes=12 * 1024 * 1024):
    """x: (N, C, H, W); weight: (1, 2, 7, 7) OIHW; bias: (1,).  Returns (N, 1, H, W)."""
    N, C, H, W = x.shape
    assert weight.shape == (1, 2, _K, _K) and bias.shape == (1,)
    # PyTorch reflect-pad(3) needs spatial dims > 3; TPU tiling wants >= 8 rows.
    assert H >= 8 and W >= _P + 1, f"need H >= 8 and W >= 4, got H={H}, W={W}"

    if stripe_rows is None:
        S = _pick_stripe_rows(H, C, W, x.dtype.itemsize, x.dtype.itemsize,
                              vmem_budget_bytes)
    else:
        S = int(stripe_rows)
        assert S == H or (S % 8 == 0 and H % S == 0), \
            "stripe_rows must be H, or a multiple of 8 dividing H"
    ns = H // S
    hb = H // 8             # number of valid 8-row halo bands
    sb = max(S // 8, 1)     # stripe height in 8-row bands

    Wp = _round_up(W + 2 * _P, 128)

    # taps: fold the 1/C of the channel mean into the 49 avg-channel weights.
    w_avg = (weight[0, 0].astype(jnp.float32) / jnp.float32(C)).reshape(-1)
    w_max = weight[0, 1].astype(jnp.float32).reshape(-1)
    w_flat = jnp.concatenate([w_avg, w_max, bias.astype(jnp.float32).reshape(-1)])

    main_spec = pl.BlockSpec((None, C, S, W), lambda n, s: (n, 0, s, 0))
    top_spec = pl.BlockSpec(
        (None, C, 8, W), lambda n, s: (n, 0, jnp.maximum(s * sb - 1, 0), 0))
    bot_spec = pl.BlockSpec(
        (None, C, 8, W), lambda n, s: (n, 0, jnp.minimum((s + 1) * sb, hb - 1), 0))
    w_spec = pl.BlockSpec(memory_space=pltpu.MemorySpace.SMEM)
    out_spec = pl.BlockSpec((None, None, S, W), lambda n, s: (n, 0, s, 0))

    return pl.pallas_call(
        _sa_kernel,
        out_shape=jax.ShapeDtypeStruct((N, 1, H, W), x.dtype),
        grid=(N, ns),
        in_specs=[main_spec, top_spec, bot_spec, w_spec],
        out_specs=out_spec,
        scratch_shapes=[pltpu.VMEM((S + 2 * _P, Wp), jnp.float32),
                        pltpu.VMEM((S + 2 * _P, Wp), jnp.float32)],
        compiler_params=pltpu.CompilerParams(
            # both axes are independent -> shard across v7x's two TensorCores
            dimension_semantics=("parallel", "parallel"),
            vmem_limit_bytes=48 * 1024 * 1024,   # explicit; fits v7x's 64 MiB part
        ),
    )(x, x, x, w_flat)


# ---------------------------- pure-JAX reference --------------------------------
def ref_spatial_attention(x, weight, bias):
    x_avg = jnp.mean(x, axis=1, keepdims=True)
    x_max = jnp.max(x, axis=1, keepdims=True)
    x2 = jnp.concatenate([x_avg, x_max], axis=1)                        # (N,2,H,W)
    x2p = jnp.pad(x2, ((0, 0), (0, 0), (_P, _P), (_P, _P)), mode="reflect")
    y = lax.conv_general_dilated(
        x2p, weight.astype(x.dtype), window_strides=(1, 1), padding="VALID",
        dimension_numbers=("NCHW", "OIHW", "NCHW"))
    return y + bias[None, :, None, None]


if __name__ == "__main__":
    key = jax.random.PRNGKey(0)
    N, C, H, W = 2, 4, 16, 16

    kx, kw, kb = jax.random.split(key, 3)
    x = jax.random.normal(kx, (N, C, H, W), jnp.float32)
    weight = 0.1 * jax.random.normal(kw, (1, 2, _K, _K), jnp.float32)   # (Cout=1, Cin=2, 7, 7)
    bias = 0.05 * jax.random.normal(kb, (1,), jnp.float32)

    ref = ref_spatial_attention(x, weight, bias)

    # auto stripe (single stripe at this size) AND forced 2-stripe path (exercises the halo)
    for stripe in (None, 8):
        out = jax.block_until_ready(spatial_attention(x, weight, bias, stripe_rows=stripe))
        assert out.shape == (N, 1, H, W), out.shape
        max_err = float(jnp.max(jnp.abs(out - ref)))
        assert jnp.allclose(out, ref, rtol=1e-4, atol=1e-4), \
            f"stripe={stripe} max_err={max_err}"

    print("KERNEL_OK")
</pallas_src>

<mosaic_0001>
module attributes {stable_mosaic.version = 11 : i64} {
  func.func @_sa_kernel(%arg0: i32, %arg1: i32, %arg2: memref<1x4x16x16xf32, #tpu.memory_space<vmem>>, %arg3: memref<1x4x8x16xf32, #tpu.memory_space<vmem>>, %arg4: memref<1x4x8x16xf32, #tpu.memory_space<vmem>>, %arg5: memref<99xf32, #tpu.memory_space<smem>>, %arg6: memref<1x1x16x16xf32, #tpu.memory_space<vmem>>, %arg7: memref<22x128xf32, #tpu.memory_space<vmem>>, %arg8: memref<22x128xf32, #tpu.memory_space<vmem>>) attributes {dimension_semantics = [#tpu.dimension_semantics<parallel>, #tpu.dimension_semantics<parallel>], iteration_bounds = array<i64: 2, 1>, scalar_prefetch = 0 : i64, scratch_operands = 2 : i64, tpu.core_type = #tpu.core_type<tc>, window_params = [{transform_indices = @transform_0, window_bounds = array<i64: 1, 4, 16, 16>}, {transform_indices = @transform_1, window_bounds = array<i64: 1, 4, 8, 16>}, {transform_indices = @transform_2, window_bounds = array<i64: 1, 4, 8, 16>}, {transform_indices = @transform_3, window_bounds = array<i64: 99>}, {transform_indices = @transform_4, window_bounds = array<i64: 1, 1, 16, 16>}]} {
    %c0 = arith.constant 0 : index
    %c0_0 = arith.constant 0 : index
    %c0_1 = arith.constant 0 : index
    %c0_2 = arith.constant 0 : index
    %0 = vector.load %arg2[%c0, %c0_0, %c0_1, %c0_2] : memref<1x4x16x16xf32, #tpu.memory_space<vmem>>, vector<1x1x16x16xf32>
    %1 = vector.shape_cast %0 : vector<1x1x16x16xf32> to vector<16x16xf32>
    %c0_3 = arith.constant 0 : index
    %c0_4 = arith.constant 0 : index
    %c0_5 = arith.constant 0 : index
    %c0_6 = arith.constant 0 : index
    %2 = vector.load %arg3[%c0_3, %c0_4, %c0_5, %c0_6] : memref<1x4x8x16xf32, #tpu.memory_space<vmem>>, vector<1x1x8x16xf32>
    %3 = vector.shape_cast %2 : vector<1x1x8x16xf32> to vector<8x16xf32>
    %c0_7 = arith.constant 0 : index
    %c0_8 = arith.constant 0 : index
    %c0_9 = arith.constant 0 : index
    %c0_10 = arith.constant 0 : index
    %4 = vector.load %arg4[%c0_7, %c0_8, %c0_9, %c0_10] : memref<1x4x8x16xf32, #tpu.memory_space<vmem>>, vector<1x1x8x16xf32>
    %5 = vector.shape_cast %4 : vector<1x1x8x16xf32> to vector<8x16xf32>
    %c1_i32 = arith.constant 1 : i32
    %c3_i32 = arith.constant 3 : i32
    %6 = arith.addi %c1_i32, %c3_i32 : i32
    %c1_i32_11 = arith.constant 1 : i32
    %7:6 = scf.for %arg9 = %c1_i32 to %6 step %c1_i32_11 iter_args(%arg10 = %1, %arg11 = %1, %arg12 = %3, %arg13 = %3, %arg14 = %5, %arg15 = %5) -> (vector<16x16xf32>, vector<16x16xf32>, vector<8x16xf32>, vector<8x16xf32>, vector<8x16xf32>, vector<8x16xf32>)  : i32 {
      %c0_300 = arith.constant 0 : index
      %611 = arith.index_cast %arg9 : i32 to index
      %c0_301 = arith.constant 0 : index
      %c0_302 = arith.constant 0 : index
      %612 = vector.load %arg2[%c0_300, %611, %c0_301, %c0_302] : memref<1x4x16x16xf32, #tpu.memory_space<vmem>>, vector<1x1x16x16xf32>
      %613 = vector.shape_cast %612 : vector<1x1x16x16xf32> to vector<16x16xf32>
      %c0_303 = arith.constant 0 : index
      %614 = arith.index_cast %arg9 : i32 to index
      %c0_304 = arith.constant 0 : index
      %c0_305 = arith.constant 0 : index
      %615 = vector.load %arg3[%c0_303, %614, %c0_304, %c0_305] : memref<1x4x8x16xf32, #tpu.memory_space<vmem>>, vector<1x1x8x16xf32>
      %616 = vector.shape_cast %615 : vector<1x1x8x16xf32> to vector<8x16xf32>
      %c0_306 = arith.constant 0 : index
      %617 = arith.index_cast %arg9 : i32 to index
      %c0_307 = arith.constant 0 : index
      %c0_308 = arith.constant 0 : index
      %618 = vector.load %arg4[%c0_306, %617, %c0_307, %c0_308] : memref<1x4x8x16xf32, #tpu.memory_space<vmem>>, vector<1x1x8x16xf32>
      %619 = vector.shape_cast %618 : vector<1x1x8x16xf32> to vector<8x16xf32>
      %620 = arith.addf %arg10, %613 : vector<16x16xf32>
      %621 = arith.maximumf %arg11, %613 : vector<16x16xf32>
      %622 = arith.addf %arg12, %616 : vector<8x16xf32>
      %623 = arith.maximumf %arg13, %616 : vector<8x16xf32>
      %624 = arith.addf %arg14, %619 : vector<8x16xf32>
      %625 = arith.maximumf %arg15, %619 : vector<8x16xf32>
      scf.yield %620, %621, %622, %623, %624, %625 : vector<16x16xf32>, vector<16x16xf32>, vector<8x16xf32>, vector<8x16xf32>, vector<8x16xf32>, vector<8x16xf32>
    }
    %c3_i32_12 = arith.constant 3 : i32
    %8 = vector.extract_strided_slice %7#2 {offsets = [5, 0], sizes = [3, 16], strides = [1, 1]} : vector<8x16xf32> to vector<3x16xf32>
    %9 = vector.extract_strided_slice %7#3 {offsets = [5, 0], sizes = [3, 16], strides = [1, 1]} : vector<8x16xf32> to vector<3x16xf32>
    %10 = vector.extract_strided_slice %7#4 {offsets = [0, 0], sizes = [3, 16], strides = [1, 1]} : vector<8x16xf32> to vector<3x16xf32>
    %11 = vector.extract_strided_slice %7#5 {offsets = [0, 0], sizes = [3, 16], strides = [1, 1]} : vector<8x16xf32> to vector<3x16xf32>
    %c0_i32 = arith.constant 0 : i32
    %12 = arith.cmpi eq, %arg1, %c0_i32 : i32
    %c0_i32_13 = arith.constant 0 : i32
    %13 = arith.cmpi eq, %arg1, %c0_i32_13 : i32
    %14 = vector.extract_strided_slice %7#0 {offsets = [3, 0], sizes = [1, 16], strides = [1, 1]} : vector<16x16xf32> to vector<1x16xf32>
    %15 = vector.extract_strided_slice %7#0 {offsets = [2, 0], sizes = [1, 16], strides = [1, 1]} : vector<16x16xf32> to vector<1x16xf32>
    %16 = vector.extract_strided_slice %7#0 {offsets = [1, 0], sizes = [1, 16], strides = [1, 1]} : vector<16x16xf32> to vector<1x16xf32>
    %17 = tpu.concatenate %14, %15, %16 in 0 : vector<1x16xf32>, vector<1x16xf32>, vector<1x16xf32> -> vector<3x16xf32>
    %18 = arith.select %12, %17, %8 : vector<3x16xf32>
    %19 = vector.extract_strided_slice %7#1 {offsets = [3, 0], sizes = [1, 16], strides = [1, 1]} : vector<16x16xf32> to vector<1x16xf32>
    %20 = vector.extract_strided_slice %7#1 {offsets = [2, 0], sizes = [1, 16], strides = [1, 1]} : vector<16x16xf32> to vector<1x16xf32>
    %21 = vector.extract_strided_slice %7#1 {offsets = [1, 0], sizes = [1, 16], strides = [1, 1]} : vector<16x16xf32> to vector<1x16xf32>
    %22 = tpu.concatenate %19, %20, %21 in 0 : vector<1x16xf32>, vector<1x16xf32>, vector<1x16xf32> -> vector<3x16xf32>
    %23 = arith.select %12, %22, %9 : vector<3x16xf32>
    %24 = vector.extract_strided_slice %7#0 {offsets = [14, 0], sizes = [1, 16], strides = [1, 1]} : vector<16x16xf32> to vector<1x16xf32>
    %25 = vector.extract_strided_slice %7#0 {offsets = [13, 0], sizes = [1, 16], strides = [1, 1]} : vector<16x16xf32> to vector<1x16xf32>
    %26 = vector.extract_strided_slice %7#0 {offsets = [12, 0], sizes = [1, 16], strides = [1, 1]} : vector<16x16xf32> to vector<1x16xf32>
    %27 = tpu.concatenate %24, %25, %26 in 0 : vector<1x16xf32>, vector<1x16xf32>, vector<1x16xf32> -> vector<3x16xf32>
    %28 = arith.select %13, %27, %10 : vector<3x16xf32>
    %29 = vector.extract_strided_slice %7#1 {offsets = [14, 0], sizes = [1, 16], strides = [1, 1]} : vector<16x16xf32> to vector<1x16xf32>
    %30 = vector.extract_strided_slice %7#1 {offsets = [13, 0], sizes = [1, 16], strides = [1, 1]} : vector<16x16xf32> to vector<1x16xf32>
    %31 = vector.extract_strided_slice %7#1 {offsets = [12, 0], sizes = [1, 16], strides = [1, 1]} : vector<16x16xf32> to vector<1x16xf32>
    %32 = tpu.concatenate %29, %30, %31 in 0 : vector<1x16xf32>, vector<1x16xf32>, vector<1x16xf32> -> vector<3x16xf32>
    %33 = arith.select %13, %32, %11 : vector<3x16xf32>
    %c0_14 = arith.constant 0 : index
    %c3 = arith.constant 3 : index
    %34 = vector.load %arg7[%c0_14, %c3] : memref<22x128xf32, #tpu.memory_space<vmem>>, vector<3x16xf32>
    tpu.vector_store %arg7[%c0_14, %c3], %18 {strides = array<i32>} : memref<22x128xf32, #tpu.memory_space<vmem>>, vector<3x16xf32>,
    %35 = vector.extract_strided_slice %18 {offsets = [0, 3], sizes = [3, 1], strides = [1, 1]} : vector<3x16xf32> to vector<3x1xf32>
    %c0_15 = arith.constant 0 : index
    %c0_16 = arith.constant 0 : index
    %36 = vector.load %arg7[%c0_15, %c0_16] : memref<22x128xf32, #tpu.memory_space<vmem>>, vector<3x1xf32>
    tpu.vector_store %arg7[%c0_15, %c0_16], %35 {strides = array<i32>} : memref<22x128xf32, #tpu.memory_space<vmem>>, vector<3x1xf32>,
    %37 = vector.extract_strided_slice %18 {offsets = [0, 14], sizes = [3, 1], strides = [1, 1]} : vector<3x16xf32> to vector<3x1xf32>
    %c0_17 = arith.constant 0 : index
    %c19 = arith.constant 19 : index
    %38 = vector.load %arg7[%c0_17, %c19] : memref<22x128xf32, #tpu.memory_space<vmem>>, vector<3x1xf32>
    tpu.vector_store %arg7[%c0_17, %c19], %37 {strides = array<i32>} : memref<22x128xf32, #tpu.memory_space<vmem>>, vector<3x1xf32>,
    %39 = vector.extract_strided_slice %18 {offsets = [0, 2], sizes = [3, 1], strides = [1, 1]} : vector<3x16xf32> to vector<3x1xf32>
    %c0_18 = arith.constant 0 : index
    %c1 = arith.constant 1 : index
    %40 = vector.load %arg7[%c0_18, %c1] : memref<22x128xf32, #tpu.memory_space<vmem>>, vector<3x1xf32>
    tpu.vector_store %arg7[%c0_18, %c1], %39 {strides = array<i32>} : memref<22x128xf32, #tpu.memory_space<vmem>>, vector<3x1xf32>,
    %41 = vector.extract_strided_slice %18 {offsets = [0, 13], sizes = [3, 1], strides = [1, 1]} : vector<3x16xf32> to vector<3x1xf32>
    %c0_19 = arith.constant 0 : index
    %c20 = arith.constant 20 : index
    %42 = vector.load %arg7[%c0_19, %c20] : memref<22x128xf32, #tpu.memory_space<vmem>>, vector<3x1xf32>
    tpu.vector_store %arg7[%c0_19, %c20], %41 {strides = array<i32>} : memref<22x128xf32, #tpu.memory_space<vmem>>, vector<3x1xf32>,
    %43 = vector.extract_strided_slice %18 {offsets = [0, 1], sizes = [3, 1], strides = [1, 1]} : vector<3x16xf32> to vector<3x1xf32>
    %c0_20 = arith.constant 0 : index
    %c2 = arith.constant 2 : index
    %44 = vector.load %arg7[%c0_20, %c2] : memref<22x128xf32, #tpu.memory_space<vmem>>, vector<3x1xf32>
    tpu.vector_store %arg7[%c0_20, %c2], %43 {strides = array<i32>} : memref<22x128xf32, #tpu.memory_space<vmem>>, vector<3x1xf32>,
    %45 = vector.extract_strided_slice %18 {offsets = [0, 12], sizes = [3, 1], strides = [1, 1]} : vector<3x16xf32> to vector<3x1xf32>
    %c0_21 = arith.constant 0 : index
    %c21 = arith.constant 21 : index
    %46 = vector.load %arg7[%c0_21, %c21] : memref<22x128xf32, #tpu.memory_space<vmem>>, vector<3x1xf32>
    tpu.vector_store %arg7[%c0_21, %c21], %45 {strides = array<i32>} : memref<22x128xf32, #tpu.memory_space<vmem>>, vector<3x1xf32>,
    %c3_22 = arith.constant 3 : index
    %c3_23 = arith.constant 3 : index
    %47 = vector.load %arg7[%c3_22, %c3_23] : memref<22x128xf32, #tpu.memory_space<vmem>>, vector<16x16xf32>
    tpu.vector_store %arg7[%c3_22, %c3_23], %7#0 {strides = array<i32>} : memref<22x128xf32, #tpu.memory_space<vmem>>, vector<16x16xf32>,
    %48 = vector.extract_strided_slice %7#0 {offsets = [0, 3], sizes = [16, 1], strides = [1, 1]} : vector<16x16xf32> to vector<16x1xf32>
    %c3_24 = arith.constant 3 : index
    %c0_25 = arith.constant 0 : index
    %49 = vector.load %arg7[%c3_24, %c0_25] : memref<22x128xf32, #tpu.memory_space<vmem>>, vector<16x1xf32>
    tpu.vector_store %arg7[%c3_24, %c0_25], %48 {strides = array<i32>} : memref<22x128xf32, #tpu.memory_space<vmem>>, vector<16x1xf32>,
    %50 = vector.extract_strided_slice %7#0 {offsets = [0, 14], sizes = [16, 1], strides = [1, 1]} : vector<16x16xf32> to vector<16x1xf32>
    %c3_26 = arith.constant 3 : index
    %c19_27 = arith.constant 19 : index
    %51 = vector.load %arg7[%c3_26, %c19_27] : memref<22x128xf32, #tpu.memory_space<vmem>>, vector<16x1xf32>
    tpu.vector_store %arg7[%c3_26, %c19_27], %50 {strides = array<i32>} : memref<22x128xf32, #tpu.memory_space<vmem>>, vector<16x1xf32>,
    %52 = vector.extract_strided_slice %7#0 {offsets = [0, 2], sizes = [16, 1], strides = [1, 1]} : vector<16x16xf32> to vector<16x1xf32>
    %c3_28 = arith.constant 3 : index
    %c1_29 = arith.constant 1 : index
    %53 = vector.load %arg7[%c3_28, %c1_29] : memref<22x128xf32, #tpu.memory_space<vmem>>, vector<16x1xf32>
    tpu.vector_store %arg7[%c3_28, %c1_29], %52 {strides = array<i32>} : memref<22x128xf32, #tpu.memory_space<vmem>>, vector<16x1xf32>,
    %54 = vector.extract_strided_slice %7#0 {offsets = [0, 13], sizes = [16, 1], strides = [1, 1]} : vector<16x16xf32> to vector<16x1xf32>
    %c3_30 = arith.constant 3 : index
    %c20_31 = arith.constant 20 : index
    %55 = vector.load %arg7[%c3_30, %c20_31] : memref<22x128xf32, #tpu.memory_space<vmem>>, vector<16x1xf32>
    tpu.vector_store %arg7[%c3_30, %c20_31], %54 {strides = array<i32>} : memref<22x128xf32, #tpu.memory_space<vmem>>, vector<16x1xf32>,
    %56 = vector.extract_strided_slice %7#0 {offsets = [0, 1], sizes = [16, 1], strides = [1, 1]} : vector<16x16xf32> to vector<16x1xf32>
    %c3_32 = arith.constant 3 : index
    %c2_33 = arith.constant 2 : index
    %57 = vector.load %arg7[%c3_32, %c2_33] : memref<22x128xf32, #tpu.memory_space<vmem>>, vector<16x1xf32>
    tpu.vector_store %arg7[%c3_32, %c2_33], %56 {strides = array<i32>} : memref<22x128xf32, #tpu.memory_space<vmem>>, vector<16x1xf32>,
    %58 = vector.extract_strided_slice %7#0 {offsets = [0, 12], sizes = [16, 1], strides = [1, 1]} : vector<16x16xf32> to vector<16x1xf32>
    %c3_34 = arith.constant 3 : index
    %c21_35 = arith.constant 21 : index
    %59 = vector.load %arg7[%c3_34, %c21_35] : memref<22x128xf32, #tpu.memory_space<vmem>>, vector<16x1xf32>
    tpu.vector_store %arg7[%c3_34, %c21_35], %58 {strides = array<i32>} : memref<22x128xf32, #tpu.memory_space<vmem>>, vector<16x1xf32>,
    %c19_36 = arith.constant 19 : index
    %c3_37 = arith.constant 3 : index
    %60 = vector.load %arg7[%c19_36, %c3_37] : memref<22x128xf32, #tpu.memory_space<vmem>>, vector<3x16xf32>
    tpu.vector_store %arg7[%c19_36, %c3_37], %28 {strides = array<i32>} : memref<22x128xf32, #tpu.memory_space<vmem>>, vector<3x16xf32>,
    %61 = vector.extract_strided_slice %28 {offsets = [0, 3], sizes = [3, 1], strides = [1, 1]} : vector<3x16xf32> to vector<3x1xf32>
    %c19_38 = arith.constant 19 : index
    %c0_39 = arith.constant 0 : index
    %62 = vector.load %arg7[%c19_38, %c0_39] : memref<22x128xf32, #tpu.memory_space<vmem>>, vector<3x1xf32>
    tpu.vector_store %arg7[%c19_38, %c0_39], %61 {strides = array<i32>} : memref<22x128xf32, #tpu.memory_space<vmem>>, vector<3x1xf32>,
    %63 = vector.extract_strided_slice %28 {offsets = [0, 14], sizes = [3, 1], strides = [1, 1]} : vector<3x16xf32> to vector<3x1xf32>
    %c19_40 = arith.constant 19 : index
    %c19_41 = arith.constant 19 : index
    %64 = vector.load %arg7[%c19_40, %c19_41] : memref<22x128xf32, #tpu.memory_space<vmem>>, vector<3x1xf32>
    tpu.vector_store %arg7[%c19_40, %c19_41], %63 {strides = array<i32>} : memref<22x128xf32, #tpu.memory_space<vmem>>, vector<3x1xf32>,
    %65 = vector.extract_strided_slice %28 {offsets = [0, 2], sizes = [3, 1], strides = [1, 1]} : vector<3x16xf32> to vector<3x1xf32>
    %c19_42 = arith.constant 19 : index
    %c1_43 = arith.constant 1 : index
    %66 = vector.load %arg7[%c19_42, %c1_43] : memref<22x128xf32, #tpu.memory_space<vmem>>, vector<3x1xf32>
    tpu.vector_store %arg7[%c19_42, %c1_43], %65 {strides = array<i32>} : memref<22x128xf32, #tpu.memory_space<vmem>>, vector<3x1xf32>,
    %67 = vector.extract_strided_slice %28 {offsets = [0, 13], sizes = [3, 1], strides = [1, 1]} : vector<3x16xf32> to vector<3x1xf32>
    %c19_44 = arith.constant 19 : index
    %c20_45 = arith.constant 20 : index
    %68 = vector.load %arg7[%c19_44, %c20_45] : memref<22x128xf32, #tpu.memory_space<vmem>>, vector<3x1xf32>
    tpu.vector_store %arg7[%c19_44, %c20_45], %67 {strides = array<i32>} : memref<22x128xf32, #tpu.memory_space<vmem>>, vector<3x1xf32>,
    %69 = vector.extract_strided_slice %28 {offsets = [0, 1], sizes = [3, 1], strides = [1, 1]} : vector<3x16xf32> to vector<3x1xf32>
    %c19_46 = arith.constant 19 : index
    %c2_47 = arith.constant 2 : index
    %70 = vector.load %arg7[%c19_46, %c2_47] : memref<22x128xf32, #tpu.memory_space<vmem>>, vector<3x1xf32>
    tpu.vector_store %arg7[%c19_46, %c2_47], %69 {strides = array<i32>} : memref<22x128xf32, #tpu.memory_space<vmem>>, vector<3x1xf32>,
    %71 = vector.extract_strided_slice %28 {offsets = [0, 12], sizes = [3, 1], strides = [1, 1]} : vector<3x16xf32> to vector<3x1xf32>
    %c19_48 = arith.constant 19 : index
    %c21_49 = arith.constant 21 : index
    %72 = vector.load %arg7[%c19_48, %c21_49] : memref<22x128xf32, #tpu.memory_space<vmem>>, vector<3x1xf32>
    tpu.vector_store %arg7[%c19_48, %c21_49], %71 {strides = array<i32>} : memref<22x128xf32, #tpu.memory_space<vmem>>, vector<3x1xf32>,
    %c0_50 = arith.constant 0 : index
    %c3_51 = arith.constant 3 : index
    %73 = vector.load %arg8[%c0_50, %c3_51] : memref<22x128xf32, #tpu.memory_space<vmem>>, vector<3x16xf32>
    tpu.vector_store %arg8[%c0_50, %c3_51], %23 {strides = array<i32>} : memref<22x128xf32, #tpu.memory_space<vmem>>, vector<3x16xf32>,
    %74 = vector.extract_strided_slice %23 {offsets = [0, 3], sizes = [3, 1], strides = [1, 1]} : vector<3x16xf32> to vector<3x1xf32>
    %c0_52 = arith.constant 0 : index
    %c0_53 = arith.constant 0 : index
    %75 = vector.load %arg8[%c0_52, %c0_53] : memref<22x128xf32, #tpu.memory_space<vmem>>, vector<3x1xf32>
    tpu.vector_store %arg8[%c0_52, %c0_53], %74 {strides = array<i32>} : memref<22x128xf32, #tpu.memory_space<vmem>>, vector<3x1xf32>,
    %76 = vector.extract_strided_slice %23 {offsets = [0, 14], sizes = [3, 1], strides = [1, 1]} : vector<3x16xf32> to vector<3x1xf32>
    %c0_54 = arith.constant 0 : index
    %c19_55 = arith.constant 19 : index
    %77 = vector.load %arg8[%c0_54, %c19_55] : memref<22x128xf32, #tpu.memory_space<vmem>>, vector<3x1xf32>
    tpu.vector_store %arg8[%c0_54, %c19_55], %76 {strides = array<i32>} : memref<22x128xf32, #tpu.memory_space<vmem>>, vector<3x1xf32>,
    %78 = vector.extract_strided_slice %23 {offsets = [0, 2], sizes = [3, 1], strides = [1, 1]} : vector<3x16xf32> to vector<3x1xf32>
    %c0_56 = arith.constant 0 : index
    %c1_57 = arith.constant 1 : index
    %79 = vector.load %arg8[%c0_56, %c1_57] : memref<22x128xf32, #tpu.memory_space<vmem>>, vector<3x1xf32>
    tpu.vector_store %arg8[%c0_56, %c1_57], %78 {strides = array<i32>} : memref<22x128xf32, #tpu.memory_space<vmem>>, vector<3x1xf32>,
    %80 = vector.extract_strided_slice %23 {offsets = [0, 13], sizes = [3, 1], strides = [1, 1]} : vector<3x16xf32> to vector<3x1xf32>
    %c0_58 = arith.constant 0 : index
    %c20_59 = arith.constant 20 : index
    %81 = vector.load %arg8[%c0_58, %c20_59] : memref<22x128xf32, #tpu.memory_space<vmem>>, vector<3x1xf32>
    tpu.vector_store %arg8[%c0_58, %c20_59], %80 {strides = array<i32>} : memref<22x128xf32, #tpu.memory_space<vmem>>, vector<3x1xf32>,
    %82 = vector.extract_strided_slice %23 {offsets = [0, 1], sizes = [3, 1], strides = [1, 1]} : vector<3x16xf32> to vector<3x1xf32>
    %c0_60 = arith.constant 0 : index
    %c2_61 = arith.constant 2 : index
    %83 = vector.load %arg8[%c0_60, %c2_61] : memref<22x128xf32, #tpu.memory_space<vmem>>, vector<3x1xf32>
    tpu.vector_store %arg8[%c0_60, %c2_61], %82 {strides = array<i32>} : memref<22x128xf32, #tpu.memory_space<vmem>>, vector<3x1xf32>,
    %84 = vector.extract_strided_slice %23 {offsets = [0, 12], sizes = [3, 1], strides = [1, 1]} : vector<3x16xf32> to vector<3x1xf32>
    %c0_62 = arith.constant 0 : index
    %c21_63 = arith.constant 21 : index
    %85 = vector.load %arg8[%c0_62, %c21_63] : memref<22x128xf32, #tpu.memory_space<vmem>>, vector<3x1xf32>
    tpu.vector_store %arg8[%c0_62, %c21_63], %84 {strides = array<i32>} : memref<22x128xf32, #tpu.memory_space<vmem>>, vector<3x1xf32>,
    %c3_64 = arith.constant 3 : index
    %c3_65 = arith.constant 3 : index
    %86 = vector.load %arg8[%c3_64, %c3_65] : memref<22x128xf32, #tpu.memory_space<vmem>>, vector<16x16xf32>
    tpu.vector_store %arg8[%c3_64, %c3_65], %7#1 {strides = array<i32>} : memref<22x128xf32, #tpu.memory_space<vmem>>, vector<16x16xf32>,
    %87 = vector.extract_strided_slice %7#1 {offsets = [0, 3], sizes = [16, 1], strides = [1, 1]} : vector<16x16xf32> to vector<16x1xf32>
    %c3_66 = arith.constant 3 : index
    %c0_67 = arith.constant 0 : index
    %88 = vector.load %arg8[%c3_66, %c0_67] : memref<22x128xf32, #tpu.memory_space<vmem>>, vector<16x1xf32>
    tpu.vector_store %arg8[%c3_66, %c0_67], %87 {strides = array<i32>} : memref<22x128xf32, #tpu.memory_space<vmem>>, vector<16x1xf32>,
    %89 = vector.extract_strided_slice %7#1 {offsets = [0, 14], sizes = [16, 1], strides = [1, 1]} : vector<16x16xf32> to vector<16x1xf32>
    %c3_68 = arith.constant 3 : index
    %c19_69 = arith.constant 19 : index
    %90 = vector.load %arg8[%c3_68, %c19_69] : memref<22x128xf32, #tpu.memory_space<vmem>>, vector<16x1xf32>
    tpu.vector_store %arg8[%c3_68, %c19_69], %89 {strides = array<i32>} : memref<22x128xf32, #tpu.memory_space<vmem>>, vector<16x1xf32>,
    %91 = vector.extract_strided_slice %7#1 {offsets = [0, 2], sizes = [16, 1], strides = [1, 1]} : vector<16x16xf32> to vector<16x1xf32>
    %c3_70 = arith.constant 3 : index
    %c1_71 = arith.constant 1 : index
    %92 = vector.load %arg8[%c3_70, %c1_71] : memref<22x128xf32, #tpu.memory_space<vmem>>, vector<16x1xf32>
    tpu.vector_store %arg8[%c3_70, %c1_71], %91 {strides = array<i32>} : memref<22x128xf32, #tpu.memory_space<vmem>>, vector<16x1xf32>,
    %93 = vector.extract_strided_slice %7#1 {offsets = [0, 13], sizes = [16, 1], strides = [1, 1]} : vector<16x16xf32> to vector<16x1xf32>
    %c3_72 = arith.constant 3 : index
    %c20_73 = arith.constant 20 : index
    %94 = vector.load %arg8[%c3_72, %c20_73] : memref<22x128xf32, #tpu.memory_space<vmem>>, vector<16x1xf32>
    tpu.vector_store %arg8[%c3_72, %c20_73], %93 {strides = array<i32>} : memref<22x128xf32, #tpu.memory_space<vmem>>, vector<16x1xf32>,
    %95 = vector.extract_strided_slice %7#1 {offsets = [0, 1], sizes = [16, 1], strides = [1, 1]} : vector<16x16xf32> to vector<16x1xf32>
    %c3_74 = arith.constant 3 : index
    %c2_75 = arith.constant 2 : index
    %96 = vector.load %arg8[%c3_74, %c2_75] : memref<22x128xf32, #tpu.memory_space<vmem>>, vector<16x1xf32>
    tpu.vector_store %arg8[%c3_74, %c2_75], %95 {strides = array<i32>} : memref<22x128xf32, #tpu.memory_space<vmem>>, vector<16x1xf32>,
    %97 = vector.extract_strided_slice %7#1 {offsets = [0, 12], sizes = [16, 1], strides = [1, 1]} : vector<16x16xf32> to vector<16x1xf32>
    %c3_76 = arith.constant 3 : index
    %c21_77 = arith.constant 21 : index
    %98 = vector.load %arg8[%c3_76, %c21_77] : memref<22x128xf32, #tpu.memory_space<vmem>>, vector<16x1xf32>
    tpu.vector_store %arg8[%c3_76, %c21_77], %97 {strides = array<i32>} : memref<22x128xf32, #tpu.memory_space<vmem>>, vector<16x1xf32>,
    %c19_78 = arith.constant 19 : index
    %c3_79 = arith.constant 3 : index
    %99 = vector.load %arg8[%c19_78, %c3_79] : memref<22x128xf32, #tpu.memory_space<vmem>>, vector<3x16xf32>
    tpu.vector_store %arg8[%c19_78, %c3_79], %33 {strides = array<i32>} : memref<22x128xf32, #tpu.memory_space<vmem>>, vector<3x16xf32>,
    %100 = vector.extract_strided_slice %33 {offsets = [0, 3], sizes = [3, 1], strides = [1, 1]} : vector<3x16xf32> to vector<3x1xf32>
    %c19_80 = arith.constant 19 : index
    %c0_81 = arith.constant 0 : index
    %101 = vector.load %arg8[%c19_80, %c0_81] : memref<22x128xf32, #tpu.memory_space<vmem>>, vector<3x1xf32>
    tpu.vector_store %arg8[%c19_80, %c0_81], %100 {strides = array<i32>} : memref<22x128xf32, #tpu.memory_space<vmem>>, vector<3x1xf32>,
    %102 = vector.extract_strided_slice %33 {offsets = [0, 14], sizes = [3, 1], strides = [1, 1]} : vector<3x16xf32> to vector<3x1xf32>
    %c19_82 = arith.constant 19 : index
    %c19_83 = arith.constant 19 : index
    %103 = vector.load %arg8[%c19_82, %c19_83] : memref<22x128xf32, #tpu.memory_space<vmem>>, vector<3x1xf32>
    tpu.vector_store %arg8[%c19_82, %c19_83], %102 {strides = array<i32>} : memref<22x128xf32, #tpu.memory_space<vmem>>, vector<3x1xf32>,
    %104 = vector.extract_strided_slice %33 {offsets = [0, 2], sizes = [3, 1], strides = [1, 1]} : vector<3x16xf32> to vector<3x1xf32>
    %c19_84 = arith.constant 19 : index
    %c1_85 = arith.constant 1 : index
    %105 = vector.load %arg8[%c19_84, %c1_85] : memref<22x128xf32, #tpu.memory_space<vmem>>, vector<3x1xf32>
    tpu.vector_store %arg8[%c19_84, %c1_85], %104 {strides = array<i32>} : memref<22x128xf32, #tpu.memory_space<vmem>>, vector<3x1xf32>,
    %106 = vector.extract_strided_slice %33 {offsets = [0, 13], sizes = [3, 1], strides = [1, 1]} : vector<3x16xf32> to vector<3x1xf32>
    %c19_86 = arith.constant 19 : index
    %c20_87 = arith.constant 20 : index
    %107 = vector.load %arg8[%c19_86, %c20_87] : memref<22x128xf32, #tpu.memory_space<vmem>>, vector<3x1xf32>
    tpu.vector_store %arg8[%c19_86, %c20_87], %106 {strides = array<i32>} : memref<22x128xf32, #tpu.memory_space<vmem>>, vector<3x1xf32>,
    %108 = vector.extract_strided_slice %33 {offsets = [0, 1], sizes = [3, 1], strides = [1, 1]} : vector<3x16xf32> to vector<3x1xf32>
    %c19_88 = arith.constant 19 : index
    %c2_89 = arith.constant 2 : index
    %109 = vector.load %arg8[%c19_88, %c2_89] : memref<22x128xf32, #tpu.memory_space<vmem>>, vector<3x1xf32>
    tpu.vector_store %arg8[%c19_88, %c2_89], %108 {strides = array<i32>} : memref<22x128xf32, #tpu.memory_space<vmem>>, vector<3x1xf32>,
    %110 = vector.extract_strided_slice %33 {offsets = [0, 12], sizes = [3, 1], strides = [1, 1]} : vector<3x16xf32> to vector<3x1xf32>
    %c19_90 = arith.constant 19 : index
    %c21_91 = arith.constant 21 : index
    %111 = vector.load %arg8[%c19_90, %c21_91] : memref<22x128xf32, #tpu.memory_space<vmem>>, vector<3x1xf32>
    tpu.vector_store %arg8[%c19_90, %c21_91], %110 {strides = array<i32>} : memref<22x128xf32, #tpu.memory_space<vmem>>, vector<3x1xf32>,
    %cst = arith.constant 0.000000e+00 : f32
    %112 = vector.broadcast %cst : f32 to vector<16x16xf32>
    %cst_92 = arith.constant 0.000000e+00 : f32
    %113 = vector.broadcast %cst_92 : f32 to vector<16x16xf32>
    %c0_93 = arith.constant 0 : index
    %114 = memref.load %arg5[%c0_93] : memref<99xf32, #tpu.memory_space<smem>>
    %c0_94 = arith.constant 0 : index
    %c0_95 = arith.constant 0 : index
    %115 = vector.load %arg7[%c0_94, %c0_95] : memref<22x128xf32, #tpu.memory_space<vmem>>, vector<16x16xf32>
    %116 = vector.broadcast %114 : f32 to vector<16x16xf32>
    %117 = arith.mulf %116, %115 : vector<16x16xf32>
    %118 = arith.addf %112, %117 : vector<16x16xf32>
    %c49 = arith.constant 49 : index
    %119 = memref.load %arg5[%c49] : memref<99xf32, #tpu.memory_space<smem>>
    %c0_96 = arith.constant 0 : index
    %c0_97 = arith.constant 0 : index
    %120 = vector.load %arg8[%c0_96, %c0_97] : memref<22x128xf32, #tpu.memory_space<vmem>>, vector<16x16xf32>
    %121 = vector.broadcast %119 : f32 to vector<16x16xf32>
    %122 = arith.mulf %121, %120 : vector<16x16xf32>
    %123 = arith.addf %113, %122 : vector<16x16xf32>
    %c1_98 = arith.constant 1 : index
    %124 = memref.load %arg5[%c1_98] : memref<99xf32, #tpu.memory_space<smem>>
    %c0_99 = arith.constant 0 : index
    %c1_100 = arith.constant 1 : index
    %125 = vector.load %arg7[%c0_99, %c1_100] : memref<22x128xf32, #tpu.memory_space<vmem>>, vector<16x16xf32>
    %126 = vector.broadcast %124 : f32 to vector<16x16xf32>
    %127 = arith.mulf %126, %125 : vector<16x16xf32>
    %128 = arith.addf %118, %127 : vector<16x16xf32>
    %c50 = arith.constant 50 : index
    %129 = memref.load %arg5[%c50] : memref<99xf32, #tpu.memory_space<smem>>
    %c0_101 = arith.constant 0 : index
    %c1_102 = arith.constant 1 : index
    %130 = vector.load %arg8[%c0_101, %c1_102] : memref<22x128xf32, #tpu.memory_space<vmem>>, vector<16x16xf32>
    %131 = vector.broadcast %129 : f32 to vector<16x16xf32>
    %132 = arith.mulf %131, %130 : vector<16x16xf32>
    %133 = arith.addf %123, %132 : vector<16x16xf32>
    %c2_103 = arith.constant 2 : index
    %134 = memref.load %arg5[%c2_103] : memref<99xf32, #tpu.memory_space<smem>>
    %c0_104 = arith.constant 0 : index
    %c2_105 = arith.constant 2 : index
    %135 = vector.load %arg7[%c0_104, %c2_105] : memref<22x128xf32, #tpu.memory_space<vmem>>, vector<16x16xf32>
    %136 = vector.broadcast %134 : f32 to vector<16x16xf32>
    %137 = arith.mulf %136, %135 : vector<16x16xf32>
    %138 = arith.addf %128, %137 : vector<16x16xf32>
    %c51 = arith.constant 51 : index
    %139 = memref.load %arg5[%c51] : memref<99xf32, #tpu.memory_space<smem>>
    %c0_106 = arith.constant 0 : index
    %c2_107 = arith.constant 2 : index
    %140 = vector.load %arg8[%c0_106, %c2_107] : memref<22x128xf32, #tpu.memory_space<vmem>>, vector<16x16xf32>
    %141 = vector.broadcast %139 : f32 to vector<16x16xf32>
    %142 = arith.mulf %141, %140 : vector<16x16xf32>
    %143 = arith.addf %133, %142 : vector<16x16xf32>
    %c3_108 = arith.constant 3 : index
    %144 = memref.load %arg5[%c3_108] : memref<99xf32, #tpu.memory_space<smem>>
    %c0_109 = arith.constant 0 : index
    %c3_110 = arith.constant 3 : index
    %145 = vector.load %arg7[%c0_109, %c3_110] : memref<22x128xf32, #tpu.memory_space<vmem>>, vector<16x16xf32>
    %146 = vector.broadcast %144 : f32 to vector<16x16xf32>
    %147 = arith.mulf %146, %145 : vector<16x16xf32>
    %148 = arith.addf %138, %147 : vector<16x16xf32>
    %c52 = arith.constant 52 : index
    %149 = memref.load %arg5[%c52] : memref<99xf32, #tpu.memory_space<smem>>
    %c0_111 = arith.constant 0 : index
    %c3_112 = arith.constant 3 : index
    %150 = vector.load %arg8[%c0_111, %c3_112] : memref<22x128xf32, #tpu.memory_space<vmem>>, vector<16x16xf32>
    %151 = vector.broadcast %149 : f32 to vector<16x16xf32>
    %152 = arith.mulf %151, %150 : vector<16x16xf32>
    %153 = arith.addf %143, %152 : vector<16x16xf32>
    %c4 = arith.constant 4 : index
    %154 = memref.load %arg5[%c4] : memref<99xf32, #tpu.memory_space<smem>>
    %c0_113 = arith.constant 0 : index
    %c4_114 = arith.constant 4 : index
    %155 = vector.load %arg7[%c0_113, %c4_114] : memref<22x128xf32, #tpu.memory_space<vmem>>, vector<16x16xf32>
    %156 = vector.broadcast %154 : f32 to vector<16x16xf32>
    %157 = arith.mulf %156, %155 : vector<16x16xf32>
    %158 = arith.addf %148, %157 : vector<16x16xf32>
    %c53 = arith.constant 53 : index
    %159 = memref.load %arg5[%c53] : memref<99xf32, #tpu.memory_space<smem>>
    %c0_115 = arith.constant 0 : index
    %c4_116 = arith.constant 4 : index
    %160 = vector.load %arg8[%c0_115, %c4_116] : memref<22x128xf32, #tpu.memory_space<vmem>>, vector<16x16xf32>
    %161 = vector.broadcast %159 : f32 to vector<16x16xf32>
    %162 = arith.mulf %161, %160 : vector<16x16xf32>
    %163 = arith.addf %153, %162 : vector<16x16xf32>
    %c5 = arith.constant 5 : index
    %164 = memref.load %arg5[%c5] : memref<99xf32, #tpu.memory_space<smem>>
    %c0_117 = arith.constant 0 : index
    %c5_118 = arith.constant 5 : index
    %165 = vector.load %arg7[%c0_117, %c5_118] : memref<22x128xf32, #tpu.memory_space<vmem>>, vector<16x16xf32>
    %166 = vector.broadcast %164 : f32 to vector<16x16xf32>
    %167 = arith.mulf %166, %165 : vector<16x16xf32>
    %168 = arith.addf %158, %167 : vector<16x16xf32>
    %c54 = arith.constant 54 : index
    %169 = memref.load %arg5[%c54] : memref<99xf32, #tpu.memory_space<smem>>
    %c0_119 = arith.constant 0 : index
    %c5_120 = arith.constant 5 : index
    %170 = vector.load %arg8[%c0_119, %c5_120] : memref<22x128xf32, #tpu.memory_space<vmem>>, vector<16x16xf32>
    %171 = vector.broadcast %169 : f32 to vector<16x16xf32>
    %172 = arith.mulf %171, %170 : vector<16x16xf32>
    %173 = arith.addf %163, %172 : vector<16x16xf32>
    %c6 = arith.constant 6 : index
    %174 = memref.load %arg5[%c6] : memref<99xf32, #tpu.memory_space<smem>>
    %c0_121 = arith.constant 0 : index
    %c6_122 = arith.constant 6 : index
    %175 = vector.load %arg7[%c0_121, %c6_122] : memref<22x128xf32, #tpu.memory_space<vmem>>, vector<16x16xf32>
    %176 = vector.broadcast %174 : f32 to vector<16x16xf32>
    %177 = arith.mulf %176, %175 : vector<16x16xf32>
    %178 = arith.addf %168, %177 : vector<16x16xf32>
    %c55 = arith.constant 55 : index
    %179 = memref.load %arg5[%c55] : memref<99xf32, #tpu.memory_space<smem>>
    %c0_123 = arith.constant 0 : index
    %c6_124 = arith.constant 6 : index
    %180 = vector.load %arg8[%c0_123, %c6_124] : memref<22x128xf32, #tpu.memory_space<vmem>>, vector<16x16xf32>
    %181 = vector.broadcast %179 : f32 to vector<16x16xf32>
    %182 = arith.mulf %181, %180 : vector<16x16xf32>
    %183 = arith.addf %173, %182 : vector<16x16xf32>
    %c7 = arith.constant 7 : index
    %184 = memref.load %arg5[%c7] : memref<99xf32, #tpu.memory_space<smem>>
    %c1_125 = arith.constant 1 : index
    %c0_126 = arith.constant 0 : index
    %185 = vector.load %arg7[%c1_125, %c0_126] : memref<22x128xf32, #tpu.memory_space<vmem>>, vector<16x16xf32>
    %186 = vector.broadcast %184 : f32 to vector<16x16xf32>
    %187 = arith.mulf %186, %185 : vector<16x16xf32>
    %188 = arith.addf %178, %187 : vector<16x16xf32>
    %c56 = arith.constant 56 : index
    %189 = memref.load %arg5[%c56] : memref<99xf32, #tpu.memory_space<smem>>
    %c1_127 = arith.constant 1 : index
    %c0_128 = arith.constant 0 : index
    %190 = vector.load %arg8[%c1_127, %c0_128] : memref<22x128xf32, #tpu.memory_space<vmem>>, vector<16x16xf32>
    %191 = vector.broadcast %189 : f32 to vector<16x16xf32>
    %192 = arith.mulf %191, %190 : vector<16x16xf32>
    %193 = arith.addf %183, %192 : vector<16x16xf32>
    %c8 = arith.constant 8 : index
    %194 = memref.load %arg5[%c8] : memref<99xf32, #tpu.memory_space<smem>>
    %c1_129 = arith.constant 1 : index
    %c1_130 = arith.constant 1 : index
    %195 = vector.load %arg7[%c1_129, %c1_130] : memref<22x128xf32, #tpu.memory_space<vmem>>, vector<16x16xf32>
    %196 = vector.broadcast %194 : f32 to vector<16x16xf32>
    %197 = arith.mulf %196, %195 : vector<16x16xf32>
    %198 = arith.addf %188, %197 : vector<16x16xf32>
    %c57 = arith.constant 57 : index
    %199 = memref.load %arg5[%c57] : memref<99xf32, #tpu.memory_space<smem>>
    %c1_131 = arith.constant 1 : index
    %c1_132 = arith.constant 1 : index
    %200 = vector.load %arg8[%c1_131, %c1_132] : memref<22x128xf32, #tpu.memory_space<vmem>>, vector<16x16xf32>
    %201 = vector.broadcast %199 : f32 to vector<16x16xf32>
    %202 = arith.mulf %201, %200 : vector<16x16xf32>
    %203 = arith.addf %193, %202 : vector<16x16xf32>
    %c9 = arith.constant 9 : index
    %204 = memref.load %arg5[%c9] : memref<99xf32, #tpu.memory_space<smem>>
    %c1_133 = arith.constant 1 : index
    %c2_134 = arith.constant 2 : index
    %205 = vector.load %arg7[%c1_133, %c2_134] : memref<22x128xf32, #tpu.memory_space<vmem>>, vector<16x16xf32>
    %206 = vector.broadcast %204 : f32 to vector<16x16xf32>
    %207 = arith.mulf %206, %205 : vector<16x16xf32>
    %208 = arith.addf %198, %207 : vector<16x16xf32>
    %c58 = arith.constant 58 : index
    %209 = memref.load %arg5[%c58] : memref<99xf32, #tpu.memory_space<smem>>
    %c1_135 = arith.constant 1 : index
    %c2_136 = arith.constant 2 : index
    %210 = vector.load %arg8[%c1_135, %c2_136] : memref<22x128xf32, #tpu.memory_space<vmem>>, vector<16x16xf32>
    %211 = vector.broadcast %209 : f32 to vector<16x16xf32>
    %212 = arith.mulf %211, %210 : vector<16x16xf32>
    %213 = arith.addf %203, %212 : vector<16x16xf32>
    %c10 = arith.constant 10 : index
    %214 = memref.load %arg5[%c10] : memref<99xf32, #tpu.memory_space<smem>>
    %c1_137 = arith.constant 1 : index
    %c3_138 = arith.constant 3 : index
    %215 = vector.load %arg7[%c1_137, %c3_138] : memref<22x128xf32, #tpu.memory_space<vmem>>, vector<16x16xf32>
    %216 = vector.broadcast %214 : f32 to vector<16x16xf32>
    %217 = arith.mulf %216, %215 : vector<16x16xf32>
    %218 = arith.addf %208, %217 : vector<16x16xf32>
    %c59 = arith.constant 59 : index
    %219 = memref.load %arg5[%c59] : memref<99xf32, #tpu.memory_space<smem>>
    %c1_139 = arith.constant 1 : index
    %c3_140 = arith.constant 3 : index
    %220 = vector.load %arg8[%c1_139, %c3_140] : memref<22x128xf32, #tpu.memory_space<vmem>>, vector<16x16xf32>
    %221 = vector.broadcast %219 : f32 to vector<16x16xf32>
    %222 = arith.mulf %221, %220 : vector<16x16xf32>
    %223 = arith.addf %213, %222 : vector<16x16xf32>
    %c11 = arith.constant 11 : index
    %224 = memref.load %arg5[%c11] : memref<99xf32, #tpu.memory_space<smem>>
    %c1_141 = arith.constant 1 : index
    %c4_142 = arith.constant 4 : index
    %225 = vector.load %arg7[%c1_141, %c4_142] : memref<22x128xf32, #tpu.memory_space<vmem>>, vector<16x16xf32>
    %226 = vector.broadcast %224 : f32 to vector<16x16xf32>
    %227 = arith.mulf %226, %225 : vector<16x16xf32>
    %228 = arith.addf %218, %227 : vector<16x16xf32>
    %c60 = arith.constant 60 : index
    %229 = memref.load %arg5[%c60] : memref<99xf32, #tpu.memory_space<smem>>
    %c1_143 = arith.constant 1 : index
    %c4_144 = arith.constant 4 : index
    %230 = vector.load %arg8[%c1_143, %c4_144] : memref<22x128xf32, #tpu.memory_space<vmem>>, vector<16x16xf32>
    %231 = vector.broadcast %229 : f32 to vector<16x16xf32>
    %232 = arith.mulf %231, %230 : vector<16x16xf32>
    %233 = arith.addf %223, %232 : vector<16x16xf32>
    %c12 = arith.constant 12 : index
    %234 = memref.load %arg5[%c12] : memref<99xf32, #tpu.memory_space<smem>>
    %c1_145 = arith.constant 1 : index
    %c5_146 = arith.constant 5 : index
    %235 = vector.load %arg7[%c1_145, %c5_146] : memref<22x128xf32, #tpu.memory_space<vmem>>, vector<16x16xf32>
    %236 = vector.broadcast %234 : f32 to vector<16x16xf32>
    %237 = arith.mulf %236, %235 : vector<16x16xf32>
    %238 = arith.addf %228, %237 : vector<16x16xf32>
    %c61 = arith.constant 61 : index
    %239 = memref.load %arg5[%c61] : memref<99xf32, #tpu.memory_space<smem>>
    %c1_147 = arith.constant 1 : index
    %c5_148 = arith.constant 5 : index
    %240 = vector.load %arg8[%c1_147, %c5_148] : memref<22x128xf32, #tpu.memory_space<vmem>>, vector<16x16xf32>
    %241 = vector.broadcast %239 : f32 to vector<16x16xf32>
    %242 = arith.mulf %241, %240 : vector<16x16xf32>
    %243 = arith.addf %233, %242 : vector<16x16xf32>
    %c13 = arith.constant 13 : index
    %244 = memref.load %arg5[%c13] : memref<99xf32, #tpu.memory_space<smem>>
    %c1_149 = arith.constant 1 : index
    %c6_150 = arith.constant 6 : index
    %245 = vector.load %arg7[%c1_149, %c6_150] : memref<22x128xf32, #tpu.memory_space<vmem>>, vector<16x16xf32>
    %246 = vector.broadcast %244 : f32 to vector<16x16xf32>
    %247 = arith.mulf %246, %245 : vector<16x16xf32>
    %248 = arith.addf %238, %247 : vector<16x16xf32>
    %c62 = arith.constant 62 : index
    %249 = memref.load %arg5[%c62] : memref<99xf32, #tpu.memory_space<smem>>
    %c1_151 = arith.constant 1 : index
    %c6_152 = arith.constant 6 : index
    %250 = vector.load %arg8[%c1_151, %c6_152] : memref<22x128xf32, #tpu.memory_space<vmem>>, vector<16x16xf32>
    %251 = vector.broadcast %249 : f32 to vector<16x16xf32>
    %252 = arith.mulf %251, %250 : vector<16x16xf32>
    %253 = arith.addf %243, %252 : vector<16x16xf32>
    %c14 = arith.constant 14 : index
    %254 = memref.load %arg5[%c14] : memref<99xf32, #tpu.memory_space<smem>>
    %c2_153 = arith.constant 2 : index
    %c0_154 = arith.constant 0 : index
    %255 = vector.load %arg7[%c2_153, %c0_154] : memref<22x128xf32, #tpu.memory_space<vmem>>, vector<16x16xf32>
    %256 = vector.broadcast %254 : f32 to vector<16x16xf32>
    %257 = arith.mulf %256, %255 : vector<16x16xf32>
    %258 = arith.addf %248, %257 : vector<16x16xf32>
    %c63 = arith.constant 63 : index
    %259 = memref.load %arg5[%c63] : memref<99xf32, #tpu.memory_space<smem>>
    %c2_155 = arith.constant 2 : index
    %c0_156 = arith.constant 0 : index
    %260 = vector.load %arg8[%c2_155, %c0_156] : memref<22x128xf32, #tpu.memory_space<vmem>>, vector<16x16xf32>
    %261 = vector.broadcast %259 : f32 to vector<16x16xf32>
    %262 = arith.mulf %261, %260 : vector<16x16xf32>
    %263 = arith.addf %253, %262 : vector<16x16xf32>
    %c15 = arith.constant 15 : index
    %264 = memref.load %arg5[%c15] : memref<99xf32, #tpu.memory_space<smem>>
    %c2_157 = arith.constant 2 : index
    %c1_158 = arith.constant 1 : index
    %265 = vector.load %arg7[%c2_157, %c1_158] : memref<22x128xf32, #tpu.memory_space<vmem>>, vector<16x16xf32>
    %266 = vector.broadcast %264 : f32 to vector<16x16xf32>
    %267 = arith.mulf %266, %265 : vector<16x16xf32>
    %268 = arith.addf %258, %267 : vector<16x16xf32>
    %c64 = arith.constant 64 : index
    %269 = memref.load %arg5[%c64] : memref<99xf32, #tpu.memory_space<smem>>
    %c2_159 = arith.constant 2 : index
    %c1_160 = arith.constant 1 : index
    %270 = vector.load %arg8[%c2_159, %c1_160] : memref<22x128xf32, #tpu.memory_space<vmem>>, vector<16x16xf32>
    %271 = vector.broadcast %269 : f32 to vector<16x16xf32>
    %272 = arith.mulf %271, %270 : vector<16x16xf32>
    %273 = arith.addf %263, %272 : vector<16x16xf32>
    %c16 = arith.constant 16 : index
    %274 = memref.load %arg5[%c16] : memref<99xf32, #tpu.memory_space<smem>>
    %c2_161 = arith.constant 2 : index
    %c2_162 = arith.constant 2 : index
    %275 = vector.load %arg7[%c2_161, %c2_162] : memref<22x128xf32, #tpu.memory_space<vmem>>, vector<16x16xf32>
    %276 = vector.broadcast %274 : f32 to vector<16x16xf32>
    %277 = arith.mulf %276, %275 : vector<16x16xf32>
    %278 = arith.addf %268, %277 : vector<16x16xf32>
    %c65 = arith.constant 65 : index
    %279 = memref.load %arg5[%c65] : memref<99xf32, #tpu.memory_space<smem>>
    %c2_163 = arith.constant 2 : index
    %c2_164 = arith.constant 2 : index
    %280 = vector.load %arg8[%c2_163, %c2_164] : memref<22x128xf32, #tpu.memory_space<vmem>>, vector<16x16xf32>
    %281 = vector.broadcast %279 : f32 to vector<16x16xf32>
    %282 = arith.mulf %281, %280 : vector<16x16xf32>
    %283 = arith.addf %273, %282 : vector<16x16xf32>
    %c17 = arith.constant 17 : index
    %284 = memref.load %arg5[%c17] : memref<99xf32, #tpu.memory_space<smem>>
    %c2_165 = arith.constant 2 : index
    %c3_166 = arith.constant 3 : index
    %285 = vector.load %arg7[%c2_165, %c3_166] : memref<22x128xf32, #tpu.memory_space<vmem>>, vector<16x16xf32>
    %286 = vector.broadcast %284 : f32 to vector<16x16xf32>
    %287 = arith.mulf %286, %285 : vector<16x16xf32>
    %288 = arith.addf %278, %287 : vector<16x16xf32>
    %c66 = arith.constant 66 : index
    %289 = memref.load %arg5[%c66] : memref<99xf32, #tpu.memory_space<smem>>
    %c2_167 = arith.constant 2 : index
    %c3_168 = arith.constant 3 : index
    %290 = vector.load %arg8[%c2_167, %c3_168] : memref<22x128xf32, #tpu.memory_space<vmem>>, vector<16x16xf32>
    %291 = vector.broadcast %289 : f32 to vector<16x16xf32>
    %292 = arith.mulf %291, %290 : vector<16x16xf32>
    %293 = arith.addf %283, %292 : vector<16x16xf32>
    %c18 = arith.constant 18 : index
    %294 = memref.load %arg5[%c18] : memref<99xf32, #tpu.memory_space<smem>>
    %c2_169 = arith.constant 2 : index
    %c4_170 = arith.constant 4 : index
    %295 = vector.load %arg7[%c2_169, %c4_170] : memref<22x128xf32, #tpu.memory_space<vmem>>, vector<16x16xf32>
    %296 = vector.broadcast %294 : f32 to vector<16x16xf32>
    %297 = arith.mulf %296, %295 : vector<16x16xf32>
    %298 = arith.addf %288, %297 : vector<16x16xf32>
    %c67 = arith.constant 67 : index
    %299 = memref.load %arg5[%c67] : memref<99xf32, #tpu.memory_space<smem>>
    %c2_171 = arith.constant 2 : index
    %c4_172 = arith.constant 4 : index
    %300 = vector.load %arg8[%c2_171, %c4_172] : memref<22x128xf32, #tpu.memory_space<vmem>>, vector<16x16xf32>
    %301 = vector.broadcast %299 : f32 to vector<16x16xf32>
    %302 = arith.mulf %301, %300 : vector<16x16xf32>
    %303 = arith.addf %293, %302 : vector<16x16xf32>
    %c19_173 = arith.constant 19 : index
    %304 = memref.load %arg5[%c19_173] : memref<99xf32, #tpu.memory_space<smem>>
    %c2_174 = arith.constant 2 : index
    %c5_175 = arith.constant 5 : index
    %305 = vector.load %arg7[%c2_174, %c5_175] : memref<22x128xf32, #tpu.memory_space<vmem>>, vector<16x16xf32>
    %306 = vector.broadcast %304 : f32 to vector<16x16xf32>
    %307 = arith.mulf %306, %305 : vector<16x16xf32>
    %308 = arith.addf %298, %307 : vector<16x16xf32>
    %c68 = arith.constant 68 : index
    %309 = memref.load %arg5[%c68] : memref<99xf32, #tpu.memory_space<smem>>
    %c2_176 = arith.constant 2 : index
    %c5_177 = arith.constant 5 : index
    %310 = vector.load %arg8[%c2_176, %c5_177] : memref<22x128xf32, #tpu.memory_space<vmem>>, vector<16x16xf32>
    %311 = vector.broadcast %309 : f32 to vector<16x16xf32>
    %312 = arith.mulf %311, %310 : vector<16x16xf32>
    %313 = arith.addf %303, %312 : vector<16x16xf32>
    %c20_178 = arith.constant 20 : index
    %314 = memref.load %arg5[%c20_178] : memref<99xf32, #tpu.memory_space<smem>>
    %c2_179 = arith.constant 2 : index
    %c6_180 = arith.constant 6 : index
    %315 = vector.load %arg7[%c2_179, %c6_180] : memref<22x128xf32, #tpu.memory_space<vmem>>, vector<16x16xf32>
    %316 = vector.broadcast %314 : f32 to vector<16x16xf32>
    %317 = arith.mulf %316, %315 : vector<16x16xf32>
    %318 = arith.addf %308, %317 : vector<16x16xf32>
    %c69 = arith.constant 69 : index
    %319 = memref.load %arg5[%c69] : memref<99xf32, #tpu.memory_space<smem>>
    %c2_181 = arith.constant 2 : index
    %c6_182 = arith.constant 6 : index
    %320 = vector.load %arg8[%c2_181, %c6_182] : memref<22x128xf32, #tpu.memory_space<vmem>>, vector<16x16xf32>
    %321 = vector.broadcast %319 : f32 to vector<16x16xf32>
    %322 = arith.mulf %321, %320 : vector<16x16xf32>
    %323 = arith.addf %313, %322 : vector<16x16xf32>
    %c21_183 = arith.constant 21 : index
    %324 = memref.load %arg5[%c21_183] : memref<99xf32, #tpu.memory_space<smem>>
    %c3_184 = arith.constant 3 : index
    %c0_185 = arith.constant 0 : index
    %325 = vector.load %arg7[%c3_184, %c0_185] : memref<22x128xf32, #tpu.memory_space<vmem>>, vector<16x16xf32>
    %326 = vector.broadcast %324 : f32 to vector<16x16xf32>
    %327 = arith.mulf %326, %325 : vector<16x16xf32>
    %328 = arith.addf %318, %327 : vector<16x16xf32>
    %c70 = arith.constant 70 : index
    %329 = memref.load %arg5[%c70] : memref<99xf32, #tpu.memory_space<smem>>
    %c3_186 = arith.constant 3 : index
    %c0_187 = arith.constant 0 : index
    %330 = vector.load %arg8[%c3_186, %c0_187] : memref<22x128xf32, #tpu.memory_space<vmem>>, vector<16x16xf32>
    %331 = vector.broadcast %329 : f32 to vector<16x16xf32>
    %332 = arith.mulf %331, %330 : vector<16x16xf32>
    %333 = arith.addf %323, %332 : vector<16x16xf32>
    %c22 = arith.constant 22 : index
    %334 = memref.load %arg5[%c22] : memref<99xf32, #tpu.memory_space<smem>>
    %c3_188 = arith.constant 3 : index
    %c1_189 = arith.constant 1 : index
    %335 = vector.load %arg7[%c3_188, %c1_189] : memref<22x128xf32, #tpu.memory_space<vmem>>, vector<16x16xf32>
    %336 = vector.broadcast %334 : f32 to vector<16x16xf32>
    %337 = arith.mulf %336, %335 : vector<16x16xf32>
    %338 = arith.addf %328, %337 : vector<16x16xf32>
    %c71 = arith.constant 71 : index
    %339 = memref.load %arg5[%c71] : memref<99xf32, #tpu.memory_space<smem>>
    %c3_190 = arith.constant 3 : index
    %c1_191 = arith.constant 1 : index
    %340 = vector.load %arg8[%c3_190, %c1_191] : memref<22x128xf32, #tpu.memory_space<vmem>>, vector<16x16xf32>
    %341 = vector.broadcast %339 : f32 to vector<16x16xf32>
    %342 = arith.mulf %341, %340 : vector<16x16xf32>
    %343 = arith.addf %333, %342 : vector<16x16xf32>
    %c23 = arith.constant 23 : index
    %344 = memref.load %arg5[%c23] : memref<99xf32, #tpu.memory_space<smem>>
    %c3_192 = arith.constant 3 : index
    %c2_193 = arith.constant 2 : index
    %345 = vector.load %arg7[%c3_192, %c2_193] : memref<22x128xf32, #tpu.memory_space<vmem>>, vector<16x16xf32>
    %346 = vector.broadcast %344 : f32 to vector<16x16xf32>
    %347 = arith.mulf %346, %345 : vector<16x16xf32>
    %348 = arith.addf %338, %347 : vector<16x16xf32>
    %c72 = arith.constant 72 : index
    %349 = memref.load %arg5[%c72] : memref<99xf32, #tpu.memory_space<smem>>
    %c3_194 = arith.constant 3 : index
    %c2_195 = arith.constant 2 : index
    %350 = vector.load %arg8[%c3_194, %c2_195] : memref<22x128xf32, #tpu.memory_space<vmem>>, vector<16x16xf32>
    %351 = vector.broadcast %349 : f32 to vector<16x16xf32>
    %352 = arith.mulf %351, %350 : vector<16x16xf32>
    %353 = arith.addf %343, %352 : vector<16x16xf32>
    %c24 = arith.constant 24 : index
    %354 = memref.load %arg5[%c24] : memref<99xf32, #tpu.memory_space<smem>>
    %c3_196 = arith.constant 3 : index
    %c3_197 = arith.constant 3 : index
    %355 = vector.load %arg7[%c3_196, %c3_197] : memref<22x128xf32, #tpu.memory_space<vmem>>, vector<16x16xf32>
    %356 = vector.broadcast %354 : f32 to vector<16x16xf32>
    %357 = arith.mulf %356, %355 : vector<16x16xf32>
    %358 = arith.addf %348, %357 : vector<16x16xf32>
    %c73 = arith.constant 73 : index
    %359 = memref.load %arg5[%c73] : memref<99xf32, #tpu.memory_space<smem>>
    %c3_198 = arith.constant 3 : index
    %c3_199 = arith.constant 3 : index
    %360 = vector.load %arg8[%c3_198, %c3_199] : memref<22x128xf32, #tpu.memory_space<vmem>>, vector<16x16xf32>
    %361 = vector.broadcast %359 : f32 to vector<16x16xf32>
    %362 = arith.mulf %361, %360 : vector<16x16xf32>
    %363 = arith.addf %353, %362 : vector<16x16xf32>
    %c25 = arith.constant 25 : index
    %364 = memref.load %arg5[%c25] : memref<99xf32, #tpu.memory_space<smem>>
    %c3_200 = arith.constant 3 : index
    %c4_201 = arith.constant 4 : index
    %365 = vector.load %arg7[%c3_200, %c4_201] : memref<22x128xf32, #tpu.memory_space<vmem>>, vector<16x16xf32>
    %366 = vector.broadcast %364 : f32 to vector<16x16xf32>
    %367 = arith.mulf %366, %365 : vector<16x16xf32>
    %368 = arith.addf %358, %367 : vector<16x16xf32>
    %c74 = arith.constant 74 : index
    %369 = memref.load %arg5[%c74] : memref<99xf32, #tpu.memory_space<smem>>
    %c3_202 = arith.constant 3 : index
    %c4_203 = arith.constant 4 : index
    %370 = vector.load %arg8[%c3_202, %c4_203] : memref<22x128xf32, #tpu.memory_space<vmem>>, vector<16x16xf32>
    %371 = vector.broadcast %369 : f32 to vector<16x16xf32>
    %372 = arith.mulf %371, %370 : vector<16x16xf32>
    %373 = arith.addf %363, %372 : vector<16x16xf32>
    %c26 = arith.constant 26 : index
    %374 = memref.load %arg5[%c26] : memref<99xf32, #tpu.memory_space<smem>>
    %c3_204 = arith.constant 3 : index
    %c5_205 = arith.constant 5 : index
    %375 = vector.load %arg7[%c3_204, %c5_205] : memref<22x128xf32, #tpu.memory_space<vmem>>, vector<16x16xf32>
    %376 = vector.broadcast %374 : f32 to vector<16x16xf32>
    %377 = arith.mulf %376, %375 : vector<16x16xf32>
    %378 = arith.addf %368, %377 : vector<16x16xf32>
    %c75 = arith.constant 75 : index
    %379 = memref.load %arg5[%c75] : memref<99xf32, #tpu.memory_space<smem>>
    %c3_206 = arith.constant 3 : index
    %c5_207 = arith.constant 5 : index
    %380 = vector.load %arg8[%c3_206, %c5_207] : memref<22x128xf32, #tpu.memory_space<vmem>>, vector<16x16xf32>
    %381 = vector.broadcast %379 : f32 to vector<16x16xf32>
    %382 = arith.mulf %381, %380 : vector<16x16xf32>
    %383 = arith.addf %373, %382 : vector<16x16xf32>
    %c27 = arith.constant 27 : index
    %384 = memref.load %arg5[%c27] : memref<99xf32, #tpu.memory_space<smem>>
    %c3_208 = arith.constant 3 : index
    %c6_209 = arith.constant 6 : index
    %385 = vector.load %arg7[%c3_208, %c6_209] : memref<22x128xf32, #tpu.memory_space<vmem>>, vector<16x16xf32>
    %386 = vector.broadcast %384 : f32 to vector<16x16xf32>
    %387 = arith.mulf %386, %385 : vector<16x16xf32>
    %388 = arith.addf %378, %387 : vector<16x16xf32>
    %c76 = arith.constant 76 : index
    %389 = memref.load %arg5[%c76] : memref<99xf32, #tpu.memory_space<smem>>
    %c3_210 = arith.constant 3 : index
    %c6_211 = arith.constant 6 : index
    %390 = vector.load %arg8[%c3_210, %c6_211] : memref<22x128xf32, #tpu.memory_space<vmem>>, vector<16x16xf32>
    %391 = vector.broadcast %389 : f32 to vector<16x16xf32>
    %392 = arith.mulf %391, %390 : vector<16x16xf32>
    %393 = arith.addf %383, %392 : vector<16x16xf32>
    %c28 = arith.constant 28 : index
    %394 = memref.load %arg5[%c28] : memref<99xf32, #tpu.memory_space<smem>>
    %c4_212 = arith.constant 4 : index
    %c0_213 = arith.constant 0 : index
    %395 = vector.load %arg7[%c4_212, %c0_213] : memref<22x128xf32, #tpu.memory_space<vmem>>, vector<16x16xf32>
    %396 = vector.broadcast %394 : f32 to vector<16x16xf32>
    %397 = arith.mulf %396, %395 : vector<16x16xf32>
    %398 = arith.addf %388, %397 : vector<16x16xf32>
    %c77 = arith.constant 77 : index
    %399 = memref.load %arg5[%c77] : memref<99xf32, #tpu.memory_space<smem>>
    %c4_214 = arith.constant 4 : index
    %c0_215 = arith.constant 0 : index
    %400 = vector.load %arg8[%c4_214, %c0_215] : memref<22x128xf32, #tpu.memory_space<vmem>>, vector<16x16xf32>
    %401 = vector.broadcast %399 : f32 to vector<16x16xf32>
    %402 = arith.mulf %401, %400 : vector<16x16xf32>
    %403 = arith.addf %393, %402 : vector<16x16xf32>
    %c29 = arith.constant 29 : index
    %404 = memref.load %arg5[%c29] : memref<99xf32, #tpu.memory_space<smem>>
    %c4_216 = arith.constant 4 : index
    %c1_217 = arith.constant 1 : index
    %405 = vector.load %arg7[%c4_216, %c1_217] : memref<22x128xf32, #tpu.memory_space<vmem>>, vector<16x16xf32>
    %406 = vector.broadcast %404 : f32 to vector<16x16xf32>
    %407 = arith.mulf %406, %405 : vector<16x16xf32>
    %408 = arith.addf %398, %407 : vector<16x16xf32>
    %c78 = arith.constant 78 : index
    %409 = memref.load %arg5[%c78] : memref<99xf32, #tpu.memory_space<smem>>
    %c4_218 = arith.constant 4 : index
    %c1_219 = arith.constant 1 : index
    %410 = vector.load %arg8[%c4_218, %c1_219] : memref<22x128xf32, #tpu.memory_space<vmem>>, vector<16x16xf32>
    %411 = vector.broadcast %409 : f32 to vector<16x16xf32>
    %412 = arith.mulf %411, %410 : vector<16x16xf32>
    %413 = arith.addf %403, %412 : vector<16x16xf32>
    %c30 = arith.constant 30 : index
    %414 = memref.load %arg5[%c30] : memref<99xf32, #tpu.memory_space<smem>>
    %c4_220 = arith.constant 4 : index
    %c2_221 = arith.constant 2 : index
    %415 = vector.load %arg7[%c4_220, %c2_221] : memref<22x128xf32, #tpu.memory_space<vmem>>, vector<16x16xf32>
    %416 = vector.broadcast %414 : f32 to vector<16x16xf32>
    %417 = arith.mulf %416, %415 : vector<16x16xf32>
    %418 = arith.addf %408, %417 : vector<16x16xf32>
    %c79 = arith.constant 79 : index
    %419 = memref.load %arg5[%c79] : memref<99xf32, #tpu.memory_space<smem>>
    %c4_222 = arith.constant 4 : index
    %c2_223 = arith.constant 2 : index
    %420 = vector.load %arg8[%c4_222, %c2_223] : memref<22x128xf32, #tpu.memory_space<vmem>>, vector<16x16xf32>
    %421 = vector.broadcast %419 : f32 to vector<16x16xf32>
    %422 = arith.mulf %421, %420 : vector<16x16xf32>
    %423 = arith.addf %413, %422 : vector<16x16xf32>
    %c31 = arith.constant 31 : index
    %424 = memref.load %arg5[%c31] : memref<99xf32, #tpu.memory_space<smem>>
    %c4_224 = arith.constant 4 : index
    %c3_225 = arith.constant 3 : index
    %425 = vector.load %arg7[%c4_224, %c3_225] : memref<22x128xf32, #tpu.memory_space<vmem>>, vector<16x16xf32>
    %426 = vector.broadcast %424 : f32 to vector<16x16xf32>
    %427 = arith.mulf %426, %425 : vector<16x16xf32>
    %428 = arith.addf %418, %427 : vector<16x16xf32>
    %c80 = arith.constant 80 : index
    %429 = memref.load %arg5[%c80] : memref<99xf32, #tpu.memory_space<smem>>
    %c4_226 = arith.constant 4 : index
    %c3_227 = arith.constant 3 : index
    %430 = vector.load %arg8[%c4_226, %c3_227] : memref<22x128xf32, #tpu.memory_space<vmem>>, vector<16x16xf32>
    %431 = vector.broadcast %429 : f32 to vector<16x16xf32>
    %432 = arith.mulf %431, %430 : vector<16x16xf32>
    %433 = arith.addf %423, %432 : vector<16x16xf32>
    %c32 = arith.constant 32 : index
    %434 = memref.load %arg5[%c32] : memref<99xf32, #tpu.memory_space<smem>>
    %c4_228 = arith.constant 4 : index
    %c4_229 = arith.constant 4 : index
    %435 = vector.load %arg7[%c4_228, %c4_229] : memref<22x128xf32, #tpu.memory_space<vmem>>, vector<16x16xf32>
    %436 = vector.broadcast %434 : f32 to vector<16x16xf32>
    %437 = arith.mulf %436, %435 : vector<16x16xf32>
    %438 = arith.addf %428, %437 : vector<16x16xf32>
    %c81 = arith.constant 81 : index
    %439 = memref.load %arg5[%c81] : memref<99xf32, #tpu.memory_space<smem>>
    %c4_230 = arith.constant 4 : index
    %c4_231 = arith.constant 4 : index
    %440 = vector.load %arg8[%c4_230, %c4_231] : memref<22x128xf32, #tpu.memory_space<vmem>>, vector<16x16xf32>
    %441 = vector.broadcast %439 : f32 to vector<16x16xf32>
    %442 = arith.mulf %441, %440 : vector<16x16xf32>
    %443 = arith.addf %433, %442 : vector<16x16xf32>
    %c33 = arith.constant 33 : index
    %444 = memref.load %arg5[%c33] : memref<99xf32, #tpu.memory_space<smem>>
    %c4_232 = arith.constant 4 : index
    %c5_233 = arith.constant 5 : index
    %445 = vector.load %arg7[%c4_232, %c5_233] : memref<22x128xf32, #tpu.memory_space<vmem>>, vector<16x16xf32>
    %446 = vector.broadcast %444 : f32 to vector<16x16xf32>
    %447 = arith.mulf %446, %445 : vector<16x16xf32>
    %448 = arith.addf %438, %447 : vector<16x16xf32>
    %c82 = arith.constant 82 : index
    %449 = memref.load %arg5[%c82] : memref<99xf32, #tpu.memory_space<smem>>
    %c4_234 = arith.constant 4 : index
    %c5_235 = arith.constant 5 : index
    %450 = vector.load %arg8[%c4_234, %c5_235] : memref<22x128xf32, #tpu.memory_space<vmem>>, vector<16x16xf32>
    %451 = vector.broadcast %449 : f32 to vector<16x16xf32>
    %452 = arith.mulf %451, %450 : vector<16x16xf32>
    %453 = arith.addf %443, %452 : vector<16x16xf32>
    %c34 = arith.constant 34 : index
    %454 = memref.load %arg5[%c34] : memref<99xf32, #tpu.memory_space<smem>>
    %c4_236 = arith.constant 4 : index
    %c6_237 = arith.constant 6 : index
    %455 = vector.load %arg7[%c4_236, %c6_237] : memref<22x128xf32, #tpu.memory_space<vmem>>, vector<16x16xf32>
    %456 = vector.broadcast %454 : f32 to vector<16x16xf32>
    %457 = arith.mulf %456, %455 : vector<16x16xf32>
    %458 = arith.addf %448, %457 : vector<16x16xf32>
    %c83 = arith.constant 83 : index
    %459 = memref.load %arg5[%c83] : memref<99xf32, #tpu.memory_space<smem>>
    %c4_238 = arith.constant 4 : index
    %c6_239 = arith.constant 6 : index
    %460 = vector.load %arg8[%c4_238, %c6_239] : memref<22x128xf32, #tpu.memory_space<vmem>>, vector<16x16xf32>
    %461 = vector.broadcast %459 : f32 to vector<16x16xf32>
    %462 = arith.mulf %461, %460 : vector<16x16xf32>
    %463 = arith.addf %453, %462 : vector<16x16xf32>
    %c35 = arith.constant 35 : index
    %464 = memref.load %arg5[%c35] : memref<99xf32, #tpu.memory_space<smem>>
    %c5_240 = arith.constant 5 : index
    %c0_241 = arith.constant 0 : index
    %465 = vector.load %arg7[%c5_240, %c0_241] : memref<22x128xf32, #tpu.memory_space<vmem>>, vector<16x16xf32>
    %466 = vector.broadcast %464 : f32 to vector<16x16xf32>
    %467 = arith.mulf %466, %465 : vector<16x16xf32>
    %468 = arith.addf %458, %467 : vector<16x16xf32>
    %c84 = arith.constant 84 : index
    %469 = memref.load %arg5[%c84] : memref<99xf32, #tpu.memory_space<smem>>
    %c5_242 = arith.constant 5 : index
    %c0_243 = arith.constant 0 : index
    %470 = vector.load %arg8[%c5_242, %c0_243] : memref<22x128xf32, #tpu.memory_space<vmem>>, vector<16x16xf32>
    %471 = vector.broadcast %469 : f32 to vector<16x16xf32>
    %472 = arith.mulf %471, %470 : vector<16x16xf32>
    %473 = arith.addf %463, %472 : vector<16x16xf32>
    %c36 = arith.constant 36 : index
    %474 = memref.load %arg5[%c36] : memref<99xf32, #tpu.memory_space<smem>>
    %c5_244 = arith.constant 5 : index
    %c1_245 = arith.constant 1 : index
    %475 = vector.load %arg7[%c5_244, %c1_245] : memref<22x128xf32, #tpu.memory_space<vmem>>, vector<16x16xf32>
    %476 = vector.broadcast %474 : f32 to vector<16x16xf32>
    %477 = arith.mulf %476, %475 : vector<16x16xf32>
    %478 = arith.addf %468, %477 : vector<16x16xf32>
    %c85 = arith.constant 85 : index
    %479 = memref.load %arg5[%c85] : memref<99xf32, #tpu.memory_space<smem>>
    %c5_246 = arith.constant 5 : index
    %c1_247 = arith.constant 1 : index
    %480 = vector.load %arg8[%c5_246, %c1_247] : memref<22x128xf32, #tpu.memory_space<vmem>>, vector<16x16xf32>
    %481 = vector.broadcast %479 : f32 to vector<16x16xf32>
    %482 = arith.mulf %481, %480 : vector<16x16xf32>
    %483 = arith.addf %473, %482 : vector<16x16xf32>
    %c37 = arith.constant 37 : index
    %484 = memref.load %arg5[%c37] : memref<99xf32, #tpu.memory_space<smem>>
    %c5_248 = arith.constant 5 : index
    %c2_249 = arith.constant 2 : index
    %485 = vector.load %arg7[%c5_248, %c2_249] : memref<22x128xf32, #tpu.memory_space<vmem>>, vector<16x16xf32>
    %486 = vector.broadcast %484 : f32 to vector<16x16xf32>
    %487 = arith.mulf %486, %485 : vector<16x16xf32>
    %488 = arith.addf %478, %487 : vector<16x16xf32>
    %c86 = arith.constant 86 : index
    %489 = memref.load %arg5[%c86] : memref<99xf32, #tpu.memory_space<smem>>
    %c5_250 = arith.constant 5 : index
    %c2_251 = arith.constant 2 : index
    %490 = vector.load %arg8[%c5_250, %c2_251] : memref<22x128xf32, #tpu.memory_space<vmem>>, vector<16x16xf32>
    %491 = vector.broadcast %489 : f32 to vector<16x16xf32>
    %492 = arith.mulf %491, %490 : vector<16x16xf32>
    %493 = arith.addf %483, %492 : vector<16x16xf32>
    %c38 = arith.constant 38 : index
    %494 = memref.load %arg5[%c38] : memref<99xf32, #tpu.memory_space<smem>>
    %c5_252 = arith.constant 5 : index
    %c3_253 = arith.constant 3 : index
    %495 = vector.load %arg7[%c5_252, %c3_253] : memref<22x128xf32, #tpu.memory_space<vmem>>, vector<16x16xf32>
    %496 = vector.broadcast %494 : f32 to vector<16x16xf32>
    %497 = arith.mulf %496, %495 : vector<16x16xf32>
    %498 = arith.addf %488, %497 : vector<16x16xf32>
    %c87 = arith.constant 87 : index
    %499 = memref.load %arg5[%c87] : memref<99xf32, #tpu.memory_space<smem>>
    %c5_254 = arith.constant 5 : index
    %c3_255 = arith.constant 3 : index
    %500 = vector.load %arg8[%c5_254, %c3_255] : memref<22x128xf32, #tpu.memory_space<vmem>>, vector<16x16xf32>
    %501 = vector.broadcast %499 : f32 to vector<16x16xf32>
    %502 = arith.mulf %501, %500 : vector<16x16xf32>
    %503 = arith.addf %493, %502 : vector<16x16xf32>
    %c39 = arith.constant 39 : index
    %504 = memref.load %arg5[%c39] : memref<99xf32, #tpu.memory_space<smem>>
    %c5_256 = arith.constant 5 : index
    %c4_257 = arith.constant 4 : index
    %505 = vector.load %arg7[%c5_256, %c4_257] : memref<22x128xf32, #tpu.memory_space<vmem>>, vector<16x16xf32>
    %506 = vector.broadcast %504 : f32 to vector<16x16xf32>
    %507 = arith.mulf %506, %505 : vector<16x16xf32>
    %508 = arith.addf %498, %507 : vector<16x16xf32>
    %c88 = arith.constant 88 : index
    %509 = memref.load %arg5[%c88] : memref<99xf32, #tpu.memory_space<smem>>
    %c5_258 = arith.constant 5 : index
    %c4_259 = arith.constant 4 : index
    %510 = vector.load %arg8[%c5_258, %c4_259] : memref<22x128xf32, #tpu.memory_space<vmem>>, vector<16x16xf32>
    %511 = vector.broadcast %509 : f32 to vector<16x16xf32>
    %512 = arith.mulf %511, %510 : vector<16x16xf32>
    %513 = arith.addf %503, %512 : vector<16x16xf32>
    %c40 = arith.constant 40 : index
    %514 = memref.load %arg5[%c40] : memref<99xf32, #tpu.memory_space<smem>>
    %c5_260 = arith.constant 5 : index
    %c5_261 = arith.constant 5 : index
    %515 = vector.load %arg7[%c5_260, %c5_261] : memref<22x128xf32, #tpu.memory_space<vmem>>, vector<16x16xf32>
    %516 = vector.broadcast %514 : f32 to vector<16x16xf32>
    %517 = arith.mulf %516, %515 : vector<16x16xf32>
    %518 = arith.addf %508, %517 : vector<16x16xf32>
    %c89 = arith.constant 89 : index
    %519 = memref.load %arg5[%c89] : memref<99xf32, #tpu.memory_space<smem>>
    %c5_262 = arith.constant 5 : index
    %c5_263 = arith.constant 5 : index
    %520 = vector.load %arg8[%c5_262, %c5_263] : memref<22x128xf32, #tpu.memory_space<vmem>>, vector<16x16xf32>
    %521 = vector.broadcast %519 : f32 to vector<16x16xf32>
    %522 = arith.mulf %521, %520 : vector<16x16xf32>
    %523 = arith.addf %513, %522 : vector<16x16xf32>
    %c41 = arith.constant 41 : index
    %524 = memref.load %arg5[%c41] : memref<99xf32, #tpu.memory_space<smem>>
    %c5_264 = arith.constant 5 : index
    %c6_265 = arith.constant 6 : index
    %525 = vector.load %arg7[%c5_264, %c6_265] : memref<22x128xf32, #tpu.memory_space<vmem>>, vector<16x16xf32>
    %526 = vector.broadcast %524 : f32 to vector<16x16xf32>
    %527 = arith.mulf %526, %525 : vector<16x16xf32>
    %528 = arith.addf %518, %527 : vector<16x16xf32>
    %c90 = arith.constant 90 : index
    %529 = memref.load %arg5[%c90] : memref<99xf32, #tpu.memory_space<smem>>
    %c5_266 = arith.constant 5 : index
    %c6_267 = arith.constant 6 : index
    %530 = vector.load %arg8[%c5_266, %c6_267] : memref<22x128xf32, #tpu.memory_space<vmem>>, vector<16x16xf32>
    %531 = vector.broadcast %529 : f32 to vector<16x16xf32>
    %532 = arith.mulf %531, %530 : vector<16x16xf32>
    %533 = arith.addf %523, %532 : vector<16x16xf32>
    %c42 = arith.constant 42 : index
    %534 = memref.load %arg5[%c42] : memref<99xf32, #tpu.memory_space<smem>>
    %c6_268 = arith.constant 6 : index
    %c0_269 = arith.constant 0 : index
    %535 = vector.load %arg7[%c6_268, %c0_269] : memref<22x128xf32, #tpu.memory_space<vmem>>, vector<16x16xf32>
    %536 = vector.broadcast %534 : f32 to vector<16x16xf32>
    %537 = arith.mulf %536, %535 : vector<16x16xf32>
    %538 = arith.addf %528, %537 : vector<16x16xf32>
    %c91 = arith.constant 91 : index
    %539 = memref.load %arg5[%c91] : memref<99xf32, #tpu.memory_space<smem>>
    %c6_270 = arith.constant 6 : index
    %c0_271 = arith.constant 0 : index
    %540 = vector.load %arg8[%c6_270, %c0_271] : memref<22x128xf32, #tpu.memory_space<vmem>>, vector<16x16xf32>
    %541 = vector.broadcast %539 : f32 to vector<16x16xf32>
    %542 = arith.mulf %541, %540 : vector<16x16xf32>
    %543 = arith.addf %533, %542 : vector<16x16xf32>
    %c43 = arith.constant 43 : index
    %544 = memref.load %arg5[%c43] : memref<99xf32, #tpu.memory_space<smem>>
    %c6_272 = arith.constant 6 : index
    %c1_273 = arith.constant 1 : index
    %545 = vector.load %arg7[%c6_272, %c1_273] : memref<22x128xf32, #tpu.memory_space<vmem>>, vector<16x16xf32>
    %546 = vector.broadcast %544 : f32 to vector<16x16xf32>
    %547 = arith.mulf %546, %545 : vector<16x16xf32>
    %548 = arith.addf %538, %547 : vector<16x16xf32>
    %c92 = arith.constant 92 : index
    %549 = memref.load %arg5[%c92] : memref<99xf32, #tpu.memory_space<smem>>
    %c6_274 = arith.constant 6 : index
    %c1_275 = arith.constant 1 : index
    %550 = vector.load %arg8[%c6_274, %c1_275] : memref<22x128xf32, #tpu.memory_space<vmem>>, vector<16x16xf32>
    %551 = vector.broadcast %549 : f32 to vector<16x16xf32>
    %552 = arith.mulf %551, %550 : vector<16x16xf32>
    %553 = arith.addf %543, %552 : vector<16x16xf32>
    %c44 = arith.constant 44 : index
    %554 = memref.load %arg5[%c44] : memref<99xf32, #tpu.memory_space<smem>>
    %c6_276 = arith.constant 6 : index
    %c2_277 = arith.constant 2 : index
    %555 = vector.load %arg7[%c6_276, %c2_277] : memref<22x128xf32, #tpu.memory_space<vmem>>, vector<16x16xf32>
    %556 = vector.broadcast %554 : f32 to vector<16x16xf32>
    %557 = arith.mulf %556, %555 : vector<16x16xf32>
    %558 = arith.addf %548, %557 : vector<16x16xf32>
    %c93 = arith.constant 93 : index
    %559 = memref.load %arg5[%c93] : memref<99xf32, #tpu.memory_space<smem>>
    %c6_278 = arith.constant 6 : index
    %c2_279 = arith.constant 2 : index
    %560 = vector.load %arg8[%c6_278, %c2_279] : memref<22x128xf32, #tpu.memory_space<vmem>>, vector<16x16xf32>
    %561 = vector.broadcast %559 : f32 to vector<16x16xf32>
    %562 = arith.mulf %561, %560 : vector<16x16xf32>
    %563 = arith.addf %553, %562 : vector<16x16xf32>
    %c45 = arith.constant 45 : index
    %564 = memref.load %arg5[%c45] : memref<99xf32, #tpu.memory_space<smem>>
    %c6_280 = arith.constant 6 : index
    %c3_281 = arith.constant 3 : index
    %565 = vector.load %arg7[%c6_280, %c3_281] : memref<22x128xf32, #tpu.memory_space<vmem>>, vector<16x16xf32>
    %566 = vector.broadcast %564 : f32 to vector<16x16xf32>
    %567 = arith.mulf %566, %565 : vector<16x16xf32>
    %568 = arith.addf %558, %567 : vector<16x16xf32>
    %c94 = arith.constant 94 : index
    %569 = memref.load %arg5[%c94] : memref<99xf32, #tpu.memory_space<smem>>
    %c6_282 = arith.constant 6 : index
    %c3_283 = arith.constant 3 : index
    %570 = vector.load %arg8[%c6_282, %c3_283] : memref<22x128xf32, #tpu.memory_space<vmem>>, vector<16x16xf32>
    %571 = vector.broadcast %569 : f32 to vector<16x16xf32>
    %572 = arith.mulf %571, %570 : vector<16x16xf32>
    %573 = arith.addf %563, %572 : vector<16x16xf32>
    %c46 = arith.constant 46 : index
    %574 = memref.load %arg5[%c46] : memref<99xf32, #tpu.memory_space<smem>>
    %c6_284 = arith.constant 6 : index
    %c4_285 = arith.constant 4 : index
    %575 = vector.load %arg7[%c6_284, %c4_285] : memref<22x128xf32, #tpu.memory_space<vmem>>, vector<16x16xf32>
    %576 = vector.broadcast %574 : f32 to vector<16x16xf32>
    %577 = arith.mulf %576, %575 : vector<16x16xf32>
    %578 = arith.addf %568, %577 : vector<16x16xf32>
    %c95 = arith.constant 95 : index
    %579 = memref.load %arg5[%c95] : memref<99xf32, #tpu.memory_space<smem>>
    %c6_286 = arith.constant 6 : index
    %c4_287 = arith.constant 4 : index
    %580 = vector.load %arg8[%c6_286, %c4_287] : memref<22x128xf32, #tpu.memory_space<vmem>>, vector<16x16xf32>
    %581 = vector.broadcast %579 : f32 to vector<16x16xf32>
    %582 = arith.mulf %581, %580 : vector<16x16xf32>
    %583 = arith.addf %573, %582 : vector<16x16xf32>
    %c47 = arith.constant 47 : index
    %584 = memref.load %arg5[%c47] : memref<99xf32, #tpu.memory_space<smem>>
    %c6_288 = arith.constant 6 : index
    %c5_289 = arith.constant 5 : index
    %585 = vector.load %arg7[%c6_288, %c5_289] : memref<22x128xf32, #tpu.memory_space<vmem>>, vector<16x16xf32>
    %586 = vector.broadcast %584 : f32 to vector<16x16xf32>
    %587 = arith.mulf %586, %585 : vector<16x16xf32>
    %588 = arith.addf %578, %587 : vector<16x16xf32>
    %c96 = arith.constant 96 : index
    %589 = memref.load %arg5[%c96] : memref<99xf32, #tpu.memory_space<smem>>
    %c6_290 = arith.constant 6 : index
    %c5_291 = arith.constant 5 : index
    %590 = vector.load %arg8[%c6_290, %c5_291] : memref<22x128xf32, #tpu.memory_space<vmem>>, vector<16x16xf32>
    %591 = vector.broadcast %589 : f32 to vector<16x16xf32>
    %592 = arith.mulf %591, %590 : vector<16x16xf32>
    %593 = arith.addf %583, %592 : vector<16x16xf32>
    %c48 = arith.constant 48 : index
    %594 = memref.load %arg5[%c48] : memref<99xf32, #tpu.memory_space<smem>>
    %c6_292 = arith.constant 6 : index
    %c6_293 = arith.constant 6 : index
    %595 = vector.load %arg7[%c6_292, %c6_293] : memref<22x128xf32, #tpu.memory_space<vmem>>, vector<16x16xf32>
    %596 = vector.broadcast %594 : f32 to vector<16x16xf32>
    %597 = arith.mulf %596, %595 : vector<16x16xf32>
    %598 = arith.addf %588, %597 : vector<16x16xf32>
    %c97 = arith.constant 97 : index
    %599 = memref.load %arg5[%c97] : memref<99xf32, #tpu.memory_space<smem>>
    %c6_294 = arith.constant 6 : index
    %c6_295 = arith.constant 6 : index
    %600 = vector.load %arg8[%c6_294, %c6_295] : memref<22x128xf32, #tpu.memory_space<vmem>>, vector<16x16xf32>
    %601 = vector.broadcast %599 : f32 to vector<16x16xf32>
    %602 = arith.mulf %601, %600 : vector<16x16xf32>
    %603 = arith.addf %593, %602 : vector<16x16xf32>
    %604 = arith.addf %598, %603 : vector<16x16xf32>
    %c98 = arith.constant 98 : index
    %605 = memref.load %arg5[%c98] : memref<99xf32, #tpu.memory_space<smem>>
    %606 = vector.broadcast %605 : f32 to vector<16x16xf32>
    %607 = arith.addf %604, %606 : vector<16x16xf32>
    %c0_296 = arith.constant 0 : index
    %c0_297 = arith.constant 0 : index
    %c0_298 = arith.constant 0 : index
    %c0_299 = arith.constant 0 : index
    %608 = vector.load %arg6[%c0_296, %c0_297, %c0_298, %c0_299] : memref<1x1x16x16xf32, #tpu.memory_space<vmem>>, vector<1x1x16x16xf32>
    %609 = vector.shape_cast %608 : vector<1x1x16x16xf32> to vector<16x16xf32>
    %610 = vector.shape_cast %607 : vector<16x16xf32> to vector<1x1x16x16xf32>
    tpu.vector_store %arg6[%c0_296, %c0_297, %c0_298, %c0_299], %610 {strides = array<i32>} : memref<1x1x16x16xf32, #tpu.memory_space<vmem>>, vector<1x1x16x16xf32>,
    return
  }
  func.func @transform_0(%arg0: i32, %arg1: i32) -> (i32, i32, i32, i32) {
    %c0_i32 = arith.constant 0 : i32
    %c0_i32_0 = arith.constant 0 : i32
    %c0_i32_1 = arith.constant 0 : i32
    return %arg0, %c0_i32, %arg1, %c0_i32_0 : i32, i32, i32, i32
  }
  func.func @transform_1(%arg0: i32, %arg1: i32) -> (i32, i32, i32, i32) {
    %c2_i32 = arith.constant 2 : i32
    %0 = arith.muli %arg1, %c2_i32 : i32
    %c1_i32 = arith.constant 1 : i32
    %1 = arith.subi %0, %c1_i32 : i32
    %c0_i32 = arith.constant 0 : i32
    %2 = arith.maxsi %1, %c0_i32 : i32
    %c0_i32_0 = arith.constant 0 : i32
    %c0_i32_1 = arith.constant 0 : i32
    %c0_i32_2 = arith.constant 0 : i32
    return %arg0, %c0_i32_0, %2, %c0_i32_1 : i32, i32, i32, i32
  }
  func.func @transform_2(%arg0: i32, %arg1: i32) -> (i32, i32, i32, i32) {
    %c1_i32 = arith.constant 1 : i32
    %0 = arith.addi %arg1, %c1_i32 : i32
    %c2_i32 = arith.constant 2 : i32
    %1 = arith.muli %0, %c2_i32 : i32
    %c1_i32_0 = arith.constant 1 : i32
    %2 = arith.minsi %1, %c1_i32_0 : i32
    %c0_i32 = arith.constant 0 : i32
    %c0_i32_1 = arith.constant 0 : i32
    %c0_i32_2 = arith.constant 0 : i32
    return %arg0, %c0_i32, %2, %c0_i32_1 : i32, i32, i32, i32
  }
  func.func @transform_3(%arg0: i32, %arg1: i32) -> i32 {
    %c0_i32 = arith.constant 0 : i32
    %c0_i32_0 = arith.constant 0 : i32
    return %c0_i32 : i32
  }
  func.func @transform_4(%arg0: i32, %arg1: i32) -> (i32, i32, i32, i32) {
    %c0_i32 = arith.constant 0 : i32
    %c0_i32_0 = arith.constant 0 : i32
    %c0_i32_1 = arith.constant 0 : i32
    return %arg0, %c0_i32, %arg1, %c0_i32_0 : i32, i32, i32, i32
  }
}

</mosaic_0001>

<llo_original>
// kernel: tpu_custom_call.1
$region0: #{tpu_custom_call.1}
  #allocation0 [shape = 'u32[]', space=smem, size = 0x4, offset = 0x4, fixed_abs, tag = 'smem constant byte address 0x4 - core index']
  #allocation1 [shape = 'u32[144,128]{1,0:T(1,128)}', space=vmem, size = 0x12000, scoped, tag = 'internal scratch']
  #allocation2 [shape = 'f32[22,128]{1,0:T(8,128)}', space=vmem, size = 0x3000, scoped, tag = 'scratch operand']
  #allocation3 [shape = 'f32[22,128]{1,0:T(8,128)}', space=vmem, size = 0x3000, scoped, tag = 'scratch operand']
  %s0 = inlined_call_operand.hbm [shape: f32[2,4,16,16], index: 0, kind: input, shape index: {}]
  %s1 = inlined_call_operand.hbm [shape: f32[2,4,16,16], index: 1, kind: input, shape index: {}]
  %s2 = inlined_call_operand.hbm [shape: f32[2,4,16,16], index: 2, kind: input, shape index: {}]
  %s3 = inlined_call_operand.vmem [shape: f32[99], index: 3, kind: input, shape index: {}]
  %s4 = inlined_call_operand.hbm [shape: f32[2,1,16,16], index: 4, kind: output, shape index: {}]
  %s5 = sld [smem:[#allocation0]]
  $region72: #{tpu_custom_call.1} parent=0
    _
  %s7 = ssub.s32 1, %s5
  %s8 = scalar_select 0, %s7, %s5
  $region1: #{tpu_custom_call.1} parent=0
    #allocation4 [shape = 'u8[65536]{0}', space=vmem, size = 0x10000, scoped, tag = 'input window, operand 0']
    #allocation5 [shape = 's32[2]{0}', space=sflag, size = 0x8, scoped, tag = 'scoped memory for tpu_custom_call.1']
    #allocation6 [shape = 's32[2]{0}', space=sflag, size = 0x8, scoped, tag = 'scoped memory for tpu_custom_call.1']
    #allocation7 [shape = 's32[2]{0}', space=sflag, size = 0x8, scoped, tag = 'scoped memory for tpu_custom_call.1']
    #allocation8 [shape = 'u8[32768]{0}', space=vmem, size = 0x8000, scoped, tag = 'input window, operand 1']
    #allocation9 [shape = 's32[2]{0}', space=sflag, size = 0x8, scoped, tag = 'scoped memory for tpu_custom_call.1']
    #allocation10 [shape = 'u8[32768]{0}', space=vmem, size = 0x8000, scoped, tag = 'input window, operand 2']
    #allocation11 [shape = 'u8[512]{0}', space=smem, size = 0x200, scoped, tag = 'input window, operand 3, single buffered']
    #allocation12 [shape = 'u8[16384]{0}', space=vmem, size = 0x4000, scoped, tag = 'output window, operand 0']
    %9 = vsyncpa [#allocation5], 0
    %s10 = scalar_lea.sflag [#allocation5], 1
    %11 = vsyncpa %s10, 0
    %12 = vsyncpa [#allocation9], 0
    %s13 = scalar_lea.sflag [#allocation9], 1
    %14 = vsyncpa %s13, 0
    %15 = vsyncpa [#allocation7], 0
    %16 = vsyncpa [#allocation6], 0
    %s17 = scalar_lea.sflag [#allocation6], 1
    %18 = vsyncpa %s17, 0
    loop: start=0, step=1, limit=4
    $region2: #{tpu_custom_call.1} parent=1 // loop_pre_header
      _
    $region3: #{tpu_custom_call.1} parent=1 // loop_header
      %s20 = sphi 0, %s24
      %p21 = scmp.ge.s32.totalorder %s20, 4
      %s27 = sphi 0, %s39
      %s28 = sphi 0, %s35
      %s29 = sphi 0, %s27
      %s30 = sphi 0, %s28
      %s31 = sphi 0, %s29
      %s32 = sphi 0, %s30
      %s44 = sphi 0, %s46
      %s47 = sphi 0, %s44
      %s48 = sphi 0, %s47
      %s64 = sphi 0, %s48
      %s80 = sphi 0, %s82
      %s83 = sphi 0, %s80
      %s84 = sphi 0, %s83
      %s100 = sphi 0, %s84
      %s116 = sphi 0, %s118
      %s119 = sphi 0, %s116
      %s120 = sphi 0, %s119
      %s136 = sphi 0, %s120
      %s140 = sphi 0, %s140
      %s142 = sphi 0, %s140
      %s143 = sphi 0, %s142
      %s157 = sphi 0, %s143
      %s165 = sphi 0, %s167
      %s168 = sphi 0, %s165
      %s169 = sphi 0, %s168
      %s185 = sphi 0, %s169
    $region4: #{tpu_custom_call.1} parent=1 // loop_header_branch
      %23 = sbr.rel (%p21) target = $region8
    $region5: #{tpu_custom_call.1} parent=1 // loop_body
      %s25 = ssub.s32 %s20, 1
      %s26 = ssub.s32 %s20, 2
      %s33 = sadd.s32 1, %s28
      %p34 = scmp.ge.s32.totalorder %s33, 1
      %s35 = scalar_select %p34, 0, %s33
      %s36 = sadd.s32 1, %s27
      %s37 = scalar_select %p34, %s36, %s27
      %p38 = scmp.ge.s32.totalorder %s37, 2
      %s39 = scalar_select %p38, 0, %s37
      %s40 = ssub.s32 %s27, %s39
      %s41 = ssub.s32 %s28, %s35
      %s42 = sor.u32 %s40, %s41
      %p43 = scmp.eq.s32.totalorder %s42, 0
      %s45 = sadd.s32 %s44, 1
      %s46 = scalar_select %p43, %s44, %s45
      %p49 = pneg %p43
      %p50 = scmp.eq.s32.totalorder %s20, 1
      %p51 = por %p49, %p50
      %p52 = scmp.ne.s32.totalorder %s44, %s47
      %p53 = scmp.eq.s32.totalorder %s20, 0
      %p54 = por %p52, %p53
      %p55 = scmp.ne.s32.totalorder %s44, %s47
      %p56 = scmp.eq.s32.totalorder %s25, 1
      %p57 = por %p55, %p56
      %p58 = scmp.ne.s32.totalorder %s47, %s48
      %p59 = scmp.eq.s32.totalorder %s25, 0
      %p60 = por %p58, %p59
      %p61 = scmp.ne.s32.totalorder %s47, %s48
      %p62 = scmp.eq.s32.totalorder %s26, 1
      %p63 = por %p61, %p62
      %p65 = scmp.ne.s32.totalorder %s48, %s64
      %p66 = scmp.eq.s32.totalorder %s26, 0
      %p67 = por %p65, %p66
      %s68 = smul.u32 %s28, 2
      %s69 = ssub.s32 %s68, 1
      %p70 = scmp.gt.s32.totalorder %s69, 0
      %s71 = scalar_select %p70, %s69, 0
      %s72 = smul.u32 %s35, 2
      %s73 = ssub.s32 %s72, 1
      %p74 = scmp.gt.s32.totalorder %s73, 0
      %s75 = scalar_select %p74, %s73, 0
      %s76 = ssub.s32 %s27, %s39
      %s77 = ssub.s32 %s71, %s75
      %s78 = sor.u32 %s76, %s77
      %p79 = scmp.eq.s32.totalorder %s78, 0
      %s81 = sadd.s32 %s80, 1
      %s82 = scalar_select %p79, %s80, %s81
      %p85 = pneg %p79
      %p86 = scmp.eq.s32.totalorder %s20, 1
      %p87 = por %p85, %p86
      %p88 = scmp.ne.s32.totalorder %s80, %s83
      %p89 = scmp.eq.s32.totalorder %s20, 0
      %p90 = por %p88, %p89
      %p91 = scmp.ne.s32.totalorder %s80, %s83
      %p92 = scmp.eq.s32.totalorder %s25, 1
      %p93 = por %p91, %p92
      %p94 = scmp.ne.s32.totalorder %s83, %s84
      %p95 = scmp.eq.s32.totalorder %s25, 0
      %p96 = por %p94, %p95
      %p97 = scmp.ne.s32.totalorder %s83, %s84
      %p98 = scmp.eq.s32.totalorder %s26, 1
      %p99 = por %p97, %p98
      %p101 = scmp.ne.s32.totalorder %s84, %s100
      %p102 = scmp.eq.s32.totalorder %s26, 0
      %p103 = por %p101, %p102
      %s104 = sadd.s32 %s28, 1
      %s105 = smul.u32 %s104, 2
      %p106 = scmp.lt.s32.totalorder %s105, 1
      %s107 = scalar_select %p106, %s105, 1
      %s108 = sadd.s32 %s35, 1
      %s109 = smul.u32 %s108, 2
      %p110 = scmp.lt.s32.totalorder %s109, 1
      %s111 = scalar_select %p110, %s109, 1
      %s112 = ssub.s32 %s27, %s39
      %s113 = ssub.s32 %s107, %s111
      %s114 = sor.u32 %s112, %s113
      %p115 = scmp.eq.s32.totalorder %s114, 0
      %s117 = sadd.s32 %s116, 1
      %s118 = scalar_select %p115, %s116, %s117
      %p121 = pneg %p115
      %p122 = scmp.eq.s32.totalorder %s20, 1
      %p123 = por %p121, %p122
      %p124 = scmp.ne.s32.totalorder %s116, %s119
      %p125 = scmp.eq.s32.totalorder %s20, 0
      %p126 = por %p124, %p125
      %p127 = scmp.ne.s32.totalorder %s116, %s119
      %p128 = scmp.eq.s32.totalorder %s25, 1
      %p129 = por %p127, %p128
      %p130 = scmp.ne.s32.totalorder %s119, %s120
      %p131 = scmp.eq.s32.totalorder %s25, 0
      %p132 = por %p130, %p131
      %p133 = scmp.ne.s32.totalorder %s119, %s120
      %p134 = scmp.eq.s32.totalorder %s26, 1
      %p135 = por %p133, %p134
      %p137 = scmp.ne.s32.totalorder %s120, %s136
      %p138 = scmp.eq.s32.totalorder %s26, 0
      %p139 = por %p137, %p138
      %s141 = sadd.s32 %s140, 1
      %p144 = scmp.eq.s32.totalorder %s20, 1
      %p145 = scmp.ne.s32.totalorder %s140, %s142
      %p146 = scmp.eq.s32.totalorder %s20, 0
      %p147 = por %p145, %p146
      %p148 = scmp.ne.s32.totalorder %s140, %s142
      %p149 = scmp.eq.s32.totalorder %s25, 1
      %p150 = por %p148, %p149
      %p151 = scmp.ne.s32.totalorder %s142, %s143
      %p152 = scmp.eq.s32.totalorder %s25, 0
      %p153 = por %p151, %p152
      %p154 = scmp.ne.s32.totalorder %s142, %s143
      %p155 = scmp.eq.s32.totalorder %s26, 1
      %p156 = por %p154, %p155
      %p158 = scmp.ne.s32.totalorder %s143, %s157
      %p159 = scmp.eq.s32.totalorder %s26, 0
      %p160 = por %p158, %p159
      %s161 = ssub.s32 %s27, %s39
      %s162 = ssub.s32 %s28, %s35
      %s163 = sor.u32 %s161, %s162
      %p164 = scmp.eq.s32.totalorder %s163, 0
      %s166 = sadd.s32 %s165, 1
      %s167 = scalar_select %p164, %s165, %s166
      %p170 = pneg %p164
      %p171 = scmp.eq.s32.totalorder %s20, 1
      %p172 = por %p170, %p171
      %p173 = scmp.ne.s32.totalorder %s165, %s168
      %p174 = scmp.eq.s32.totalorder %s20, 0
      %p175 = por %p173, %p174
      %p176 = scmp.ne.s32.totalorder %s165, %s168
      %p177 = scmp.eq.s32.totalorder %s25, 1
      %p178 = por %p176, %p177
      %p179 = scmp.ne.s32.totalorder %s168, %s169
      %p180 = scmp.eq.s32.totalorder %s25, 0
      %p181 = por %p179, %p180
      %p182 = scmp.ne.s32.totalorder %s168, %s169
      %p183 = scmp.eq.s32.totalorder %s26, 1
      %p184 = por %p182, %p183
      %p186 = scmp.ne.s32.totalorder %s169, %s185
      %p187 = scmp.eq.s32.totalorder %s26, 0
      %p188 = por %p186, %p187
      %p189 = scmp.le.s32.totalorder 1, %s20
      %p190 = scmp.lt.s32.totalorder %s20, 3
      %p191 = pnand %p189, %p190
      %p192 = pneg %p191
      // Predicated region
      $region9: #{tpu_custom_call.1} parent=5 // pred_check
        _
      $region10: #{tpu_custom_call.1} parent=5 // pred_check_branch
        %194 = sbr.rel (%p191) target = $region12
      $region11: #{tpu_custom_call.1} parent=5 // pred_region
        %s195 = ssub.s32 %s20, 1
        // Predicated region
        $region13: #{tpu_custom_call.1} parent=11 // pred_check
          %p196 = pneg %p153
        $region14: #{tpu_custom_call.1} parent=11 // pred_check_branch
          %198 = sbr.rel (%p196) target = $region16
        $region15: #{tpu_custom_call.1} parent=11 // pred_region
          %s200 = ssub.s32 16, 16
          %201 = vsyncadd [#allocation7], %s200
          %s203 = sshll.u32 %s3, 4
          %s204 = int_to_ptr.vmem [resolvable:$true] %s203
          %206 = dma.vmem_to_smem %s204, 16, [#allocation11], [#allocation7]
        $region16: #{tpu_custom_call.1} parent=11 // pred_fallthru
          _
      $region12: #{tpu_custom_call.1} parent=5 // pred_fallthru
        _
      %p207 = scmp.lt.s32.totalorder %s20, 2
      // Predicated region
      $region17: #{tpu_custom_call.1} parent=5 // pred_check
        %p208 = pneg %p207
      $region18: #{tpu_custom_call.1} parent=5 // pred_check_branch
        %210 = sbr.rel (%p208) target = $region20
      $region19: #{tpu_custom_call.1} parent=5 // pred_region
        // Predicated region
        $region21: #{tpu_custom_call.1} parent=19 // pred_check
          %p211 = pneg %p54
        $region22: #{tpu_custom_call.1} parent=19 // pred_check_branch
          %213 = sbr.rel (%p211) target = $region24
        $region23: #{tpu_custom_call.1} parent=19 // pred_region
          %s214 = sand.u32 %s44, 1
          %s215 = scalar_lea.sflag [#allocation5], %s214
          %s216 = sand.u32 %s44, 1
          %s217 = smul.addr %s216, 64
          %s218 = scalar_lea.vmem [#allocation4], %s217
          %s219 = smul.u32 2, %s28
          %s221 = ssub.s32 1024, 1024
          %222 = vsyncadd %s215, %s221
          %s223 = smul.addr %s27, 8
          %s224 = sadd.s32 %s219, %s223
          %s225 = smul.addr %s224, 128
          %s226 = scalar_lea.hbm %s0, %s225
          %s227 = sshll.u32 %s218, 4
          %s228 = int_to_ptr.vmem [resolvable:$true] %s227
          %233 = dma.hbm_to_vmem [thread:$0]  %s226, 1024, %s228, %s215, 128, 128, 8
        $region24: #{tpu_custom_call.1} parent=19 // pred_fallthru
          _
        // Predicated region
        $region25: #{tpu_custom_call.1} parent=19 // pred_check
          %p234 = pneg %p90
        $region26: #{tpu_custom_call.1} parent=19 // pred_check_branch
          %236 = sbr.rel (%p234) target = $region28
        $region27: #{tpu_custom_call.1} parent=19 // pred_region
          %s237 = sand.u32 %s20, 1
          %s238 = scalar_lea.sflag [#allocation9], %s237
          %s239 = sand.u32 %s80, 1
          %s240 = smul.addr %s239, 32
          %s241 = scalar_lea.vmem [#allocation8], %s240
          %s242 = smul.u32 %s28, 2
          %s243 = ssub.s32 %s242, 1
          %p244 = scmp.gt.s32.totalorder %s243, 0
          %s245 = scalar_select %p244, %s243, 0
          %s247 = ssub.s32 512, 512
          %248 = vsyncadd %s238, %s247
          %s249 = smul.addr %s27, 8
          %s250 = sadd.s32 %s245, %s249
          %s251 = smul.addr %s250, 128
          %s252 = scalar_lea.hbm %s1, %s251
          %s253 = sshll.u32 %s241, 4
          %s254 = int_to_ptr.vmem [resolvable:$true] %s253
          %259 = dma.hbm_to_vmem [thread:$0]  %s252, 512, %s254, %s238, 256, 128, 8
        $region28: #{tpu_custom_call.1} parent=19 // pred_fallthru
          _
        // Predicated region
        $region29: #{tpu_custom_call.1} parent=19 // pred_check
          %p260 = pneg %p126
        $region30: #{tpu_custom_call.1} parent=19 // pred_check_branch
          %262 = sbr.rel (%p260) target = $region32
        $region31: #{tpu_custom_call.1} parent=19 // pred_region
          %s263 = sand.u32 %s20, 1
          %s264 = scalar_lea.sflag [#allocation9], %s263
          %s265 = sand.u32 %s116, 1
          %s266 = smul.addr %s265, 32
          %s267 = scalar_lea.vmem [#allocation10], %s266
          %s268 = sadd.s32 %s28, 1
          %s269 = smul.u32 %s268, 2
          %p270 = scmp.lt.s32.totalorder %s269, 1
          %s271 = scalar_select %p270, %s269, 1
          %s273 = ssub.s32 512, 512
          %274 = vsyncadd %s264, %s273
          %s275 = smul.addr %s27, 8
          %s276 = sadd.s32 %s271, %s275
          %s277 = smul.addr %s276, 128
          %s278 = scalar_lea.hbm %s2, %s277
          %s279 = sshll.u32 %s267, 4
          %s280 = int_to_ptr.vmem [resolvable:$true] %s279
          %285 = dma.hbm_to_vmem [thread:$0]  %s278, 512, %s280, %s264, 256, 128, 8
        $region32: #{tpu_custom_call.1} parent=19 // pred_fallthru
          _
      $region20: #{tpu_custom_call.1} parent=5 // pred_fallthru
        _
      %p286 = scmp.le.s32.totalorder 1, %s20
      %p287 = scmp.lt.s32.totalorder %s20, 3
      %p288 = pnand %p286, %p287
      %p289 = pneg %p288
      // Predicated region
      $region33: #{tpu_custom_call.1} parent=5 // pred_check
        _
      $region34: #{tpu_custom_call.1} parent=5 // pred_check_branch
        %291 = sbr.rel (%p288) target = $region36
      $region35: #{tpu_custom_call.1} parent=5 // pred_region
        %s292 = ssub.s32 %s20, 1
        %s293 = sand.u32 %s47, 1
        %s294 = scalar_lea.sflag [#allocation5], %s293
        %s295 = sand.u32 %s47, 1
        %s296 = smul.addr %s295, 64
        %s297 = scalar_lea.vmem [#allocation4], %s296
        // Predicated region
        $region37: #{tpu_custom_call.1} parent=35 // pred_check
          %p298 = pneg %p60
        $region38: #{tpu_custom_call.1} parent=35 // pred_check_branch
          %300 = sbr.rel (%p298) target = $region40
        $region39: #{tpu_custom_call.1} parent=35 // pred_region
          %301 = dma.done %s294, 1024
        $region40: #{tpu_custom_call.1} parent=35 // pred_fallthru
          _
        %s302 = sand.u32 %s25, 1
        %s303 = scalar_lea.sflag [#allocation9], %s302
        %s304 = sand.u32 %s83, 1
        %s305 = smul.addr %s304, 32
        %s306 = scalar_lea.vmem [#allocation8], %s305
        // Predicated region
        $region41: #{tpu_custom_call.1} parent=35 // pred_check
          %p307 = pneg %p96
        $region42: #{tpu_custom_call.1} parent=35 // pred_check_branch
          %309 = sbr.rel (%p307) target = $region44
        $region43: #{tpu_custom_call.1} parent=35 // pred_region
          %310 = dma.done %s303, 512
        $region44: #{tpu_custom_call.1} parent=35 // pred_fallthru
          _
        %s311 = sand.u32 %s25, 1
        %s312 = scalar_lea.sflag [#allocation9], %s311
        %s313 = sand.u32 %s119, 1
        %s314 = smul.addr %s313, 32
        %s315 = scalar_lea.vmem [#allocation10], %s314
        // Predicated region
        $region45: #{tpu_custom_call.1} parent=35 // pred_check
          %p316 = pneg %p132
        $region46: #{tpu_custom_call.1} parent=35 // pred_check_branch
          %318 = sbr.rel (%p316) target = $region48
        $region47: #{tpu_custom_call.1} parent=35 // pred_region
          %319 = dma.done %s312, 512
        $region48: #{tpu_custom_call.1} parent=35 // pred_fallthru
          _
        // Predicated region
        $region49: #{tpu_custom_call.1} parent=35 // pred_check
          %p320 = pneg %p153
        $region50: #{tpu_custom_call.1} parent=35 // pred_check_branch
          %322 = sbr.rel (%p320) target = $region52
        $region51: #{tpu_custom_call.1} parent=35 // pred_region
          %323 = dma.done [#allocation7], 16
        $region52: #{tpu_custom_call.1} parent=35 // pred_fallthru
          _
        %324 = sfence
        %s325 = sand.u32 %s47, 1
        %s326 = scalar_lea.sflag [#allocation5], %s325
        %s327 = sand.u32 %s47, 1
        %s328 = smul.addr %s327, 64
        %s329 = scalar_lea.vmem [#allocation4], %s328
        %p330 = pneg %p60
        %p331 = pneg %p57
        %s332 = sand.u32 %s25, 1
        %s333 = scalar_lea.sflag [#allocation9], %s332
        %s334 = sand.u32 %s83, 1
        %s335 = smul.addr %s334, 32
        %s336 = scalar_lea.vmem [#allocation8], %s335
        %p337 = pneg %p96
        %p338 = pneg %p93
        %s339 = sand.u32 %s25, 1
        %s340 = scalar_lea.sflag [#allocation9], %s339
        %s341 = sand.u32 %s119, 1
        %s342 = smul.addr %s341, 32
        %s343 = scalar_lea.vmem [#allocation10], %s342
        %p344 = pneg %p132
        %p345 = pneg %p129
        %p346 = pneg %p153
        %p347 = pneg %p150
        %p348 = pneg %p181
        %p349 = pneg %p178
        %s350 = sand.u32 %s168, 1
        %s351 = scalar_lea.sflag [#allocation6], %s350
        %s352 = sand.u32 %s168, 1
        %s353 = smul.addr %s352, 16
        %s354 = scalar_lea.vmem [#allocation12], %s353
        %s355 = smul.u32 2, %s30
        %s356 = smul.u32 %s30, 2
        %s357 = ssub.s32 %s356, 1
        %p358 = scmp.gt.s32.totalorder %s357, 0
        %s359 = scalar_select %p358, %s357, 0
        %s360 = sadd.s32 %s30, 1
        %s361 = smul.u32 %s360, 2
        %p362 = scmp.lt.s32.totalorder %s361, 1
        %s363 = scalar_select %p362, %s361, 1
        %s364 = smul.u32 2, %s30
        %v365 = vld [vmem:[%s297] sm:$0xff]
        %v366 = vld [vmem:[%s297 + $0x8] sm:$0xff]
        %v367 = vld [vmem:[%s306] sm:$0xff]
        %v368 = vld [vmem:[%s315] sm:$0xff]
        loop: start=1, step=1, limit=4
        $region53: #{tpu_custom_call.1} parent=35 // loop_pre_header
          _
        $region54: #{tpu_custom_call.1} parent=35 // loop_header
          %s370 = sphi 1, %s374
          %p371 = scmp.ge.s32.totalorder %s370, 4
          %v375 = vphi %v365, %v392
          %v376 = vphi %v366, %v393
          %v377 = vphi %v365, %v394
          %v378 = vphi %v366, %v395
          %v379 = vphi %v367, %v396
          %v380 = vphi %v367, %v397
          %v381 = vphi %v368, %v398
          %v382 = vphi %v368, %v399
        $region55: #{tpu_custom_call.1} parent=35 // loop_header_branch
          %373 = sbr.rel (%p371) target = $region59
        $region56: #{tpu_custom_call.1} parent=35 // loop_body
          %s383 = smul.u32 %s370, 16
          %s384 = scalar_lea.vmem %s297, %s383 [#allocation4]
          %v385 = vld [vmem:[%s384] sm:$0xff]
          %v386 = vld [vmem:[%s384 + $0x8] sm:$0xff]
          %s387 = smul.u32 %s370, 8
          %s388 = scalar_lea.vmem %s306, %s387 [#allocation8]
          %v389 = vld [vmem:[%s388] sm:$0xff]
          %s390 = scalar_lea.vmem %s315, %s387 [#allocation10]
          %v391 = vld [vmem:[%s390] sm:$0xff]
          %v392 = vadd.f32 %v375, %v385
          %v393 = vadd.f32 %v376, %v386
          %v394 = vmax.f32 %v377, %v385
          %v395 = vmax.f32 %v378, %v386
          %v396 = vadd.f32 %v379, %v389
          %v397 = vmax.f32 %v380, %v389
          %v398 = vadd.f32 %v381, %v391
          %v399 = vmax.f32 %v382, %v391
        $region57: #{tpu_custom_call.1} parent=35 // loop_footer
          %s374 = sadd.s32 1, %s370
        $region58: #{tpu_custom_call.1} parent=35 // loop_footer_branch
          %369 = sbr.rel target = $region54
        $region59: #{tpu_custom_call.1} parent=35 // loop_exit
          _
        %p400 = scmp.eq.s32.totalorder %s30, 0
        %v402 = vrot.slane %v375, 3
        %v404 = vrot.slane %v375, 1
        %v406 = vrot.slane %v375, 7
        %vm408 = vcmask 1040384
        %v409 = vsel %vm408, %v402, %v404
        %vm410 = vcmask 1041408
        %v411 = vsel %vm410, %v409, %v406
        %s412 = scalar_select %p400, 1, 0
        %v413 = vstv %s412
        %vm414 = vcmp.eq.s32.totalorder %v413, 1
        %v416 = vrot.slane %v379, 5
        %v418 = vsel %vm414, %v411, %v416
        %v420 = vrot.slane %v377, 3
        %v422 = vrot.slane %v377, 1
        %v424 = vrot.slane %v377, 7
        %v426 = vsel %vm408, %v420, %v422
        %v427 = vsel %vm410, %v426, %v424
        %v429 = vrot.slane %v380, 5
        %v431 = vsel %vm414, %v427, %v429
        %v433 = vrot.slane %v376, 6
        %v435 = vrot.slane %v376, 4
        %v437 = vrot.slane %v376, 2
        %v439 = vsel %vm408, %v433, %v435
        %v440 = vsel %vm410, %v439, %v437
        %v441 = vsel %vm414, %v440, %v381
        %v443 = vrot.slane %v378, 6
        %v445 = vrot.slane %v378, 4
        %v447 = vrot.slane %v378, 2
        %v449 = vsel %vm408, %v443, %v445
        %v450 = vsel %vm410, %v449, %v447
        %v451 = vsel %vm414, %v450, %v382
        %453 = vrot.lane.b32.xlu0 %v418, 3
        %v454 = vpop.permute.xlu0 %453
        %vm456 = vcmask 149528
        %457 = vst.msk [vmem:[#allocation2] sm:$0x7] %vm456, %v454
        %458 = vrot.lane.b32.xlu0 %v418, 125
        %v459 = vpop.permute.xlu0 %458
        %vm461 = vcmask 2048
        %462 = vst.msk [vmem:[#allocation2] sm:$0x7] %vm461, %v459
        %463 = vrot.lane.b32.xlu0 %v418, 5
        %v464 = vpop.permute.xlu0 %463
        %vm466 = vcmask 157848
        %467 = vst.msk [vmem:[#allocation2] sm:$0x7] %vm466, %v464
        %468 = vrot.lane.b32.xlu0 %v418, 127
        %v469 = vpop.permute.xlu0 %468
        %vm471 = vcmask 10248
        %472 = vst.msk [vmem:[#allocation2] sm:$0x7] %vm471, %v469
        %473 = vrot.lane.b32.xlu0 %v418, 7
        %v474 = vpop.permute.xlu0 %473
        %vm476 = vcmask 166048
        %477 = vst.msk [vmem:[#allocation2] sm:$0x7] %vm476, %v474
        %478 = vrot.lane.b32.xlu0 %v418, 1
        %v479 = vpop.permute.xlu0 %478
        %vm481 = vcmask 18448
        %482 = vst.msk [vmem:[#allocation2] sm:$0x7] %vm481, %v479
        %483 = vrot.lane.b32.xlu0 %v418, 9
        %v484 = vpop.permute.xlu0 %483
        %vm486 = vcmask 174248
        %487 = vst.msk [vmem:[#allocation2] sm:$0x7] %vm486, %v484
        %488 = vrot.lane.b32.xlu0 %v375, 3
        %v489 = vpop.permute.xlu0 %488
        %490 = vrot.lane.b32.xlu0 %v376, 3
        %v491 = vpop.permute.xlu0 %490
        %vm494 = vcmask 154648
        %495 = vst.msk [vmem:[#allocation2 + $0x3] sm:$0xff] %vm494, %v489
        %496 = vst.msk [vmem:[#allocation2 + $0xb] sm:$0xff] %vm494, %v491
        %497 = vrot.lane.b32.xlu0 %v375, 125
        %v498 = vpop.permute.xlu0 %497
        %499 = vrot.lane.b32.xlu0 %v376, 125
        %v500 = vpop.permute.xlu0 %499
        %vm503 = vcmask 7168
        %504 = vst.msk [vmem:[#allocation2 + $0x3] sm:$0xff] %vm503, %v498
        %505 = vst.msk [vmem:[#allocation2 + $0xb] sm:$0xff] %vm503, %v500
        %506 = vrot.lane.b32.xlu0 %v375, 5
        %v507 = vpop.permute.xlu0 %506
        %508 = vrot.lane.b32.xlu0 %v376, 5
        %v509 = vpop.permute.xlu0 %508
        %vm512 = vcmask 162968
        %513 = vst.msk [vmem:[#allocation2 + $0x3] sm:$0xff] %vm512, %v507
        %514 = vst.msk [vmem:[#allocation2 + $0xb] sm:$0xff] %vm512, %v509
        %515 = vrot.lane.b32.xlu0 %v375, 127
        %v516 = vpop.permute.xlu0 %515
        %517 = vrot.lane.b32.xlu0 %v376, 127
        %v518 = vpop.permute.xlu0 %517
        %vm521 = vcmask 15368
        %522 = vst.msk [vmem:[#allocation2 + $0x3] sm:$0xff] %vm521, %v516
        %523 = vst.msk [vmem:[#allocation2 + $0xb] sm:$0xff] %vm521, %v518
        %524 = vrot.lane.b32.xlu0 %v375, 7
        %v525 = vpop.permute.xlu0 %524
        %526 = vrot.lane.b32.xlu0 %v376, 7
        %v527 = vpop.permute.xlu0 %526
        %vm530 = vcmask 171168
        %531 = vst.msk [vmem:[#allocation2 + $0x3] sm:$0xff] %vm530, %v525
        %532 = vst.msk [vmem:[#allocation2 + $0xb] sm:$0xff] %vm530, %v527
        %533 = vrot.lane.b32.xlu0 %v375, 1
        %v534 = vpop.permute.xlu0 %533
        %535 = vrot.lane.b32.xlu0 %v376, 1
        %v536 = vpop.permute.xlu0 %535
        %vm539 = vcmask 23568
        %540 = vst.msk [vmem:[#allocation2 + $0x3] sm:$0xff] %vm539, %v534
        %541 = vst.msk [vmem:[#allocation2 + $0xb] sm:$0xff] %vm539, %v536
        %542 = vrot.lane.b32.xlu0 %v375, 9
        %v543 = vpop.permute.xlu0 %542
        %544 = vrot.lane.b32.xlu0 %v376, 9
        %v545 = vpop.permute.xlu0 %544
        %vm548 = vcmask 179368
        %549 = vst.msk [vmem:[#allocation2 + $0x3] sm:$0xff] %vm548, %v543
        %550 = vst.msk [vmem:[#allocation2 + $0xb] sm:$0xff] %vm548, %v545
        %552 = vrot.lane.b32.xlu0 %v441, 3
        %v553 = vpop.permute.xlu0 %552
        %555 = vst.msk [vmem:[#allocation2 + $0x13] sm:$0x7] %vm456, %v553
        %556 = vrot.lane.b32.xlu0 %v441, 125
        %v557 = vpop.permute.xlu0 %556
        %559 = vst.msk [vmem:[#allocation2 + $0x13] sm:$0x7] %vm461, %v557
        %560 = vrot.lane.b32.xlu0 %v441, 5
        %v561 = vpop.permute.xlu0 %560
        %563 = vst.msk [vmem:[#allocation2 + $0x13] sm:$0x7] %vm466, %v561
        %564 = vrot.lane.b32.xlu0 %v441, 127
        %v565 = vpop.permute.xlu0 %564
        %567 = vst.msk [vmem:[#allocation2 + $0x13] sm:$0x7] %vm471, %v565
        %568 = vrot.lane.b32.xlu0 %v441, 7
        %v569 = vpop.permute.xlu0 %568
        %571 = vst.msk [vmem:[#allocation2 + $0x13] sm:$0x7] %vm476, %v569
        %572 = vrot.lane.b32.xlu0 %v441, 1
        %v573 = vpop.permute.xlu0 %572
        %575 = vst.msk [vmem:[#allocation2 + $0x13] sm:$0x7] %vm481, %v573
        %576 = vrot.lane.b32.xlu0 %v441, 9
        %v577 = vpop.permute.xlu0 %576
        %579 = vst.msk [vmem:[#allocation2 + $0x13] sm:$0x7] %vm486, %v577
        %581 = vrot.lane.b32.xlu0 %v431, 3
        %v582 = vpop.permute.xlu0 %581
        %584 = vst.msk [vmem:[#allocation3] sm:$0x7] %vm456, %v582
        %585 = vrot.lane.b32.xlu0 %v431, 125
        %v586 = vpop.permute.xlu0 %585
        %588 = vst.msk [vmem:[#allocation3] sm:$0x7] %vm461, %v586
        %589 = vrot.lane.b32.xlu0 %v431, 5
        %v590 = vpop.permute.xlu0 %589
        %592 = vst.msk [vmem:[#allocation3] sm:$0x7] %vm466, %v590
        %593 = vrot.lane.b32.xlu0 %v431, 127
        %v594 = vpop.permute.xlu0 %593
        %596 = vst.msk [vmem:[#allocation3] sm:$0x7] %vm471, %v594
        %597 = vrot.lane.b32.xlu0 %v431, 7
        %v598 = vpop.permute.xlu0 %597
        %600 = vst.msk [vmem:[#allocation3] sm:$0x7] %vm476, %v598
        %601 = vrot.lane.b32.xlu0 %v431, 1
        %v602 = vpop.permute.xlu0 %601
        %604 = vst.msk [vmem:[#allocation3] sm:$0x7] %vm481, %v602
        %605 = vrot.lane.b32.xlu0 %v431, 9
        %v606 = vpop.permute.xlu0 %605
        %608 = vst.msk [vmem:[#allocation3] sm:$0x7] %vm486, %v606
        %609 = vrot.lane.b32.xlu0 %v377, 3
        %v610 = vpop.permute.xlu0 %609
        %611 = vrot.lane.b32.xlu0 %v378, 3
        %v612 = vpop.permute.xlu0 %611
        %615 = vst.msk [vmem:[#allocation3 + $0x3] sm:$0xff] %vm494, %v610
        %616 = vst.msk [vmem:[#allocation3 + $0xb] sm:$0xff] %vm494, %v612
        %617 = vrot.lane.b32.xlu0 %v377, 125
        %v618 = vpop.permute.xlu0 %617
        %619 = vrot.lane.b32.xlu0 %v378, 125
        %v620 = vpop.permute.xlu0 %619
        %623 = vst.msk [vmem:[#allocation3 + $0x3] sm:$0xff] %vm503, %v618
        %624 = vst.msk [vmem:[#allocation3 + $0xb] sm:$0xff] %vm503, %v620
        %625 = vrot.lane.b32.xlu0 %v377, 5
        %v626 = vpop.permute.xlu0 %625
        %627 = vrot.lane.b32.xlu0 %v378, 5
        %v628 = vpop.permute.xlu0 %627
        %631 = vst.msk [vmem:[#allocation3 + $0x3] sm:$0xff] %vm512, %v626
        %632 = vst.msk [vmem:[#allocation3 + $0xb] sm:$0xff] %vm512, %v628
        %633 = vrot.lane.b32.xlu0 %v377, 127
        %v634 = vpop.permute.xlu0 %633
        %635 = vrot.lane.b32.xlu0 %v378, 127
        %v636 = vpop.permute.xlu0 %635
        %639 = vst.msk [vmem:[#allocation3 + $0x3] sm:$0xff] %vm521, %v634
        %640 = vst.msk [vmem:[#allocation3 + $0xb] sm:$0xff] %vm521, %v636
        %641 = vrot.lane.b32.xlu0 %v377, 7
        %v642 = vpop.permute.xlu0 %641
        %643 = vrot.lane.b32.xlu0 %v378, 7
        %v644 = vpop.permute.xlu0 %643
        %647 = vst.msk [vmem:[#allocation3 + $0x3] sm:$0xff] %vm530, %v642
        %648 = vst.msk [vmem:[#allocation3 + $0xb] sm:$0xff] %vm530, %v644
        %649 = vrot.lane.b32.xlu0 %v377, 1
        %v650 = vpop.permute.xlu0 %649
        %651 = vrot.lane.b32.xlu0 %v378, 1
        %v652 = vpop.permute.xlu0 %651
        %655 = vst.msk [vmem:[#allocation3 + $0x3] sm:$0xff] %vm539, %v650
        %656 = vst.msk [vmem:[#allocation3 + $0xb] sm:$0xff] %vm539, %v652
        %657 = vrot.lane.b32.xlu0 %v377, 9
        %v658 = vpop.permute.xlu0 %657
        %659 = vrot.lane.b32.xlu0 %v378, 9
        %v660 = vpop.permute.xlu0 %659
        %663 = vst.msk [vmem:[#allocation3 + $0x3] sm:$0xff] %vm548, %v658
        %664 = vst.msk [vmem:[#allocation3 + $0xb] sm:$0xff] %vm548, %v660
        %666 = vrot.lane.b32.xlu0 %v451, 3
        %v667 = vpop.permute.xlu0 %666
        %669 = vst.msk [vmem:[#allocation3 + $0x13] sm:$0x7] %vm456, %v667
        %670 = vrot.lane.b32.xlu0 %v451, 125
        %v671 = vpop.permute.xlu0 %670
        %673 = vst.msk [vmem:[#allocation3 + $0x13] sm:$0x7] %vm461, %v671
        %674 = vrot.lane.b32.xlu0 %v451, 5
        %v675 = vpop.permute.xlu0 %674
        %677 = vst.msk [vmem:[#allocation3 + $0x13] sm:$0x7] %vm466, %v675
        %678 = vrot.lane.b32.xlu0 %v451, 127
        %v679 = vpop.permute.xlu0 %678
        %681 = vst.msk [vmem:[#allocation3 + $0x13] sm:$0x7] %vm471, %v679
        %682 = vrot.lane.b32.xlu0 %v451, 7
        %v683 = vpop.permute.xlu0 %682
        %685 = vst.msk [vmem:[#allocation3 + $0x13] sm:$0x7] %vm476, %v683
        %686 = vrot.lane.b32.xlu0 %v451, 1
        %v687 = vpop.permute.xlu0 %686
        %689 = vst.msk [vmem:[#allocation3 + $0x13] sm:$0x7] %vm481, %v687
        %690 = vrot.lane.b32.xlu0 %v451, 9
        %v691 = vpop.permute.xlu0 %690
        %693 = vst.msk [vmem:[#allocation3 + $0x13] sm:$0x7] %vm486, %v691
        %s694 = sld [smem:[#allocation11]]
        %v695 = vld [vmem:[#allocation2] sm:$0xff]
        %v696 = vld [vmem:[#allocation2 + $0x8] sm:$0xff]
        %v697 = vstv %s694
        %v698 = vmul.f32 %v697, %v695
        %v699 = vmul.f32 %v697, %v696
        %v700 = vadd.f32 %v698, 0.0
        %v701 = vadd.f32 %v699, 0.0
        %s702 = sld [smem:[#allocation11 + $0x31]]
        %v703 = vld [vmem:[#allocation3] sm:$0xff]
        %v704 = vld [vmem:[#allocation3 + $0x8] sm:$0xff]
        %v705 = vstv %s702
        %v706 = vmul.f32 %v705, %v703
        %v707 = vmul.f32 %v705, %v704
        %v708 = vadd.f32 %v706, 0.0
        %v709 = vadd.f32 %v707, 0.0
        %s710 = sld [smem:[#allocation11 + $0x1]]
        %v711 = vstv %s710
        %v712 = vmul.f32 %v711, %v695
        %v713 = vmul.f32 %v711, %v696
        %716 = vrot.lane.b32.xlu0 %v712, 127
        %v717 = vpop.permute.xlu0 %716
        %718 = vrot.lane.b32.xlu0 %v713, 127
        %v719 = vpop.permute.xlu0 %718
        %v722 = vadd.f32 %v700, %v717
        %v723 = vadd.f32 %v701, %v719
        %s724 = sld [smem:[#allocation11 + $0x32]]
        %v725 = vstv %s724
        %v726 = vmul.f32 %v725, %v703
        %v727 = vmul.f32 %v725, %v704
        %730 = vrot.lane.b32.xlu0 %v726, 127
        %v731 = vpop.permute.xlu0 %730
        %732 = vrot.lane.b32.xlu0 %v727, 127
        %v733 = vpop.permute.xlu0 %732
        %v736 = vadd.f32 %v708, %v731
        %v737 = vadd.f32 %v709, %v733
        %s738 = sld [smem:[#allocation11 + $0x2]]
        %v739 = vstv %s738
        %v740 = vmul.f32 %v739, %v695
        %v741 = vmul.f32 %v739, %v696
        %744 = vrot.lane.b32.xlu0 %v740, 126
        %v745 = vpop.permute.xlu0 %744
        %746 = vrot.lane.b32.xlu0 %v741, 126
        %v747 = vpop.permute.xlu0 %746
        %v750 = vadd.f32 %v722, %v745
        %v751 = vadd.f32 %v723, %v747
        %s752 = sld [smem:[#allocation11 + $0x33]]
        %v753 = vstv %s752
        %v754 = vmul.f32 %v753, %v703
        %v755 = vmul.f32 %v753, %v704
        %758 = vrot.lane.b32.xlu0 %v754, 126
        %v759 = vpop.permute.xlu0 %758
        %760 = vrot.lane.b32.xlu0 %v755, 126
        %v761 = vpop.permute.xlu0 %760
        %v764 = vadd.f32 %v736, %v759
        %v765 = vadd.f32 %v737, %v761
        %s766 = sld [smem:[#allocation11 + $0x3]]
        %v767 = vstv %s766
        %v768 = vmul.f32 %v767, %v695
        %v769 = vmul.f32 %v767, %v696
        %772 = vrot.lane.b32.xlu0 %v768, 125
        %v773 = vpop.permute.xlu0 %772
        %774 = vrot.lane.b32.xlu0 %v769, 125
        %v775 = vpop.permute.xlu0 %774
        %v778 = vadd.f32 %v750, %v773
        %v779 = vadd.f32 %v751, %v775
        %s780 = sld [smem:[#allocation11 + $0x34]]
        %v781 = vstv %s780
        %v782 = vmul.f32 %v781, %v703
        %v783 = vmul.f32 %v781, %v704
        %786 = vrot.lane.b32.xlu0 %v782, 125
        %v787 = vpop.permute.xlu0 %786
        %788 = vrot.lane.b32.xlu0 %v783, 125
        %v789 = vpop.permute.xlu0 %788
        %v792 = vadd.f32 %v764, %v787
        %v793 = vadd.f32 %v765, %v789
        %s794 = sld [smem:[#allocation11 + $0x4]]
        %v795 = vstv %s794
        %v796 = vmul.f32 %v795, %v695
        %v797 = vmul.f32 %v795, %v696
        %800 = vrot.lane.b32.xlu0 %v796, 124
        %v801 = vpop.permute.xlu0 %800
        %802 = vrot.lane.b32.xlu0 %v797, 124
        %v803 = vpop.permute.xlu0 %802
        %v806 = vadd.f32 %v778, %v801
        %v807 = vadd.f32 %v779, %v803
        %s808 = sld [smem:[#allocation11 + $0x35]]
        %v809 = vstv %s808
        %v810 = vmul.f32 %v809, %v703
        %v811 = vmul.f32 %v809, %v704
        %814 = vrot.lane.b32.xlu0 %v810, 124
        %v815 = vpop.permute.xlu0 %814
        %816 = vrot.lane.b32.xlu0 %v811, 124
        %v817 = vpop.permute.xlu0 %816
        %v820 = vadd.f32 %v792, %v815
        %v821 = vadd.f32 %v793, %v817
        %s822 = sld [smem:[#allocation11 + $0x5]]
        %v823 = vstv %s822
        %v824 = vmul.f32 %v823, %v695
        %v825 = vmul.f32 %v823, %v696
        %828 = vrot.lane.b32.xlu0 %v824, 123
        %v829 = vpop.permute.xlu0 %828
        %830 = vrot.lane.b32.xlu0 %v825, 123
        %v831 = vpop.permute.xlu0 %830
        %v834 = vadd.f32 %v806, %v829
        %v835 = vadd.f32 %v807, %v831
        %s836 = sld [smem:[#allocation11 + $0x36]]
        %v837 = vstv %s836
        %v838 = vmul.f32 %v837, %v703
        %v839 = vmul.f32 %v837, %v704
        %842 = vrot.lane.b32.xlu0 %v838, 123
        %v843 = vpop.permute.xlu0 %842
        %844 = vrot.lane.b32.xlu0 %v839, 123
        %v845 = vpop.permute.xlu0 %844
        %v848 = vadd.f32 %v820, %v843
        %v849 = vadd.f32 %v821, %v845
        %s850 = sld [smem:[#allocation11 + $0x6]]
        %v851 = vstv %s850
        %v852 = vmul.f32 %v851, %v695
        %v853 = vmul.f32 %v851, %v696
        %856 = vrot.lane.b32.xlu0 %v852, 122
        %v857 = vpop.permute.xlu0 %856
        %858 = vrot.lane.b32.xlu0 %v853, 122
        %v859 = vpop.permute.xlu0 %858
        %v862 = vadd.f32 %v834, %v857
        %v863 = vadd.f32 %v835, %v859
        %s864 = sld [smem:[#allocation11 + $0x37]]
        %v865 = vstv %s864
        %v866 = vmul.f32 %v865, %v703
        %v867 = vmul.f32 %v865, %v704
        %870 = vrot.lane.b32.xlu0 %v866, 122
        %v871 = vpop.permute.xlu0 %870
        %872 = vrot.lane.b32.xlu0 %v867, 122
        %v873 = vpop.permute.xlu0 %872
        %v876 = vadd.f32 %v848, %v871
        %v877 = vadd.f32 %v849, %v873
        %s878 = sld [smem:[#allocation11 + $0x7]]
        %v879 = vld [vmem:[#allocation2 + $0x1] sm:$0xff]
        %v880 = vld [vmem:[#allocation2 + $0x9] sm:$0xff]
        %v881 = vstv %s878
        %v882 = vmul.f32 %v881, %v879
        %v883 = vmul.f32 %v881, %v880
        %v884 = vadd.f32 %v862, %v882
        %v885 = vadd.f32 %v863, %v883
        %s886 = sld [smem:[#allocation11 + $0x38]]
        %v887 = vld [vmem:[#allocation3 + $0x1] sm:$0xff]
        %v888 = vld [vmem:[#allocation3 + $0x9] sm:$0xff]
        %v889 = vstv %s886
        %v890 = vmul.f32 %v889, %v887
        %v891 = vmul.f32 %v889, %v888
        %v892 = vadd.f32 %v876, %v890
        %v893 = vadd.f32 %v877, %v891
        %s894 = sld [smem:[#allocation11 + $0x8]]
        %v895 = vstv %s894
        %v896 = vmul.f32 %v895, %v879
        %v897 = vmul.f32 %v895, %v880
        %900 = vrot.lane.b32.xlu0 %v896, 127
        %v901 = vpop.permute.xlu0 %900
        %902 = vrot.lane.b32.xlu0 %v897, 127
        %v903 = vpop.permute.xlu0 %902
        %v906 = vadd.f32 %v884, %v901
        %v907 = vadd.f32 %v885, %v903
        %s908 = sld [smem:[#allocation11 + $0x39]]
        %v909 = vstv %s908
        %v910 = vmul.f32 %v909, %v887
        %v911 = vmul.f32 %v909, %v888
        %914 = vrot.lane.b32.xlu0 %v910, 127
        %v915 = vpop.permute.xlu0 %914
        %916 = vrot.lane.b32.xlu0 %v911, 127
        %v917 = vpop.permute.xlu0 %916
        %v920 = vadd.f32 %v892, %v915
        %v921 = vadd.f32 %v893, %v917
        %s922 = sld [smem:[#allocation11 + $0x9]]
        %v923 = vstv %s922
        %v924 = vmul.f32 %v923, %v879
        %v925 = vmul.f32 %v923, %v880
        %928 = vrot.lane.b32.xlu0 %v924, 126
        %v929 = vpop.permute.xlu0 %928
        %930 = vrot.lane.b32.xlu0 %v925, 126
        %v931 = vpop.permute.xlu0 %930
        %v934 = vadd.f32 %v906, %v929
        %v935 = vadd.f32 %v907, %v931
        %s936 = sld [smem:[#allocation11 + $0x3a]]
        %v937 = vstv %s936
        %v938 = vmul.f32 %v937, %v887
        %v939 = vmul.f32 %v937, %v888
        %942 = vrot.lane.b32.xlu0 %v938, 126
        %v943 = vpop.permute.xlu0 %942
        %944 = vrot.lane.b32.xlu0 %v939, 126
        %v945 = vpop.permute.xlu0 %944
        %v948 = vadd.f32 %v920, %v943
        %v949 = vadd.f32 %v921, %v945
        %s950 = sld [smem:[#allocation11 + $0xa]]
        %v951 = vstv %s950
        %v952 = vmul.f32 %v951, %v879
        %v953 = vmul.f32 %v951, %v880
        %956 = vrot.lane.b32.xlu0 %v952, 125
        %v957 = vpop.permute.xlu0 %956
        %958 = vrot.lane.b32.xlu0 %v953, 125
        %v959 = vpop.permute.xlu0 %958
        %v962 = vadd.f32 %v934, %v957
        %v963 = vadd.f32 %v935, %v959
        %s964 = sld [smem:[#allocation11 + $0x3b]]
        %v965 = vstv %s964
        %v966 = vmul.f32 %v965, %v887
        %v967 = vmul.f32 %v965, %v888
        %970 = vrot.lane.b32.xlu0 %v966, 125
        %v971 = vpop.permute.xlu0 %970
        %972 = vrot.lane.b32.xlu0 %v967, 125
        %v973 = vpop.permute.xlu0 %972
        %v976 = vadd.f32 %v948, %v971
        %v977 = vadd.f32 %v949, %v973
        %s978 = sld [smem:[#allocation11 + $0xb]]
        %v979 = vstv %s978
        %v980 = vmul.f32 %v979, %v879
        %v981 = vmul.f32 %v979, %v880
        %984 = vrot.lane.b32.xlu0 %v980, 124
        %v985 = vpop.permute.xlu0 %984
        %986 = vrot.lane.b32.xlu0 %v981, 124
        %v987 = vpop.permute.xlu0 %986
        %v990 = vadd.f32 %v962, %v985
        %v991 = vadd.f32 %v963, %v987
        %s992 = sld [smem:[#allocation11 + $0x3c]]
        %v993 = vstv %s992
        %v994 = vmul.f32 %v993, %v887
        %v995 = vmul.f32 %v993, %v888
        %998 = vrot.lane.b32.xlu0 %v994, 124
        %v999 = vpop.permute.xlu0 %998
        %1000 = vrot.lane.b32.xlu0 %v995, 124
        %v1001 = vpop.permute.xlu0 %1000
        %v1004 = vadd.f32 %v976, %v999
        %v1005 = vadd.f32 %v977, %v1001
        %s1006 = sld [smem:[#allocation11 + $0xc]]
        %v1007 = vstv %s1006
        %v1008 = vmul.f32 %v1007, %v879
        %v1009 = vmul.f32 %v1007, %v880
        %1012 = vrot.lane.b32.xlu0 %v1008, 123
        %v1013 = vpop.permute.xlu0 %1012
        %1014 = vrot.lane.b32.xlu0 %v1009, 123
        %v1015 = vpop.permute.xlu0 %1014
        %v1018 = vadd.f32 %v990, %v1013
        %v1019 = vadd.f32 %v991, %v1015
        %s1020 = sld [smem:[#allocation11 + $0x3d]]
        %v1021 = vstv %s1020
        %v1022 = vmul.f32 %v1021, %v887
        %v1023 = vmul.f32 %v1021, %v888
        %1026 = vrot.lane.b32.xlu0 %v1022, 123
        %v1027 = vpop.permute.xlu0 %1026
        %1028 = vrot.lane.b32.xlu0 %v1023, 123
        %v1029 = vpop.permute.xlu0 %1028
        %v1032 = vadd.f32 %v1004, %v1027
        %v1033 = vadd.f32 %v1005, %v1029
        %s1034 = sld [smem:[#allocation11 + $0xd]]
        %v1035 = vstv %s1034
        %v1036 = vmul.f32 %v1035, %v879
        %v1037 = vmul.f32 %v1035, %v880
        %1040 = vrot.lane.b32.xlu0 %v1036, 122
        %v1041 = vpop.permute.xlu0 %1040
        %1042 = vrot.lane.b32.xlu0 %v1037, 122
        %v1043 = vpop.permute.xlu0 %1042
        %v1046 = vadd.f32 %v1018, %v1041
        %v1047 = vadd.f32 %v1019, %v1043
        %s1048 = sld [smem:[#allocation11 + $0x3e]]
        %v1049 = vstv %s1048
        %v1050 = vmul.f32 %v1049, %v887
        %v1051 = vmul.f32 %v1049, %v888
        %1054 = vrot.lane.b32.xlu0 %v1050, 122
        %v1055 = vpop.permute.xlu0 %1054
        %1056 = vrot.lane.b32.xlu0 %v1051, 122
        %v1057 = vpop.permute.xlu0 %1056
        %v1060 = vadd.f32 %v1032, %v1055
        %v1061 = vadd.f32 %v1033, %v1057
        %s1062 = sld [smem:[#allocation11 + $0xe]]
        %v1063 = vld [vmem:[#allocation2 + $0x2] sm:$0xff]
        %v1064 = vld [vmem:[#allocation2 + $0xa] sm:$0xff]
        %v1065 = vstv %s1062
        %v1066 = vmul.f32 %v1065, %v1063
        %v1067 = vmul.f32 %v1065, %v1064
        %v1068 = vadd.f32 %v1046, %v1066
        %v1069 = vadd.f32 %v1047, %v1067
        %s1070 = sld [smem:[#allocation11 + $0x3f]]
        %v1071 = vld [vmem:[#allocation3 + $0x2] sm:$0xff]
        %v1072 = vld [vmem:[#allocation3 + $0xa] sm:$0xff]
        %v1073 = vstv %s1070
        %v1074 = vmul.f32 %v1073, %v1071
        %v1075 = vmul.f32 %v1073, %v1072
        %v1076 = vadd.f32 %v1060, %v1074
        %v1077 = vadd.f32 %v1061, %v1075
        %s1078 = sld [smem:[#allocation11 + $0xf]]
        %v1079 = vstv %s1078
        %v1080 = vmul.f32 %v1079, %v1063
        %v1081 = vmul.f32 %v1079, %v1064
        %1084 = vrot.lane.b32.xlu0 %v1080, 127
        %v1085 = vpop.permute.xlu0 %1084
        %1086 = vrot.lane.b32.xlu0 %v1081, 127
        %v1087 = vpop.permute.xlu0 %1086
        %v1090 = vadd.f32 %v1068, %v1085
        %v1091 = vadd.f32 %v1069, %v1087
        %s1092 = sld [smem:[#allocation11 + $0x40]]
        %v1093 = vstv %s1092
        %v1094 = vmul.f32 %v1093, %v1071
        %v1095 = vmul.f32 %v1093, %v1072
        %1098 = vrot.lane.b32.xlu0 %v1094, 127
        %v1099 = vpop.permute.xlu0 %1098
        %1100 = vrot.lane.b32.xlu0 %v1095, 127
        %v1101 = vpop.permute.xlu0 %1100
        %v1104 = vadd.f32 %v1076, %v1099
        %v1105 = vadd.f32 %v1077, %v1101
        %s1106 = sld [smem:[#allocation11 + $0x10]]
        %v1107 = vstv %s1106
        %v1108 = vmul.f32 %v1107, %v1063
        %v1109 = vmul.f32 %v1107, %v1064
        %1112 = vrot.lane.b32.xlu0 %v1108, 126
        %v1113 = vpop.permute.xlu0 %1112
        %1114 = vrot.lane.b32.xlu0 %v1109, 126
        %v1115 = vpop.permute.xlu0 %1114
        %v1118 = vadd.f32 %v1090, %v1113
        %v1119 = vadd.f32 %v1091, %v1115
        %s1120 = sld [smem:[#allocation11 + $0x41]]
        %v1121 = vstv %s1120
        %v1122 = vmul.f32 %v1121, %v1071
        %v1123 = vmul.f32 %v1121, %v1072
        %1126 = vrot.lane.b32.xlu0 %v1122, 126
        %v1127 = vpop.permute.xlu0 %1126
        %1128 = vrot.lane.b32.xlu0 %v1123, 126
        %v1129 = vpop.permute.xlu0 %1128
        %v1132 = vadd.f32 %v1104, %v1127
        %v1133 = vadd.f32 %v1105, %v1129
        %s1134 = sld [smem:[#allocation11 + $0x11]]
        %v1135 = vstv %s1134
        %v1136 = vmul.f32 %v1135, %v1063
        %v1137 = vmul.f32 %v1135, %v1064
        %1140 = vrot.lane.b32.xlu0 %v1136, 125
        %v1141 = vpop.permute.xlu0 %1140
        %1142 = vrot.lane.b32.xlu0 %v1137, 125
        %v1143 = vpop.permute.xlu0 %1142
        %v1146 = vadd.f32 %v1118, %v1141
        %v1147 = vadd.f32 %v1119, %v1143
        %s1148 = sld [smem:[#allocation11 + $0x42]]
        %v1149 = vstv %s1148
        %v1150 = vmul.f32 %v1149, %v1071
        %v1151 = vmul.f32 %v1149, %v1072
        %1154 = vrot.lane.b32.xlu0 %v1150, 125
        %v1155 = vpop.permute.xlu0 %1154
        %1156 = vrot.lane.b32.xlu0 %v1151, 125
        %v1157 = vpop.permute.xlu0 %1156
        %v1160 = vadd.f32 %v1132, %v1155
        %v1161 = vadd.f32 %v1133, %v1157
        %s1162 = sld [smem:[#allocation11 + $0x12]]
        %v1163 = vstv %s1162
        %v1164 = vmul.f32 %v1163, %v1063
        %v1165 = vmul.f32 %v1163, %v1064
        %1168 = vrot.lane.b32.xlu0 %v1164, 124
        %v1169 = vpop.permute.xlu0 %1168
        %1170 = vrot.lane.b32.xlu0 %v1165, 124
        %v1171 = vpop.permute.xlu0 %1170
        %v1174 = vadd.f32 %v1146, %v1169
        %v1175 = vadd.f32 %v1147, %v1171
        %s1176 = sld [smem:[#allocation11 + $0x43]]
        %v1177 = vstv %s1176
        %v1178 = vmul.f32 %v1177, %v1071
        %v1179 = vmul.f32 %v1177, %v1072
        %1182 = vrot.lane.b32.xlu0 %v1178, 124
        %v1183 = vpop.permute.xlu0 %1182
        %1184 = vrot.lane.b32.xlu0 %v1179, 124
        %v1185 = vpop.permute.xlu0 %1184
        %v1188 = vadd.f32 %v1160, %v1183
        %v1189 = vadd.f32 %v1161, %v1185
        %s1190 = sld [smem:[#allocation11 + $0x13]]
        %v1191 = vstv %s1190
        %v1192 = vmul.f32 %v1191, %v1063
        %v1193 = vmul.f32 %v1191, %v1064
        %1196 = vrot.lane.b32.xlu0 %v1192, 123
        %v1197 = vpop.permute.xlu0 %1196
        %1198 = vrot.lane.b32.xlu0 %v1193, 123
        %v1199 = vpop.permute.xlu0 %1198
        %v1202 = vadd.f32 %v1174, %v1197
        %v1203 = vadd.f32 %v1175, %v1199
        %s1204 = sld [smem:[#allocation11 + $0x44]]
        %v1205 = vstv %s1204
        %v1206 = vmul.f32 %v1205, %v1071
        %v1207 = vmul.f32 %v1205, %v1072
        %1210 = vrot.lane.b32.xlu0 %v1206, 123
        %v1211 = vpop.permute.xlu0 %1210
        %1212 = vrot.lane.b32.xlu0 %v1207, 123
        %v1213 = vpop.permute.xlu0 %1212
        %v1216 = vadd.f32 %v1188, %v1211
        %v1217 = vadd.f32 %v1189, %v1213
        %s1218 = sld [smem:[#allocation11 + $0x14]]
        %v1219 = vstv %s1218
        %v1220 = vmul.f32 %v1219, %v1063
        %v1221 = vmul.f32 %v1219, %v1064
        %1224 = vrot.lane.b32.xlu0 %v1220, 122
        %v1225 = vpop.permute.xlu0 %1224
        %1226 = vrot.lane.b32.xlu0 %v1221, 122
        %v1227 = vpop.permute.xlu0 %1226
        %v1230 = vadd.f32 %v1202, %v1225
        %v1231 = vadd.f32 %v1203, %v1227
        %s1232 = sld [smem:[#allocation11 + $0x45]]
        %v1233 = vstv %s1232
        %v1234 = vmul.f32 %v1233, %v1071
        %v1235 = vmul.f32 %v1233, %v1072
        %1238 = vrot.lane.b32.xlu0 %v1234, 122
        %v1239 = vpop.permute.xlu0 %1238
        %1240 = vrot.lane.b32.xlu0 %v1235, 122
        %v1241 = vpop.permute.xlu0 %1240
        %v1244 = vadd.f32 %v1216, %v1239
        %v1245 = vadd.f32 %v1217, %v1241
        %s1246 = sld [smem:[#allocation11 + $0x15]]
        %v1247 = vld [vmem:[#allocation2 + $0x3] sm:$0xff]
        %v1248 = vld [vmem:[#allocation2 + $0xb] sm:$0xff]
        %v1249 = vstv %s1246
        %v1250 = vmul.f32 %v1249, %v1247
        %v1251 = vmul.f32 %v1249, %v1248
        %v1252 = vadd.f32 %v1230, %v1250
        %v1253 = vadd.f32 %v1231, %v1251
        %s1254 = sld [smem:[#allocation11 + $0x46]]
        %v1255 = vld [vmem:[#allocation3 + $0x3] sm:$0xff]
        %v1256 = vld [vmem:[#allocation3 + $0xb] sm:$0xff]
        %v1257 = vstv %s1254
        %v1258 = vmul.f32 %v1257, %v1255
        %v1259 = vmul.f32 %v1257, %v1256
        %v1260 = vadd.f32 %v1244, %v1258
        %v1261 = vadd.f32 %v1245, %v1259
        %s1262 = sld [smem:[#allocation11 + $0x16]]
        %v1263 = vstv %s1262
        %v1264 = vmul.f32 %v1263, %v1247
        %v1265 = vmul.f32 %v1263, %v1248
        %1268 = vrot.lane.b32.xlu0 %v1264, 127
        %v1269 = vpop.permute.xlu0 %1268
        %1270 = vrot.lane.b32.xlu0 %v1265, 127
        %v1271 = vpop.permute.xlu0 %1270
        %v1274 = vadd.f32 %v1252, %v1269
        %v1275 = vadd.f32 %v1253, %v1271
        %s1276 = sld [smem:[#allocation11 + $0x47]]
        %v1277 = vstv %s1276
        %v1278 = vmul.f32 %v1277, %v1255
        %v1279 = vmul.f32 %v1277, %v1256
        %1282 = vrot.lane.b32.xlu0 %v1278, 127
        %v1283 = vpop.permute.xlu0 %1282
        %1284 = vrot.lane.b32.xlu0 %v1279, 127
        %v1285 = vpop.permute.xlu0 %1284
        %v1288 = vadd.f32 %v1260, %v1283
        %v1289 = vadd.f32 %v1261, %v1285
        %s1290 = sld [smem:[#allocation11 + $0x17]]
        %v1291 = vstv %s1290
        %v1292 = vmul.f32 %v1291, %v1247
        %v1293 = vmul.f32 %v1291, %v1248
        %1296 = vrot.lane.b32.xlu0 %v1292, 126
        %v1297 = vpop.permute.xlu0 %1296
        %1298 = vrot.lane.b32.xlu0 %v1293, 126
        %v1299 = vpop.permute.xlu0 %1298
        %v1302 = vadd.f32 %v1274, %v1297
        %v1303 = vadd.f32 %v1275, %v1299
        %s1304 = sld [smem:[#allocation11 + $0x48]]
        %v1305 = vstv %s1304
        %v1306 = vmul.f32 %v1305, %v1255
        %v1307 = vmul.f32 %v1305, %v1256
        %1310 = vrot.lane.b32.xlu0 %v1306, 126
        %v1311 = vpop.permute.xlu0 %1310
        %1312 = vrot.lane.b32.xlu0 %v1307, 126
        %v1313 = vpop.permute.xlu0 %1312
        %v1316 = vadd.f32 %v1288, %v1311
        %v1317 = vadd.f32 %v1289, %v1313
        %s1318 = sld [smem:[#allocation11 + $0x18]]
        %v1319 = vstv %s1318
        %v1320 = vmul.f32 %v1319, %v1247
        %v1321 = vmul.f32 %v1319, %v1248
        %1324 = vrot.lane.b32.xlu0 %v1320, 125
        %v1325 = vpop.permute.xlu0 %1324
        %1326 = vrot.lane.b32.xlu0 %v1321, 125
        %v1327 = vpop.permute.xlu0 %1326
        %v1330 = vadd.f32 %v1302, %v1325
        %v1331 = vadd.f32 %v1303, %v1327
        %s1332 = sld [smem:[#allocation11 + $0x49]]
        %v1333 = vstv %s1332
        %v1334 = vmul.f32 %v1333, %v1255
        %v1335 = vmul.f32 %v1333, %v1256
        %1338 = vrot.lane.b32.xlu0 %v1334, 125
        %v1339 = vpop.permute.xlu0 %1338
        %1340 = vrot.lane.b32.xlu0 %v1335, 125
        %v1341 = vpop.permute.xlu0 %1340
        %v1344 = vadd.f32 %v1316, %v1339
        %v1345 = vadd.f32 %v1317, %v1341
        %s1346 = sld [smem:[#allocation11 + $0x19]]
        %v1347 = vstv %s1346
        %v1348 = vmul.f32 %v1347, %v1247
        %v1349 = vmul.f32 %v1347, %v1248
        %1352 = vrot.lane.b32.xlu0 %v1348, 124
        %v1353 = vpop.permute.xlu0 %1352
        %1354 = vrot.lane.b32.xlu0 %v1349, 124
        %v1355 = vpop.permute.xlu0 %1354
        %v1358 = vadd.f32 %v1330, %v1353
        %v1359 = vadd.f32 %v1331, %v1355
        %s1360 = sld [smem:[#allocation11 + $0x4a]]
        %v1361 = vstv %s1360
        %v1362 = vmul.f32 %v1361, %v1255
        %v1363 = vmul.f32 %v1361, %v1256
        %1366 = vrot.lane.b32.xlu0 %v1362, 124
        %v1367 = vpop.permute.xlu0 %1366
        %1368 = vrot.lane.b32.xlu0 %v1363, 124
        %v1369 = vpop.permute.xlu0 %1368
        %v1372 = vadd.f32 %v1344, %v1367
        %v1373 = vadd.f32 %v1345, %v1369
        %s1374 = sld [smem:[#allocation11 + $0x1a]]
        %v1375 = vstv %s1374
        %v1376 = vmul.f32 %v1375, %v1247
        %v1377 = vmul.f32 %v1375, %v1248
        %1380 = vrot.lane.b32.xlu0 %v1376, 123
        %v1381 = vpop.permute.xlu0 %1380
        %1382 = vrot.lane.b32.xlu0 %v1377, 123
        %v1383 = vpop.permute.xlu0 %1382
        %v1386 = vadd.f32 %v1358, %v1381
        %v1387 = vadd.f32 %v1359, %v1383
        %s1388 = sld [smem:[#allocation11 + $0x4b]]
        %v1389 = vstv %s1388
        %v1390 = vmul.f32 %v1389, %v1255
        %v1391 = vmul.f32 %v1389, %v1256
        %1394 = vrot.lane.b32.xlu0 %v1390, 123
        %v1395 = vpop.permute.xlu0 %1394
        %1396 = vrot.lane.b32.xlu0 %v1391, 123
        %v1397 = vpop.permute.xlu0 %1396
        %v1400 = vadd.f32 %v1372, %v1395
        %v1401 = vadd.f32 %v1373, %v1397
        %s1402 = sld [smem:[#allocation11 + $0x1b]]
        %v1403 = vstv %s1402
        %v1404 = vmul.f32 %v1403, %v1247
        %v1405 = vmul.f32 %v1403, %v1248
        %1408 = vrot.lane.b32.xlu0 %v1404, 122
        %v1409 = vpop.permute.xlu0 %1408
        %1410 = vrot.lane.b32.xlu0 %v1405, 122
        %v1411 = vpop.permute.xlu0 %1410
        %v1414 = vadd.f32 %v1386, %v1409
        %v1415 = vadd.f32 %v1387, %v1411
        %s1416 = sld [smem:[#allocation11 + $0x4c]]
        %v1417 = vstv %s1416
        %v1418 = vmul.f32 %v1417, %v1255
        %v1419 = vmul.f32 %v1417, %v1256
        %1422 = vrot.lane.b32.xlu0 %v1418, 122
        %v1423 = vpop.permute.xlu0 %1422
        %1424 = vrot.lane.b32.xlu0 %v1419, 122
        %v1425 = vpop.permute.xlu0 %1424
        %v1428 = vadd.f32 %v1400, %v1423
        %v1429 = vadd.f32 %v1401, %v1425
        %s1430 = sld [smem:[#allocation11 + $0x1c]]
        %v1431 = vld [vmem:[#allocation2 + $0x4] sm:$0xff]
        %v1432 = vld [vmem:[#allocation2 + $0xc] sm:$0xff]
        %v1433 = vstv %s1430
        %v1434 = vmul.f32 %v1433, %v1431
        %v1435 = vmul.f32 %v1433, %v1432
        %v1436 = vadd.f32 %v1414, %v1434
        %v1437 = vadd.f32 %v1415, %v1435
        %s1438 = sld [smem:[#allocation11 + $0x4d]]
        %v1439 = vld [vmem:[#allocation3 + $0x4] sm:$0xff]
        %v1440 = vld [vmem:[#allocation3 + $0xc] sm:$0xff]
        %v1441 = vstv %s1438
        %v1442 = vmul.f32 %v1441, %v1439
        %v1443 = vmul.f32 %v1441, %v1440
        %v1444 = vadd.f32 %v1428, %v1442
        %v1445 = vadd.f32 %v1429, %v1443
        %s1446 = sld [smem:[#allocation11 + $0x1d]]
        %v1447 = vstv %s1446
        %v1448 = vmul.f32 %v1447, %v1431
        %v1449 = vmul.f32 %v1447, %v1432
        %1452 = vrot.lane.b32.xlu0 %v1448, 127
        %v1453 = vpop.permute.xlu0 %1452
        %1454 = vrot.lane.b32.xlu0 %v1449, 127
        %v1455 = vpop.permute.xlu0 %1454
        %v1458 = vadd.f32 %v1436, %v1453
        %v1459 = vadd.f32 %v1437, %v1455
        %s1460 = sld [smem:[#allocation11 + $0x4e]]
        %v1461 = vstv %s1460
        %v1462 = vmul.f32 %v1461, %v1439
        %v1463 = vmul.f32 %v1461, %v1440
        %1466 = vrot.lane.b32.xlu0 %v1462, 127
        %v1467 = vpop.permute.xlu0 %1466
        %1468 = vrot.lane.b32.xlu0 %v1463, 127
        %v1469 = vpop.permute.xlu0 %1468
        %v1472 = vadd.f32 %v1444, %v1467
        %v1473 = vadd.f32 %v1445, %v1469
        %s1474 = sld [smem:[#allocation11 + $0x1e]]
        %v1475 = vstv %s1474
        %v1476 = vmul.f32 %v1475, %v1431
        %v1477 = vmul.f32 %v1475, %v1432
        %1480 = vrot.lane.b32.xlu0 %v1476, 126
        %v1481 = vpop.permute.xlu0 %1480
        %1482 = vrot.lane.b32.xlu0 %v1477, 126
        %v1483 = vpop.permute.xlu0 %1482
        %v1486 = vadd.f32 %v1458, %v1481
        %v1487 = vadd.f32 %v1459, %v1483
        %s1488 = sld [smem:[#allocation11 + $0x4f]]
        %v1489 = vstv %s1488
        %v1490 = vmul.f32 %v1489, %v1439
        %v1491 = vmul.f32 %v1489, %v1440
        %1494 = vrot.lane.b32.xlu0 %v1490, 126
        %v1495 = vpop.permute.xlu0 %1494
        %1496 = vrot.lane.b32.xlu0 %v1491, 126
        %v1497 = vpop.permute.xlu0 %1496
        %v1500 = vadd.f32 %v1472, %v1495
        %v1501 = vadd.f32 %v1473, %v1497
        %s1502 = sld [smem:[#allocation11 + $0x1f]]
        %v1503 = vstv %s1502
        %v1504 = vmul.f32 %v1503, %v1431
        %v1505 = vmul.f32 %v1503, %v1432
        %1508 = vrot.lane.b32.xlu0 %v1504, 125
        %v1509 = vpop.permute.xlu0 %1508
        %1510 = vrot.lane.b32.xlu0 %v1505, 125
        %v1511 = vpop.permute.xlu0 %1510
        %v1514 = vadd.f32 %v1486, %v1509
        %v1515 = vadd.f32 %v1487, %v1511
        %s1516 = sld [smem:[#allocation11 + $0x50]]
        %v1517 = vstv %s1516
        %v1518 = vmul.f32 %v1517, %v1439
        %v1519 = vmul.f32 %v1517, %v1440
        %1522 = vrot.lane.b32.xlu0 %v1518, 125
        %v1523 = vpop.permute.xlu0 %1522
        %1524 = vrot.lane.b32.xlu0 %v1519, 125
        %v1525 = vpop.permute.xlu0 %1524
        %v1528 = vadd.f32 %v1500, %v1523
        %v1529 = vadd.f32 %v1501, %v1525
        %s1530 = sld [smem:[#allocation11 + $0x20]]
        %v1531 = vstv %s1530
        %v1532 = vmul.f32 %v1531, %v1431
        %v1533 = vmul.f32 %v1531, %v1432
        %1536 = vrot.lane.b32.xlu0 %v1532, 124
        %v1537 = vpop.permute.xlu0 %1536
        %1538 = vrot.lane.b32.xlu0 %v1533, 124
        %v1539 = vpop.permute.xlu0 %1538
        %v1542 = vadd.f32 %v1514, %v1537
        %v1543 = vadd.f32 %v1515, %v1539
        %s1544 = sld [smem:[#allocation11 + $0x51]]
        %v1545 = vstv %s1544
        %v1546 = vmul.f32 %v1545, %v1439
        %v1547 = vmul.f32 %v1545, %v1440
        %1550 = vrot.lane.b32.xlu0 %v1546, 124
        %v1551 = vpop.permute.xlu0 %1550
        %1552 = vrot.lane.b32.xlu0 %v1547, 124
        %v1553 = vpop.permute.xlu0 %1552
        %v1556 = vadd.f32 %v1528, %v1551
        %v1557 = vadd.f32 %v1529, %v1553
        %s1558 = sld [smem:[#allocation11 + $0x21]]
        %v1559 = vstv %s1558
        %v1560 = vmul.f32 %v1559, %v1431
        %v1561 = vmul.f32 %v1559, %v1432
        %1564 = vrot.lane.b32.xlu0 %v1560, 123
        %v1565 = vpop.permute.xlu0 %1564
        %1566 = vrot.lane.b32.xlu0 %v1561, 123
        %v1567 = vpop.permute.xlu0 %1566
        %v1570 = vadd.f32 %v1542, %v1565
        %v1571 = vadd.f32 %v1543, %v1567
        %s1572 = sld [smem:[#allocation11 + $0x52]]
        %v1573 = vstv %s1572
        %v1574 = vmul.f32 %v1573, %v1439
        %v1575 = vmul.f32 %v1573, %v1440
        %1578 = vrot.lane.b32.xlu0 %v1574, 123
        %v1579 = vpop.permute.xlu0 %1578
        %1580 = vrot.lane.b32.xlu0 %v1575, 123
        %v1581 = vpop.permute.xlu0 %1580
        %v1584 = vadd.f32 %v1556, %v1579
        %v1585 = vadd.f32 %v1557, %v1581
        %s1586 = sld [smem:[#allocation11 + $0x22]]
        %v1587 = vstv %s1586
        %v1588 = vmul.f32 %v1587, %v1431
        %v1589 = vmul.f32 %v1587, %v1432
        %1592 = vrot.lane.b32.xlu0 %v1588, 122
        %v1593 = vpop.permute.xlu0 %1592
        %1594 = vrot.lane.b32.xlu0 %v1589, 122
        %v1595 = vpop.permute.xlu0 %1594
        %v1598 = vadd.f32 %v1570, %v1593
        %v1599 = vadd.f32 %v1571, %v1595
        %s1600 = sld [smem:[#allocation11 + $0x53]]
        %v1601 = vstv %s1600
        %v1602 = vmul.f32 %v1601, %v1439
        %v1603 = vmul.f32 %v1601, %v1440
        %1606 = vrot.lane.b32.xlu0 %v1602, 122
        %v1607 = vpop.permute.xlu0 %1606
        %1608 = vrot.lane.b32.xlu0 %v1603, 122
        %v1609 = vpop.permute.xlu0 %1608
        %v1612 = vadd.f32 %v1584, %v1607
        %v1613 = vadd.f32 %v1585, %v1609
        %s1614 = sld [smem:[#allocation11 + $0x23]]
        %v1615 = vld [vmem:[#allocation2 + $0x5] sm:$0xff]
        %v1616 = vld [vmem:[#allocation2 + $0xd] sm:$0xff]
        %v1617 = vstv %s1614
        %v1618 = vmul.f32 %v1617, %v1615
        %v1619 = vmul.f32 %v1617, %v1616
        %v1620 = vadd.f32 %v1598, %v1618
        %v1621 = vadd.f32 %v1599, %v1619
        %s1622 = sld [smem:[#allocation11 + $0x54]]
        %v1623 = vld [vmem:[#allocation3 + $0x5] sm:$0xff]
        %v1624 = vld [vmem:[#allocation3 + $0xd] sm:$0xff]
        %v1625 = vstv %s1622
        %v1626 = vmul.f32 %v1625, %v1623
        %v1627 = vmul.f32 %v1625, %v1624
        %v1628 = vadd.f32 %v1612, %v1626
        %v1629 = vadd.f32 %v1613, %v1627
        %s1630 = sld [smem:[#allocation11 + $0x24]]
        %v1631 = vstv %s1630
        %v1632 = vmul.f32 %v1631, %v1615
        %v1633 = vmul.f32 %v1631, %v1616
        %1636 = vrot.lane.b32.xlu0 %v1632, 127
        %v1637 = vpop.permute.xlu0 %1636
        %1638 = vrot.lane.b32.xlu0 %v1633, 127
        %v1639 = vpop.permute.xlu0 %1638
        %v1642 = vadd.f32 %v1620, %v1637
        %v1643 = vadd.f32 %v1621, %v1639
        %s1644 = sld [smem:[#allocation11 + $0x55]]
        %v1645 = vstv %s1644
        %v1646 = vmul.f32 %v1645, %v1623
        %v1647 = vmul.f32 %v1645, %v1624
        %1650 = vrot.lane.b32.xlu0 %v1646, 127
        %v1651 = vpop.permute.xlu0 %1650
        %1652 = vrot.lane.b32.xlu0 %v1647, 127
        %v1653 = vpop.permute.xlu0 %1652
        %v1656 = vadd.f32 %v1628, %v1651
        %v1657 = vadd.f32 %v1629, %v1653
        %s1658 = sld [smem:[#allocation11 + $0x25]]
        %v1659 = vstv %s1658
        %v1660 = vmul.f32 %v1659, %v1615
        %v1661 = vmul.f32 %v1659, %v1616
        %1664 = vrot.lane.b32.xlu0 %v1660, 126
        %v1665 = vpop.permute.xlu0 %1664
        %1666 = vrot.lane.b32.xlu0 %v1661, 126
        %v1667 = vpop.permute.xlu0 %1666
        %v1670 = vadd.f32 %v1642, %v1665
        %v1671 = vadd.f32 %v1643, %v1667
        %s1672 = sld [smem:[#allocation11 + $0x56]]
        %v1673 = vstv %s1672
        %v1674 = vmul.f32 %v1673, %v1623
        %v1675 = vmul.f32 %v1673, %v1624
        %1678 = vrot.lane.b32.xlu0 %v1674, 126
        %v1679 = vpop.permute.xlu0 %1678
        %1680 = vrot.lane.b32.xlu0 %v1675, 126
        %v1681 = vpop.permute.xlu0 %1680
        %v1684 = vadd.f32 %v1656, %v1679
        %v1685 = vadd.f32 %v1657, %v1681
        %s1686 = sld [smem:[#allocation11 + $0x26]]
        %v1687 = vstv %s1686
        %v1688 = vmul.f32 %v1687, %v1615
        %v1689 = vmul.f32 %v1687, %v1616
        %1692 = vrot.lane.b32.xlu0 %v1688, 125
        %v1693 = vpop.permute.xlu0 %1692
        %1694 = vrot.lane.b32.xlu0 %v1689, 125
        %v1695 = vpop.permute.xlu0 %1694
        %v1698 = vadd.f32 %v1670, %v1693
        %v1699 = vadd.f32 %v1671, %v1695
        %s1700 = sld [smem:[#allocation11 + $0x57]]
        %v1701 = vstv %s1700
        %v1702 = vmul.f32 %v1701, %v1623
        %v1703 = vmul.f32 %v1701, %v1624
        %1706 = vrot.lane.b32.xlu0 %v1702, 125
        %v1707 = vpop.permute.xlu0 %1706
        %1708 = vrot.lane.b32.xlu0 %v1703, 125
        %v1709 = vpop.permute.xlu0 %1708
        %v1712 = vadd.f32 %v1684, %v1707
        %v1713 = vadd.f32 %v1685, %v1709
        %s1714 = sld [smem:[#allocation11 + $0x27]]
        %v1715 = vstv %s1714
        %v1716 = vmul.f32 %v1715, %v1615
        %v1717 = vmul.f32 %v1715, %v1616
        %1720 = vrot.lane.b32.xlu0 %v1716, 124
        %v1721 = vpop.permute.xlu0 %1720
        %1722 = vrot.lane.b32.xlu0 %v1717, 124
        %v1723 = vpop.permute.xlu0 %1722
        %v1726 = vadd.f32 %v1698, %v1721
        %v1727 = vadd.f32 %v1699, %v1723
        %s1728 = sld [smem:[#allocation11 + $0x58]]
        %v1729 = vstv %s1728
        %v1730 = vmul.f32 %v1729, %v1623
        %v1731 = vmul.f32 %v1729, %v1624
        %1734 = vrot.lane.b32.xlu0 %v1730, 124
        %v1735 = vpop.permute.xlu0 %1734
        %1736 = vrot.lane.b32.xlu0 %v1731, 124
        %v1737 = vpop.permute.xlu0 %1736
        %v1740 = vadd.f32 %v1712, %v1735
        %v1741 = vadd.f32 %v1713, %v1737
        %s1742 = sld [smem:[#allocation11 + $0x28]]
        %v1743 = vstv %s1742
        %v1744 = vmul.f32 %v1743, %v1615
        %v1745 = vmul.f32 %v1743, %v1616
        %1748 = vrot.lane.b32.xlu0 %v1744, 123
        %v1749 = vpop.permute.xlu0 %1748
        %1750 = vrot.lane.b32.xlu0 %v1745, 123
        %v1751 = vpop.permute.xlu0 %1750
        %v1754 = vadd.f32 %v1726, %v1749
        %v1755 = vadd.f32 %v1727, %v1751
        %s1756 = sld [smem:[#allocation11 + $0x59]]
        %v1757 = vstv %s1756
        %v1758 = vmul.f32 %v1757, %v1623
        %v1759 = vmul.f32 %v1757, %v1624
        %1762 = vrot.lane.b32.xlu0 %v1758, 123
        %v1763 = vpop.permute.xlu0 %1762
        %1764 = vrot.lane.b32.xlu0 %v1759, 123
        %v1765 = vpop.permute.xlu0 %1764
        %v1768 = vadd.f32 %v1740, %v1763
        %v1769 = vadd.f32 %v1741, %v1765
        %s1770 = sld [smem:[#allocation11 + $0x29]]
        %v1771 = vstv %s1770
        %v1772 = vmul.f32 %v1771, %v1615
        %v1773 = vmul.f32 %v1771, %v1616
        %1776 = vrot.lane.b32.xlu0 %v1772, 122
        %v1777 = vpop.permute.xlu0 %1776
        %1778 = vrot.lane.b32.xlu0 %v1773, 122
        %v1779 = vpop.permute.xlu0 %1778
        %v1782 = vadd.f32 %v1754, %v1777
        %v1783 = vadd.f32 %v1755, %v1779
        %s1784 = sld [smem:[#allocation11 + $0x5a]]
        %v1785 = vstv %s1784
        %v1786 = vmul.f32 %v1785, %v1623
        %v1787 = vmul.f32 %v1785, %v1624
        %1790 = vrot.lane.b32.xlu0 %v1786, 122
        %v1791 = vpop.permute.xlu0 %1790
        %1792 = vrot.lane.b32.xlu0 %v1787, 122
        %v1793 = vpop.permute.xlu0 %1792
        %v1796 = vadd.f32 %v1768, %v1791
        %v1797 = vadd.f32 %v1769, %v1793
        %s1798 = sld [smem:[#allocation11 + $0x2a]]
        %v1799 = vld [vmem:[#allocation2 + $0x6] sm:$0xff]
        %v1800 = vld [vmem:[#allocation2 + $0xe] sm:$0xff]
        %v1801 = vstv %s1798
        %v1802 = vmul.f32 %v1801, %v1799
        %v1803 = vmul.f32 %v1801, %v1800
        %v1804 = vadd.f32 %v1782, %v1802
        %v1805 = vadd.f32 %v1783, %v1803
        %s1806 = sld [smem:[#allocation11 + $0x5b]]
        %v1807 = vld [vmem:[#allocation3 + $0x6] sm:$0xff]
        %v1808 = vld [vmem:[#allocation3 + $0xe] sm:$0xff]
        %v1809 = vstv %s1806
        %v1810 = vmul.f32 %v1809, %v1807
        %v1811 = vmul.f32 %v1809, %v1808
        %v1812 = vadd.f32 %v1796, %v1810
        %v1813 = vadd.f32 %v1797, %v1811
        %s1814 = sld [smem:[#allocation11 + $0x2b]]
        %v1815 = vstv %s1814
        %v1816 = vmul.f32 %v1815, %v1799
        %v1817 = vmul.f32 %v1815, %v1800
        %1820 = vrot.lane.b32.xlu0 %v1816, 127
        %v1821 = vpop.permute.xlu0 %1820
        %1822 = vrot.lane.b32.xlu0 %v1817, 127
        %v1823 = vpop.permute.xlu0 %1822
        %v1826 = vadd.f32 %v1804, %v1821
        %v1827 = vadd.f32 %v1805, %v1823
        %s1828 = sld [smem:[#allocation11 + $0x5c]]
        %v1829 = vstv %s1828
        %v1830 = vmul.f32 %v1829, %v1807
        %v1831 = vmul.f32 %v1829, %v1808
        %1834 = vrot.lane.b32.xlu0 %v1830, 127
        %v1835 = vpop.permute.xlu0 %1834
        %1836 = vrot.lane.b32.xlu0 %v1831, 127
        %v1837 = vpop.permute.xlu0 %1836
        %v1840 = vadd.f32 %v1812, %v1835
        %v1841 = vadd.f32 %v1813, %v1837
        %s1842 = sld [smem:[#allocation11 + $0x2c]]
        %v1843 = vstv %s1842
        %v1844 = vmul.f32 %v1843, %v1799
        %v1845 = vmul.f32 %v1843, %v1800
        %1848 = vrot.lane.b32.xlu0 %v1844, 126
        %v1849 = vpop.permute.xlu0 %1848
        %1850 = vrot.lane.b32.xlu0 %v1845, 126
        %v1851 = vpop.permute.xlu0 %1850
        %v1854 = vadd.f32 %v1826, %v1849
        %v1855 = vadd.f32 %v1827, %v1851
        %s1856 = sld [smem:[#allocation11 + $0x5d]]
        %v1857 = vstv %s1856
        %v1858 = vmul.f32 %v1857, %v1807
        %v1859 = vmul.f32 %v1857, %v1808
        %1862 = vrot.lane.b32.xlu0 %v1858, 126
        %v1863 = vpop.permute.xlu0 %1862
        %1864 = vrot.lane.b32.xlu0 %v1859, 126
        %v1865 = vpop.permute.xlu0 %1864
        %v1868 = vadd.f32 %v1840, %v1863
        %v1869 = vadd.f32 %v1841, %v1865
        %s1870 = sld [smem:[#allocation11 + $0x2d]]
        %v1871 = vstv %s1870
        %v1872 = vmul.f32 %v1871, %v1799
        %v1873 = vmul.f32 %v1871, %v1800
        %1876 = vrot.lane.b32.xlu0 %v1872, 125
        %v1877 = vpop.permute.xlu0 %1876
        %1878 = vrot.lane.b32.xlu0 %v1873, 125
        %v1879 = vpop.permute.xlu0 %1878
        %v1882 = vadd.f32 %v1854, %v1877
        %v1883 = vadd.f32 %v1855, %v1879
        %s1884 = sld [smem:[#allocation11 + $0x5e]]
        %v1885 = vstv %s1884
        %v1886 = vmul.f32 %v1885, %v1807
        %v1887 = vmul.f32 %v1885, %v1808
        %1890 = vrot.lane.b32.xlu0 %v1886, 125
        %v1891 = vpop.permute.xlu0 %1890
        %1892 = vrot.lane.b32.xlu0 %v1887, 125
        %v1893 = vpop.permute.xlu0 %1892
        %v1896 = vadd.f32 %v1868, %v1891
        %v1897 = vadd.f32 %v1869, %v1893
        %s1898 = sld [smem:[#allocation11 + $0x2e]]
        %v1899 = vstv %s1898
        %v1900 = vmul.f32 %v1899, %v1799
        %v1901 = vmul.f32 %v1899, %v1800
        %1904 = vrot.lane.b32.xlu0 %v1900, 124
        %v1905 = vpop.permute.xlu0 %1904
        %1906 = vrot.lane.b32.xlu0 %v1901, 124
        %v1907 = vpop.permute.xlu0 %1906
        %v1910 = vadd.f32 %v1882, %v1905
        %v1911 = vadd.f32 %v1883, %v1907
        %s1912 = sld [smem:[#allocation11 + $0x5f]]
        %v1913 = vstv %s1912
        %v1914 = vmul.f32 %v1913, %v1807
        %v1915 = vmul.f32 %v1913, %v1808
        %1918 = vrot.lane.b32.xlu0 %v1914, 124
        %v1919 = vpop.permute.xlu0 %1918
        %1920 = vrot.lane.b32.xlu0 %v1915, 124
        %v1921 = vpop.permute.xlu0 %1920
        %v1924 = vadd.f32 %v1896, %v1919
        %v1925 = vadd.f32 %v1897, %v1921
        %s1926 = sld [smem:[#allocation11 + $0x2f]]
        %v1927 = vstv %s1926
        %v1928 = vmul.f32 %v1927, %v1799
        %v1929 = vmul.f32 %v1927, %v1800
        %1932 = vrot.lane.b32.xlu0 %v1928, 123
        %v1933 = vpop.permute.xlu0 %1932
        %1934 = vrot.lane.b32.xlu0 %v1929, 123
        %v1935 = vpop.permute.xlu0 %1934
        %v1938 = vadd.f32 %v1910, %v1933
        %v1939 = vadd.f32 %v1911, %v1935
        %s1940 = sld [smem:[#allocation11 + $0x60]]
        %v1941 = vstv %s1940
        %v1942 = vmul.f32 %v1941, %v1807
        %v1943 = vmul.f32 %v1941, %v1808
        %1946 = vrot.lane.b32.xlu0 %v1942, 123
        %v1947 = vpop.permute.xlu0 %1946
        %1948 = vrot.lane.b32.xlu0 %v1943, 123
        %v1949 = vpop.permute.xlu0 %1948
        %v1952 = vadd.f32 %v1924, %v1947
        %v1953 = vadd.f32 %v1925, %v1949
        %s1954 = sld [smem:[#allocation11 + $0x30]]
        %v1955 = vstv %s1954
        %v1956 = vmul.f32 %v1955, %v1799
        %v1957 = vmul.f32 %v1955, %v1800
        %1960 = vrot.lane.b32.xlu0 %v1956, 122
        %v1961 = vpop.permute.xlu0 %1960
        %1962 = vrot.lane.b32.xlu0 %v1957, 122
        %v1963 = vpop.permute.xlu0 %1962
        %v1966 = vadd.f32 %v1938, %v1961
        %v1967 = vadd.f32 %v1939, %v1963
        %s1968 = sld [smem:[#allocation11 + $0x61]]
        %v1969 = vstv %s1968
        %v1970 = vmul.f32 %v1969, %v1807
        %v1971 = vmul.f32 %v1969, %v1808
        %1974 = vrot.lane.b32.xlu0 %v1970, 122
        %v1975 = vpop.permute.xlu0 %1974
        %1976 = vrot.lane.b32.xlu0 %v1971, 122
        %v1977 = vpop.permute.xlu0 %1976
        %v1980 = vadd.f32 %v1952, %v1975
        %v1981 = vadd.f32 %v1953, %v1977
        %v1982 = vadd.f32 %v1966, %v1980
        %v1983 = vadd.f32 %v1967, %v1981
        %s1984 = sld [smem:[#allocation11 + $0x62]]
        %v1985 = vstv %s1984
        %v1986 = vadd.f32 %v1982, %v1985
        %v1987 = vadd.f32 %v1983, %v1985
        %vm1988 = vcmask 130048
        %1989 = vst.msk [vmem:[%s354] sm:$0xff] %vm1988, %v1986
        %1990 = vst.msk [vmem:[%s354 + $0x8] sm:$0xff] %vm1988, %v1987
        %s1991 = sand.u32 %s168, 1
        %s1992 = scalar_lea.sflag [#allocation6], %s1991
        %s1993 = sand.u32 %s168, 1
        %s1994 = smul.addr %s1993, 16
        %s1995 = scalar_lea.vmem [#allocation12], %s1994
        // Predicated region
        $region60: #{tpu_custom_call.1} parent=35 // pred_check
          %p1996 = pneg %p178
        $region61: #{tpu_custom_call.1} parent=35 // pred_check_branch
          %1998 = sbr.rel (%p1996) target = $region63
        $region62: #{tpu_custom_call.1} parent=35 // pred_region
          %s1999 = smul.u32 2, %s30
          %s2001 = ssub.s32 256, 256
          %2002 = vsyncadd %s1992, %s2001
          %s2003 = smul.addr %s29, 2
          %s2004 = sadd.s32 %s1999, %s2003
          %s2005 = smul.addr %s2004, 128
          %s2006 = scalar_lea.hbm %s4, %s2005
          %s2007 = sshll.u32 %s1995, 4
          %s2008 = int_to_ptr.vmem [resolvable:$true] %s2007
          %2013 = dma.vmem_to_hbm [thread:$0]  %s2008, 256, %s2006, %s1992, 128, 128, 8
        $region63: #{tpu_custom_call.1} parent=35 // pred_fallthru
          _
      $region36: #{tpu_custom_call.1} parent=5 // pred_fallthru
        _
      %p2014 = scmp.le.s32.totalorder 2, %s20
      // Predicated region
      $region64: #{tpu_custom_call.1} parent=5 // pred_check
        %p2015 = pneg %p2014
      $region65: #{tpu_custom_call.1} parent=5 // pred_check_branch
        %2017 = sbr.rel (%p2015) target = $region67
      $region66: #{tpu_custom_call.1} parent=5 // pred_region
        %s2018 = ssub.s32 %s20, 2
        // Predicated region
        $region68: #{tpu_custom_call.1} parent=66 // pred_check
          %p2019 = pneg %p184
        $region69: #{tpu_custom_call.1} parent=66 // pred_check_branch
          %2021 = sbr.rel (%p2019) target = $region71
        $region70: #{tpu_custom_call.1} parent=66 // pred_region
          %s2022 = sand.u32 %s169, 1
          %s2023 = scalar_lea.sflag [#allocation6], %s2022
          %s2024 = sand.u32 %s169, 1
          %s2025 = smul.addr %s2024, 16
          %s2026 = scalar_lea.vmem [#allocation12], %s2025
          %2027 = dma.done %s2023, 256
        $region71: #{tpu_custom_call.1} parent=66 // pred_fallthru
          _
      $region67: #{tpu_custom_call.1} parent=5 // pred_fallthru
        _
    $region6: #{tpu_custom_call.1} parent=1 // loop_footer
      %s24 = sadd.s32 1, %s20
    $region7: #{tpu_custom_call.1} parent=1 // loop_footer_branch
      %19 = sbr.rel target = $region3
    $region8: #{tpu_custom_call.1} parent=1 // loop_exit
      _
    %2028 = vsyncpa [#allocation5], 1
    %s2029 = scalar_lea.sflag [#allocation5], 1
    %2030 = vsyncpa %s2029, 1
    %2031 = vsyncpa [#allocation9], 1
    %s2032 = scalar_lea.sflag [#allocation9], 1
    %2033 = vsyncpa %s2032, 1
    %2034 = vsyncpa [#allocation6], 1
    %s2035 = scalar_lea.sflag [#allocation6], 1
    %2036 = vsyncpa %s2035, 1
    %2037 = vsyncpa [#allocation7], 1
    %s2038 = scalar_lea.sflag [#allocation7], 1
    %2039 = vsyncpa %s2038, 1

</llo_original>
